<compile_context>
chip_gen: v7x
topology: tpu7x:2x2x1
jax: 0.10.0
libtpu: 0.0.40
codegen_flags: <defaults>
</compile_context>

<pallas_src>
import functools
from collections import OrderedDict

import jax
import jax.numpy as jnp
from jax.experimental import pallas as pl
from jax.experimental.pallas import tpu as pltpu


# --------------------------------------------------------------------------- #
# Wrapper-side im2col (XLA): 3x3 / stride 1 / pad 1 neighborhoods.
# K ordering is channel-major, tap-minor: K = ci*9 + (kh*3 + kw), which matches
# w.reshape(Cout, Cin*9) of a PyTorch OIHW weight.
# --------------------------------------------------------------------------- #
def im2col3x3_T(h_nchw):
    """(N, C, H, W) -> (N, C*9, H*W) with K = c*9 + tap."""
    n, c, h, w = h_nchw.shape
    hp = jnp.pad(h_nchw, ((0, 0), (0, 0), (1, 1), (1, 1)))
    taps = [hp[:, :, dy:dy + h, dx:dx + w] for dy in range(3) for dx in range(3)]
    cols = jnp.stack(taps, axis=2)                      # (N, C, 9, H, W)
    return cols.reshape(n, c * 9, h * w)


# --------------------------------------------------------------------------- #
# Kernel 1/2: fused 3x3 conv (single im2col matmul) + BN + ReLU, transposed so
# the lane dim of the stored block is H*W (lane-dense, unmasked stores).
# --------------------------------------------------------------------------- #
def _convT_bn_relu_kernel(cols_ref, w_ref, s_ref, t_ref, o_ref):
    """o = relu((W @ cols^T) * scale + shift), stored as (Cout, H*W).

    cols_ref: (K, HW) bf16   w_ref: (Cout, K) bf16   s_ref/t_ref: (Cout, 1) f32
    o_ref:    (Cout, HW) bf16
    """
    y = jnp.dot(w_ref[...], cols_ref[...], preferred_element_type=jnp.float32)
    y = jnp.maximum(y * s_ref[...] + t_ref[...], 0.0)   # fused BN/bias + ReLU (f32)
    o_ref[...] = y.astype(o_ref.dtype)


def conv3x3_bn_relu_T(cols_T, w_flat_bf16, scale, shift):
    """cols_T: (N, K, HW) bf16;  w_flat_bf16: (Cout, K) bf16;  scale/shift: (Cout,) f32.
    Returns (N, Cout, HW) bf16."""
    n, k, hw = cols_T.shape
    cout = w_flat_bf16.shape[0]
    s2 = scale.reshape(cout, 1).astype(jnp.float32)
    t2 = shift.reshape(cout, 1).astype(jnp.float32)
    return pl.pallas_call(
        _convT_bn_relu_kernel,
        out_shape=jax.ShapeDtypeStruct((n, cout, hw), jnp.bfloat16),
        grid=(n,),
        in_specs=[
            pl.BlockSpec((None, k, hw), lambda i: (i, 0, 0)),
            pl.BlockSpec((cout, k), lambda i: (0, 0)),
            pl.BlockSpec((cout, 1), lambda i: (0, 0)),
            pl.BlockSpec((cout, 1), lambda i: (0, 0)),
        ],
        out_specs=pl.BlockSpec((None, cout, hw), lambda i: (i, 0, 0)),
        compiler_params=pltpu.CompilerParams(dimension_semantics=("parallel",)),
    )(cols_T, w_flat_bf16, s2, t2)


# --------------------------------------------------------------------------- #
# Kernel 3: final 3x3 conv (single im2col matmul) + bias, with the global
# max-pool fused into the epilogue when GAP=True (only (1, Ct) leaves VMEM).
# --------------------------------------------------------------------------- #
def _conv_bias_maxpool_kernel(cols_ref, w_ref, b_ref, o_ref, *, gap):
    """cols_ref: (HW, K) bf16   w_ref: (K, Ct) bf16   b_ref: (1, Ct) f32
    o_ref: (1, Ct) f32 if gap else (HW, Ct) f32."""
    feat = jnp.dot(cols_ref[...], w_ref[...],
                   preferred_element_type=jnp.float32) + b_ref[...]
    if gap:
        o_ref[...] = jnp.max(feat, axis=0, keepdims=True).astype(o_ref.dtype)
    else:
        o_ref[...] = feat.astype(o_ref.dtype)


def _pick_cout_tile(cout):
    # Largest lane-dense tile (multiple of 128, <= 1024) that divides cout exactly;
    # otherwise fall back to the full extent (never leaves tiles uncomputed).
    for ct in (1024, 512, 384, 256, 128):
        if cout % ct == 0:
            return ct
    return cout


def conv3x3_bias_gap(cols, w_kc_bf16, bias, *, gap):
    """cols: (N, HW, K) bf16;  w_kc_bf16: (K, Cout) bf16;  bias: (Cout,) f32.
    Returns (N, 1, Cout) f32 if gap else (N, HW, Cout) f32."""
    n, hw, k = cols.shape
    cout = w_kc_bf16.shape[1]
    ct = _pick_cout_tile(cout)
    assert cout % ct == 0
    rows = 1 if gap else hw
    kernel = functools.partial(_conv_bias_maxpool_kernel, gap=gap)
    return pl.pallas_call(
        kernel,
        out_shape=jax.ShapeDtypeStruct((n, rows, cout), jnp.float32),
        grid=(n, cout // ct),
        in_specs=[
            pl.BlockSpec((None, hw, k), lambda i, j: (i, 0, 0)),
            pl.BlockSpec((k, ct), lambda i, j: (0, j)),
            pl.BlockSpec((1, ct), lambda i, j: (0, j)),
        ],
        out_specs=pl.BlockSpec((None, rows, ct), lambda i, j: (i, 0, j)),
        compiler_params=pltpu.CompilerParams(
            dimension_semantics=("parallel", "parallel")),
    )(cols, w_kc_bf16, bias.reshape(1, cout).astype(jnp.float32))


# --------------------------------------------------------------------------- #
# MSBoxHead forward
# --------------------------------------------------------------------------- #
def ms_box_head_forward(x_nchw, params, *, eps=1e-5, GAP=True, return_res4=True):
    """params: {'block1': (w,b,gamma,beta,mean,var), 'block2': (...), 'conv3': (w,b)}."""
    x = x_nchw.astype(jnp.float32)
    n, cin, h, w = x.shape

    w1, b1, g1, be1, m1, v1 = params["block1"]
    w2, b2, g2, be2, m2, v2 = params["block2"]
    w3, b3 = params["conv3"]
    rep = w1.shape[0]
    cout = w3.shape[0]

    def bn_fold(conv_b, gamma, beta, mean, var):
        # Inference-mode BN folded into the conv epilogue (f32).
        scale = gamma * jax.lax.rsqrt(var + eps)
        shift = beta + (conv_b - mean) * scale
        return scale, shift

    s1, t1 = bn_fold(b1, g1, be1, m1, v1)
    s2, t2 = bn_fold(b2, g2, be2, m2, v2)

    # conv1 + BN + ReLU  (transposed: lane-dense H*W output)
    cols1 = im2col3x3_T(x).astype(jnp.bfloat16)                        # (N, 9*Cin, HW)
    w1f = w1.reshape(rep, cin * 9).astype(jnp.bfloat16)
    hact = conv3x3_bn_relu_T(cols1, w1f, s1, t1)                       # (N, rep, HW) bf16

    # conv2 + BN + ReLU
    cols2 = im2col3x3_T(hact.reshape(n, rep, h, w))                    # (N, 9*rep, HW) bf16
    w2f = w2.reshape(rep, rep * 9).astype(jnp.bfloat16)
    hact = conv3x3_bn_relu_T(cols2, w2f, s2, t2)                       # (N, rep, HW) bf16

    # conv3 + bias (GAP max-pool fused into the kernel epilogue)
    cols3 = jnp.transpose(im2col3x3_T(hact.reshape(n, rep, h, w)), (0, 2, 1))  # (N, HW, 9*rep)
    w3f = jnp.transpose(w3.reshape(cout, rep * 9), (1, 0)).astype(jnp.bfloat16)
    feat = conv3x3_bias_gap(cols3, w3f, b3.astype(jnp.float32), gap=GAP)

    if GAP:
        feat_res5 = feat.reshape(n, cout)[:, :, None, None]            # (N, Cout, 1, 1)
        feat_res4 = jnp.max(x, axis=(2, 3), keepdims=True)             # tiny: leave to XLA
    else:
        feat_res5 = jnp.transpose(feat.reshape(n, h, w, cout), (0, 3, 1, 2))
        feat_res4 = x_nchw

    if return_res4:
        return OrderedDict([("feat_res4", feat_res4), ("feat_res5", feat_res5)])
    return OrderedDict([("feat_res5", feat_res5)])


# --------------------------------------------------------------------------- #
# Pure-JAX reference (mirrors the PyTorch forward, eval-mode BN)
# --------------------------------------------------------------------------- #
def _ref_forward(x, params, eps):
    def conv(hh, wgt, bias):
        y = jax.lax.conv_general_dilated(
            hh, wgt, window_strides=(1, 1), padding=((1, 1), (1, 1)),
            dimension_numbers=("NCHW", "OIHW", "NCHW"))
        return y + bias.reshape(1, -1, 1, 1)

    def bn(hh, g, be, m, v):
        return (hh - m.reshape(1, -1, 1, 1)) * jax.lax.rsqrt(
            v.reshape(1, -1, 1, 1) + eps) * g.reshape(1, -1, 1, 1) + be.reshape(1, -1, 1, 1)

    w1, b1, g1, be1, m1, v1 = params["block1"]
    w2, b2, g2, be2, m2, v2 = params["block2"]
    w3, b3 = params["conv3"]
    h = jax.nn.relu(bn(conv(x, w1, b1), g1, be1, m1, v1))
    h = jax.nn.relu(bn(conv(h, w2, b2), g2, be2, m2, v2))
    feat = conv(h, w3, b3)
    x_p = jnp.max(x, axis=(2, 3), keepdims=True)
    feat_p = jnp.max(feat, axis=(2, 3), keepdims=True)
    return x_p, feat_p


if __name__ == "__main__":
    N, Cin, H, W = 2, 4, 16, 16
    REP = 32               # representation_size
    COUT = 2048            # MSBoxHead hard-codes out_channels[-1] = 2048
    EPS = 1e-5

    key = jax.random.PRNGKey(0)
    ks = jax.random.split(key, 16)
    # Quantize inputs/conv-weights to bf16-exact values so the bf16 MXU operands are
    # lossless and the comparison vs the XLA reference is precision-robust.
    q = lambda a: a.astype(jnp.bfloat16).astype(jnp.float32)

    x = q(jax.random.normal(ks[0], (N, Cin, H, W), dtype=jnp.float32))

    def conv_params(k1, k2, cout, cin, wscale):
        wgt = q(wscale * jax.random.normal(k1, (cout, cin, 3, 3), dtype=jnp.float32))
        bias = 0.1 * jax.random.normal(k2, (cout,), dtype=jnp.float32)
        return wgt, bias

    def bn_params(k1, k2, k3, k4, c):
        gamma = 1.0 + 0.1 * jax.random.normal(k1, (c,), dtype=jnp.float32)
        beta = 0.1 * jax.random.normal(k2, (c,), dtype=jnp.float32)
        mean = 0.1 * jax.random.normal(k3, (c,), dtype=jnp.float32)
        var = jnp.abs(1.0 + 0.1 * jax.random.normal(k4, (c,), dtype=jnp.float32))
        return gamma, beta, mean, var

    w1, b1 = conv_params(ks[1], ks[2], REP, Cin, 0.2)
    g1, be1, m1, v1 = bn_params(ks[3], ks[4], ks[5], ks[6], REP)
    w2, b2 = conv_params(ks[7], ks[8], REP, REP, 0.1)
    g2, be2, m2, v2 = bn_params(ks[9], ks[10], ks[11], ks[12], REP)
    w3, b3 = conv_params(ks[13], ks[14], COUT, REP, 0.05)

    params = {
        "block1": (w1, b1, g1, be1, m1, v1),
        "block2": (w2, b2, g2, be2, m2, v2),
        "conv3": (w3, b3),
    }

    fwd = jax.jit(functools.partial(ms_box_head_forward, eps=EPS, GAP=True,
                                    return_res4=True))
    out = fwd(x, params)
    out = jax.block_until_ready(out)
    feat_res4, feat_res5 = out["feat_res4"], out["feat_res5"]

    ref4, ref5 = _ref_forward(x, params, EPS)

    assert feat_res4.shape == (N, Cin, 1, 1) and feat_res4.dtype == jnp.float32
    assert feat_res5.shape == (N, COUT, 1, 1) and feat_res5.dtype == jnp.float32
    # Pool of the raw input involves no matmul: tight tolerance.
    assert jnp.allclose(feat_res4, ref4, atol=1e-5, rtol=1e-5)
    # Conv path: bf16 MXU operands / bf16 intermediates vs XLA's f32 conv reference;
    # tolerance absorbs the ~0.5% bf16 activation truncation.
    assert jnp.allclose(feat_res5, ref5, atol=2e-2, rtol=2e-2)
    print("KERNEL_OK")
</pallas_src>

<mosaic_0001>
module attributes {stable_mosaic.version = 11 : i64} {
  func.func @_convT_bn_relu_kernel(%arg0: i32, %arg1: memref<1x36x256xbf16, #tpu.memory_space<vmem>>, %arg2: memref<32x36xbf16, #tpu.memory_space<vmem>>, %arg3: memref<32x1xf32, #tpu.memory_space<vmem>>, %arg4: memref<32x1xf32, #tpu.memory_space<vmem>>, %arg5: memref<1x32x256xbf16, #tpu.memory_space<vmem>>) attributes {dimension_semantics = [#tpu.dimension_semantics<parallel>], iteration_bounds = array<i64: 2>, scalar_prefetch = 0 : i64, scratch_operands = 0 : i64, tpu.core_type = #tpu.core_type<tc>, window_params = [{transform_indices = @transform_0, window_bounds = array<i64: 1, 36, 256>}, {pipeline_mode = #tpu.pipeline_mode<synchronous>, transform_indices = @transform_1, window_bounds = array<i64: 32, 36>}, {pipeline_mode = #tpu.pipeline_mode<synchronous>, transform_indices = @transform_2, window_bounds = array<i64: 32, 1>}, {pipeline_mode = #tpu.pipeline_mode<synchronous>, transform_indices = @transform_3, window_bounds = array<i64: 32, 1>}, {transform_indices = @transform_4, window_bounds = array<i64: 1, 32, 256>}]} {
    %c0 = arith.constant 0 : index
    %c0_0 = arith.constant 0 : index
    %0 = vector.load %arg2[%c0, %c0_0] : memref<32x36xbf16, #tpu.memory_space<vmem>>, vector<32x36xbf16>
    %c0_1 = arith.constant 0 : index
    %c0_2 = arith.constant 0 : index
    %c0_3 = arith.constant 0 : index
    %1 = vector.load %arg1[%c0_1, %c0_2, %c0_3] : memref<1x36x256xbf16, #tpu.memory_space<vmem>>, vector<1x36x256xbf16>
    %2 = vector.shape_cast %1 : vector<1x36x256xbf16> to vector<36x256xbf16>
    %cst = arith.constant dense<0.000000e+00> : vector<32x256xf32>
    %3 = tpu.matmul %0, %2, %cst {dimension_numbers = #tpu.dot_dimension_numbers<[1], [0], [0], [1], [0, 0, 1, 1], [], []>} : vector<32x36xbf16>, vector<36x256xbf16>, vector<32x256xf32> -> vector<32x256xf32>
    %c0_4 = arith.constant 0 : index
    %c0_5 = arith.constant 0 : index
    %4 = vector.load %arg3[%c0_4, %c0_5] : memref<32x1xf32, #tpu.memory_space<vmem>>, vector<32x1xf32>
    %5 = vector.broadcast %4 : vector<32x1xf32> to vector<32x256xf32>
    %6 = arith.mulf %3, %5 : vector<32x256xf32>
    %c0_6 = arith.constant 0 : index
    %c0_7 = arith.constant 0 : index
    %7 = vector.load %arg4[%c0_6, %c0_7] : memref<32x1xf32, #tpu.memory_space<vmem>>, vector<32x1xf32>
    %8 = vector.broadcast %7 : vector<32x1xf32> to vector<32x256xf32>
    %9 = arith.addf %6, %8 : vector<32x256xf32>
    %cst_8 = arith.constant 0.000000e+00 : f32
    %10 = vector.broadcast %cst_8 : f32 to vector<32x256xf32>
    %11 = arith.maximumf %9, %10 : vector<32x256xf32>
    %12 = arith.truncf %11 : vector<32x256xf32> to vector<32x256xbf16>
    %c0_9 = arith.constant 0 : index
    %c0_10 = arith.constant 0 : index
    %c0_11 = arith.constant 0 : index
    %13 = vector.load %arg5[%c0_9, %c0_10, %c0_11] : memref<1x32x256xbf16, #tpu.memory_space<vmem>>, vector<1x32x256xbf16>
    %14 = vector.shape_cast %13 : vector<1x32x256xbf16> to vector<32x256xbf16>
    %15 = vector.shape_cast %12 : vector<32x256xbf16> to vector<1x32x256xbf16>
    tpu.vector_store %arg5[%c0_9, %c0_10, %c0_11], %15 {strides = array<i32>} : memref<1x32x256xbf16, #tpu.memory_space<vmem>>, vector<1x32x256xbf16>,
    return
  }
  func.func @transform_0(%arg0: i32) -> (i32, i32, i32) {
    %c0_i32 = arith.constant 0 : i32
    %c0_i32_0 = arith.constant 0 : i32
    %c0_i32_1 = arith.constant 0 : i32
    return %arg0, %c0_i32, %c0_i32_0 : i32, i32, i32
  }
  func.func @transform_1(%arg0: i32) -> (i32, i32) {
    %c0_i32 = arith.constant 0 : i32
    %c0_i32_0 = arith.constant 0 : i32
    %c0_i32_1 = arith.constant 0 : i32
    return %c0_i32, %c0_i32_0 : i32, i32
  }
  func.func @transform_2(%arg0: i32) -> (i32, i32) {
    %c0_i32 = arith.constant 0 : i32
    %c0_i32_0 = arith.constant 0 : i32
    %c0_i32_1 = arith.constant 0 : i32
    return %c0_i32, %c0_i32_0 : i32, i32
  }
  func.func @transform_3(%arg0: i32) -> (i32, i32) {
    %c0_i32 = arith.constant 0 : i32
    %c0_i32_0 = arith.constant 0 : i32
    %c0_i32_1 = arith.constant 0 : i32
    return %c0_i32, %c0_i32_0 : i32, i32
  }
  func.func @transform_4(%arg0: i32) -> (i32, i32, i32) {
    %c0_i32 = arith.constant 0 : i32
    %c0_i32_0 = arith.constant 0 : i32
    %c0_i32_1 = arith.constant 0 : i32
    return %arg0, %c0_i32, %c0_i32_0 : i32, i32, i32
  }
}

module attributes {stable_mosaic.version = 11 : i64} {
  func.func @_convT_bn_relu_kernel(%arg0: i32, %arg1: memref<1x288x256xbf16, #tpu.memory_space<vmem>>, %arg2: memref<32x288xbf16, #tpu.memory_space<vmem>>, %arg3: memref<32x1xf32, #tpu.memory_space<vmem>>, %arg4: memref<32x1xf32, #tpu.memory_space<vmem>>, %arg5: memref<1x32x256xbf16, #tpu.memory_space<vmem>>) attributes {dimension_semantics = [#tpu.dimension_semantics<parallel>], iteration_bounds = array<i64: 2>, scalar_prefetch = 0 : i64, scratch_operands = 0 : i64, tpu.core_type = #tpu.core_type<tc>, window_params = [{transform_indices = @transform_0, window_bounds = array<i64: 1, 288, 256>}, {pipeline_mode = #tpu.pipeline_mode<synchronous>, transform_indices = @transform_1, window_bounds = array<i64: 32, 288>}, {pipeline_mode = #tpu.pipeline_mode<synchronous>, transform_indices = @transform_2, window_bounds = array<i64: 32, 1>}, {pipeline_mode = #tpu.pipeline_mode<synchronous>, transform_indices = @transform_3, window_bounds = array<i64: 32, 1>}, {transform_indices = @transform_4, window_bounds = array<i64: 1, 32, 256>}]} {
    %c0 = arith.constant 0 : index
    %c0_0 = arith.constant 0 : index
    %0 = vector.load %arg2[%c0, %c0_0] : memref<32x288xbf16, #tpu.memory_space<vmem>>, vector<32x288xbf16>
    %c0_1 = arith.constant 0 : index
    %c0_2 = arith.constant 0 : index
    %c0_3 = arith.constant 0 : index
    %1 = vector.load %arg1[%c0_1, %c0_2, %c0_3] : memref<1x288x256xbf16, #tpu.memory_space<vmem>>, vector<1x288x256xbf16>
    %2 = vector.shape_cast %1 : vector<1x288x256xbf16> to vector<288x256xbf16>
    %cst = arith.constant dense<0.000000e+00> : vector<32x256xf32>
    %3 = tpu.matmul %0, %2, %cst {dimension_numbers = #tpu.dot_dimension_numbers<[1], [0], [0], [1], [0, 0, 1, 1], [], []>} : vector<32x288xbf16>, vector<288x256xbf16>, vector<32x256xf32> -> vector<32x256xf32>
    %c0_4 = arith.constant 0 : index
    %c0_5 = arith.constant 0 : index
    %4 = vector.load %arg3[%c0_4, %c0_5] : memref<32x1xf32, #tpu.memory_space<vmem>>, vector<32x1xf32>
    %5 = vector.broadcast %4 : vector<32x1xf32> to vector<32x256xf32>
    %6 = arith.mulf %3, %5 : vector<32x256xf32>
    %c0_6 = arith.constant 0 : index
    %c0_7 = arith.constant 0 : index
    %7 = vector.load %arg4[%c0_6, %c0_7] : memref<32x1xf32, #tpu.memory_space<vmem>>, vector<32x1xf32>
    %8 = vector.broadcast %7 : vector<32x1xf32> to vector<32x256xf32>
    %9 = arith.addf %6, %8 : vector<32x256xf32>
    %cst_8 = arith.constant 0.000000e+00 : f32
    %10 = vector.broadcast %cst_8 : f32 to vector<32x256xf32>
    %11 = arith.maximumf %9, %10 : vector<32x256xf32>
    %12 = arith.truncf %11 : vector<32x256xf32> to vector<32x256xbf16>
    %c0_9 = arith.constant 0 : index
    %c0_10 = arith.constant 0 : index
    %c0_11 = arith.constant 0 : index
    %13 = vector.load %arg5[%c0_9, %c0_10, %c0_11] : memref<1x32x256xbf16, #tpu.memory_space<vmem>>, vector<1x32x256xbf16>
    %14 = vector.shape_cast %13 : vector<1x32x256xbf16> to vector<32x256xbf16>
    %15 = vector.shape_cast %12 : vector<32x256xbf16> to vector<1x32x256xbf16>
    tpu.vector_store %arg5[%c0_9, %c0_10, %c0_11], %15 {strides = array<i32>} : memref<1x32x256xbf16, #tpu.memory_space<vmem>>, vector<1x32x256xbf16>,
    return
  }
  func.func @transform_0(%arg0: i32) -> (i32, i32, i32) {
    %c0_i32 = arith.constant 0 : i32
    %c0_i32_0 = arith.constant 0 : i32
    %c0_i32_1 = arith.constant 0 : i32
    return %arg0, %c0_i32, %c0_i32_0 : i32, i32, i32
  }
  func.func @transform_1(%arg0: i32) -> (i32, i32) {
    %c0_i32 = arith.constant 0 : i32
    %c0_i32_0 = arith.constant 0 : i32
    %c0_i32_1 = arith.constant 0 : i32
    return %c0_i32, %c0_i32_0 : i32, i32
  }
  func.func @transform_2(%arg0: i32) -> (i32, i32) {
    %c0_i32 = arith.constant 0 : i32
    %c0_i32_0 = arith.constant 0 : i32
    %c0_i32_1 = arith.constant 0 : i32
    return %c0_i32, %c0_i32_0 : i32, i32
  }
  func.func @transform_3(%arg0: i32) -> (i32, i32) {
    %c0_i32 = arith.constant 0 : i32
    %c0_i32_0 = arith.constant 0 : i32
    %c0_i32_1 = arith.constant 0 : i32
    return %c0_i32, %c0_i32_0 : i32, i32
  }
  func.func @transform_4(%arg0: i32) -> (i32, i32, i32) {
    %c0_i32 = arith.constant 0 : i32
    %c0_i32_0 = arith.constant 0 : i32
    %c0_i32_1 = arith.constant 0 : i32
    return %arg0, %c0_i32, %c0_i32_0 : i32, i32, i32
  }
}

module attributes {stable_mosaic.version = 11 : i64} {
  func.func @_conv_bias_maxpool_kernel(%arg0: i32, %arg1: i32, %arg2: memref<1x256x288xbf16, #tpu.memory_space<vmem>>, %arg3: memref<288x1024xbf16, #tpu.memory_space<vmem>>, %arg4: memref<1x1024xf32, #tpu.memory_space<vmem>>, %arg5: memref<1x1x1024xf32, #tpu.memory_space<vmem>>) attributes {dimension_semantics = [#tpu.dimension_semantics<parallel>, #tpu.dimension_semantics<parallel>], iteration_bounds = array<i64: 2, 2>, scalar_prefetch = 0 : i64, scratch_operands = 0 : i64, tpu.core_type = #tpu.core_type<tc>, window_params = [{transform_indices = @transform_0, window_bounds = array<i64: 1, 256, 288>}, {transform_indices = @transform_1, window_bounds = array<i64: 288, 1024>}, {transform_indices = @transform_2, window_bounds = array<i64: 1, 1024>}, {transform_indices = @transform_3, window_bounds = array<i64: 1, 1, 1024>}]} {
    %c0 = arith.constant 0 : index
    %c0_0 = arith.constant 0 : index
    %c0_1 = arith.constant 0 : index
    %0 = vector.load %arg2[%c0, %c0_0, %c0_1] : memref<1x256x288xbf16, #tpu.memory_space<vmem>>, vector<1x256x288xbf16>
    %1 = vector.shape_cast %0 : vector<1x256x288xbf16> to vector<256x288xbf16>
    %c0_2 = arith.constant 0 : index
    %c0_3 = arith.constant 0 : index
    %2 = vector.load %arg3[%c0_2, %c0_3] : memref<288x1024xbf16, #tpu.memory_space<vmem>>, vector<288x1024xbf16>
    %cst = arith.constant dense<0.000000e+00> : vector<256x1024xf32>
    %3 = tpu.matmul %1, %2, %cst {dimension_numbers = #tpu.dot_dimension_numbers<[1], [0], [0], [1], [0, 0, 1, 1], [], []>} : vector<256x288xbf16>, vector<288x1024xbf16>, vector<256x1024xf32> -> vector<256x1024xf32>
    %c0_4 = arith.constant 0 : index
    %c0_5 = arith.constant 0 : index
    %4 = vector.load %arg4[%c0_4, %c0_5] : memref<1x1024xf32, #tpu.memory_space<vmem>>, vector<1x1024xf32>
    %5 = vector.broadcast %4 : vector<1x1024xf32> to vector<256x1024xf32>
    %6 = arith.addf %3, %5 : vector<256x1024xf32>
    %cst_6 = arith.constant dense<0xFF800000> : vector<1024xf32>
    %7 = vector.multi_reduction <maximumf>, %6, %cst_6 [0] : vector<256x1024xf32> to vector<1024xf32>
    %8 = vector.shape_cast %7 : vector<1024xf32> to vector<1x1024xf32>
    %c0_7 = arith.constant 0 : index
    %c0_8 = arith.constant 0 : index
    %c0_9 = arith.constant 0 : index
    %9 = vector.load %arg5[%c0_7, %c0_8, %c0_9] : memref<1x1x1024xf32, #tpu.memory_space<vmem>>, vector<1x1x1024xf32>
    %10 = vector.shape_cast %9 : vector<1x1x1024xf32> to vector<1x1024xf32>
    %11 = vector.shape_cast %8 : vector<1x1024xf32> to vector<1x1x1024xf32>
    tpu.vector_store %arg5[%c0_7, %c0_8, %c0_9], %11 {strides = array<i32>} : memref<1x1x1024xf32, #tpu.memory_space<vmem>>, vector<1x1x1024xf32>,
    return
  }
  func.func @transform_0(%arg0: i32, %arg1: i32) -> (i32, i32, i32) {
    %c0_i32 = arith.constant 0 : i32
    %c0_i32_0 = arith.constant 0 : i32
    %c0_i32_1 = arith.constant 0 : i32
    return %arg0, %c0_i32, %c0_i32_0 : i32, i32, i32
  }
  func.func @transform_1(%arg0: i32, %arg1: i32) -> (i32, i32) {
    %c0_i32 = arith.constant 0 : i32
    %c0_i32_0 = arith.constant 0 : i32
    return %c0_i32, %arg1 : i32, i32
  }
  func.func @transform_2(%arg0: i32, %arg1: i32) -> (i32, i32) {
    %c0_i32 = arith.constant 0 : i32
    %c0_i32_0 = arith.constant 0 : i32
    return %c0_i32, %arg1 : i32, i32
  }
  func.func @transform_3(%arg0: i32, %arg1: i32) -> (i32, i32, i32) {
    %c0_i32 = arith.constant 0 : i32
    %c0_i32_0 = arith.constant 0 : i32
    return %arg0, %c0_i32, %arg1 : i32, i32, i32
  }
}

</mosaic_0001>

<llo_original>
// kernel: ms_box_head_forward.3
$region0: #{ms_box_head_forward.3}
  #allocation0 [shape = 'u32[]', space=smem, size = 0x4, offset = 0x4, fixed_abs, tag = 'smem constant byte address 0x4 - core index']
  #allocation1 [shape = 'u32[144,128]{1,0:T(1,128)}', space=vmem, size = 0x12000, scoped, tag = 'internal scratch']
  %s0 = inlined_call_operand.vmem [shape: bf16[2,36,256], index: 0, kind: input, shape index: {}]
  %s1 = inlined_call_operand.vmem [shape: bf16[32,36], index: 1, kind: input, shape index: {}]
  %s2 = inlined_call_operand.vmem [shape: f32[32,1], index: 2, kind: input, shape index: {}]
  %s3 = inlined_call_operand.vmem [shape: f32[32,1], index: 3, kind: input, shape index: {}]
  %s4 = inlined_call_operand.vmem [shape: bf16[2,32,256], index: 4, kind: output, shape index: {}]
  %s5 = sld [smem:[#allocation0]]
  $region49: #{ms_box_head_forward.3} parent=0
    _
  %s7 = ssub.s32 1, %s5
  %s8 = scalar_select 0, %s7, %s5
  loop: start=0, step=1, limit=4
  $region2: #{ms_box_head_forward.3} parent=0 // loop_pre_header
    _
  $region3: #{ms_box_head_forward.3} parent=0 // loop_header
    %s10 = sphi 0, %s14
    %p11 = scmp.ge.s32.totalorder %s10, 4
    %s20 = sphi 0, %s22
    %s23 = sphi 0, %s20
    %s24 = sphi 0, %s23
    %s40 = sphi 0, %s24
    %s44 = sphi 0, %s44
    %s46 = sphi 0, %s44
    %s47 = sphi 0, %s46
    %s61 = sphi 0, %s47
    %s65 = sphi 0, %s65
    %s67 = sphi 0, %s65
    %s68 = sphi 0, %s67
    %s82 = sphi 0, %s68
    %s86 = sphi 0, %s86
    %s88 = sphi 0, %s86
    %s89 = sphi 0, %s88
    %s103 = sphi 0, %s89
    %s109 = sphi 0, %s111
    %s112 = sphi 0, %s109
    %s113 = sphi 0, %s112
    %s129 = sphi 0, %s113
  $region4: #{ms_box_head_forward.3} parent=0 // loop_header_branch
    %13 = sbr.rel (%p11) target = $region8
  $region5: #{ms_box_head_forward.3} parent=0 // loop_body
    %s15 = ssub.s32 %s10, 1
    %s16 = ssub.s32 %s10, 2
    %s17 = sadd.s32 %s10, 1
    %s18 = ssub.s32 %s10, %s17
    %p19 = scmp.eq.s32.totalorder %s18, 0
    %s21 = sadd.s32 %s20, 1
    %s22 = scalar_select %p19, %s20, %s21
    %p25 = pneg %p19
    %p26 = scmp.eq.s32.totalorder %s10, 1
    %p27 = por %p25, %p26
    %p28 = scmp.ne.s32.totalorder %s20, %s23
    %p29 = scmp.eq.s32.totalorder %s10, 0
    %p30 = por %p28, %p29
    %p31 = scmp.ne.s32.totalorder %s20, %s23
    %p32 = scmp.eq.s32.totalorder %s15, 1
    %p33 = por %p31, %p32
    %p34 = scmp.ne.s32.totalorder %s23, %s24
    %p35 = scmp.eq.s32.totalorder %s15, 0
    %p36 = por %p34, %p35
    %p37 = scmp.ne.s32.totalorder %s23, %s24
    %p38 = scmp.eq.s32.totalorder %s16, 1
    %p39 = por %p37, %p38
    %p41 = scmp.ne.s32.totalorder %s24, %s40
    %p42 = scmp.eq.s32.totalorder %s16, 0
    %p43 = por %p41, %p42
    %s45 = sadd.s32 %s44, 1
    %p48 = scmp.eq.s32.totalorder %s10, 1
    %p49 = scmp.ne.s32.totalorder %s44, %s46
    %p50 = scmp.eq.s32.totalorder %s10, 0
    %p51 = por %p49, %p50
    %p52 = scmp.ne.s32.totalorder %s44, %s46
    %p53 = scmp.eq.s32.totalorder %s15, 1
    %p54 = por %p52, %p53
    %p55 = scmp.ne.s32.totalorder %s46, %s47
    %p56 = scmp.eq.s32.totalorder %s15, 0
    %p57 = por %p55, %p56
    %p58 = scmp.ne.s32.totalorder %s46, %s47
    %p59 = scmp.eq.s32.totalorder %s16, 1
    %p60 = por %p58, %p59
    %p62 = scmp.ne.s32.totalorder %s47, %s61
    %p63 = scmp.eq.s32.totalorder %s16, 0
    %p64 = por %p62, %p63
    %s66 = sadd.s32 %s65, 1
    %p69 = scmp.eq.s32.totalorder %s10, 1
    %p70 = scmp.ne.s32.totalorder %s65, %s67
    %p71 = scmp.eq.s32.totalorder %s10, 0
    %p72 = por %p70, %p71
    %p73 = scmp.ne.s32.totalorder %s65, %s67
    %p74 = scmp.eq.s32.totalorder %s15, 1
    %p75 = por %p73, %p74
    %p76 = scmp.ne.s32.totalorder %s67, %s68
    %p77 = scmp.eq.s32.totalorder %s15, 0
    %p78 = por %p76, %p77
    %p79 = scmp.ne.s32.totalorder %s67, %s68
    %p80 = scmp.eq.s32.totalorder %s16, 1
    %p81 = por %p79, %p80
    %p83 = scmp.ne.s32.totalorder %s68, %s82
    %p84 = scmp.eq.s32.totalorder %s16, 0
    %p85 = por %p83, %p84
    %s87 = sadd.s32 %s86, 1
    %p90 = scmp.eq.s32.totalorder %s10, 1
    %p91 = scmp.ne.s32.totalorder %s86, %s88
    %p92 = scmp.eq.s32.totalorder %s10, 0
    %p93 = por %p91, %p92
    %p94 = scmp.ne.s32.totalorder %s86, %s88
    %p95 = scmp.eq.s32.totalorder %s15, 1
    %p96 = por %p94, %p95
    %p97 = scmp.ne.s32.totalorder %s88, %s89
    %p98 = scmp.eq.s32.totalorder %s15, 0
    %p99 = por %p97, %p98
    %p100 = scmp.ne.s32.totalorder %s88, %s89
    %p101 = scmp.eq.s32.totalorder %s16, 1
    %p102 = por %p100, %p101
    %p104 = scmp.ne.s32.totalorder %s89, %s103
    %p105 = scmp.eq.s32.totalorder %s16, 0
    %p106 = por %p104, %p105
    %s107 = ssub.s32 %s10, %s17
    %p108 = scmp.eq.s32.totalorder %s107, 0
    %s110 = sadd.s32 %s109, 1
    %s111 = scalar_select %p108, %s109, %s110
    %p114 = pneg %p108
    %p115 = scmp.eq.s32.totalorder %s10, 1
    %p116 = por %p114, %p115
    %p117 = scmp.ne.s32.totalorder %s109, %s112
    %p118 = scmp.eq.s32.totalorder %s10, 0
    %p119 = por %p117, %p118
    %p120 = scmp.ne.s32.totalorder %s109, %s112
    %p121 = scmp.eq.s32.totalorder %s15, 1
    %p122 = por %p120, %p121
    %p123 = scmp.ne.s32.totalorder %s112, %s113
    %p124 = scmp.eq.s32.totalorder %s15, 0
    %p125 = por %p123, %p124
    %p126 = scmp.ne.s32.totalorder %s112, %s113
    %p127 = scmp.eq.s32.totalorder %s16, 1
    %p128 = por %p126, %p127
    %p130 = scmp.ne.s32.totalorder %s113, %s129
    %p131 = scmp.eq.s32.totalorder %s16, 0
    %p132 = por %p130, %p131
    %p133 = scmp.le.s32.totalorder 1, %s10
    %p134 = scmp.lt.s32.totalorder %s10, 3
    %p135 = pnand %p133, %p134
    %p136 = pneg %p135
    // Predicated region
    $region9: #{ms_box_head_forward.3} parent=5 // pred_check
      _
    $region10: #{ms_box_head_forward.3} parent=5 // pred_check_branch
      %138 = sbr.rel (%p135) target = $region12
    $region11: #{ms_box_head_forward.3} parent=5 // pred_region
      %s139 = ssub.s32 %s10, 1
      // Predicated region
      $region13: #{ms_box_head_forward.3} parent=11 // pred_check
        %p140 = pneg %p57
      $region14: #{ms_box_head_forward.3} parent=11 // pred_check_branch
        %142 = sbr.rel (%p140) target = $region16
      $region15: #{ms_box_head_forward.3} parent=11 // pred_region
        _
      $region16: #{ms_box_head_forward.3} parent=11 // pred_fallthru
        _
      // Predicated region
      $region17: #{ms_box_head_forward.3} parent=11 // pred_check
        %p143 = pneg %p78
      $region18: #{ms_box_head_forward.3} parent=11 // pred_check_branch
        %145 = sbr.rel (%p143) target = $region20
      $region19: #{ms_box_head_forward.3} parent=11 // pred_region
        _
      $region20: #{ms_box_head_forward.3} parent=11 // pred_fallthru
        _
      // Predicated region
      $region21: #{ms_box_head_forward.3} parent=11 // pred_check
        %p146 = pneg %p99
      $region22: #{ms_box_head_forward.3} parent=11 // pred_check_branch
        %148 = sbr.rel (%p146) target = $region24
      $region23: #{ms_box_head_forward.3} parent=11 // pred_region
        _
      $region24: #{ms_box_head_forward.3} parent=11 // pred_fallthru
        _
    $region12: #{ms_box_head_forward.3} parent=5 // pred_fallthru
      _
    %p149 = scmp.lt.s32.totalorder %s10, 2
    // Predicated region
    $region25: #{ms_box_head_forward.3} parent=5 // pred_check
      %p150 = pneg %p149
    $region26: #{ms_box_head_forward.3} parent=5 // pred_check_branch
      %152 = sbr.rel (%p150) target = $region28
    $region27: #{ms_box_head_forward.3} parent=5 // pred_region
      // Predicated region
      $region29: #{ms_box_head_forward.3} parent=27 // pred_check
        %p153 = pneg %p30
      $region30: #{ms_box_head_forward.3} parent=27 // pred_check_branch
        %155 = sbr.rel (%p153) target = $region32
      $region31: #{ms_box_head_forward.3} parent=27 // pred_region
        %p156 = scmp.lt.s32.totalorder %s10, 1
        %s157 = scalar_select %p156, %s10, 1
        %s158 = smul.addr %s157, 10
        %s159 = smul.addr %s158, 4
        %s160 = scalar_lea.vmem %s0, %s159
      $region32: #{ms_box_head_forward.3} parent=27 // pred_fallthru
        _
    $region28: #{ms_box_head_forward.3} parent=5 // pred_fallthru
      _
    %p161 = scmp.le.s32.totalorder 1, %s10
    %p162 = scmp.lt.s32.totalorder %s10, 3
    %p163 = pnand %p161, %p162
    %p164 = pneg %p163
    // Predicated region
    $region33: #{ms_box_head_forward.3} parent=5 // pred_check
      _
    $region34: #{ms_box_head_forward.3} parent=5 // pred_check_branch
      %166 = sbr.rel (%p163) target = $region36
    $region35: #{ms_box_head_forward.3} parent=5 // pred_region
      %s167 = ssub.s32 %s10, 1
      %p168 = scmp.lt.s32.totalorder %s15, 1
      %s169 = scalar_select %p168, %s15, 1
      %s170 = smul.addr %s169, 10
      %s171 = smul.addr %s170, 4
      %s172 = scalar_lea.vmem %s0, %s171
      %p173 = pneg %p36
      %p174 = pneg %p33
      %p175 = pneg %p57
      %p176 = pneg %p54
      %p177 = pneg %p78
      %p178 = pneg %p75
      %p179 = pneg %p99
      %p180 = pneg %p96
      %p181 = pneg %p125
      %p182 = pneg %p122
      %p183 = scmp.lt.s32.totalorder %s15, 1
      %s184 = scalar_select %p183, %s15, 1
      %s185 = smul.addr %s184, 8
      %s186 = smul.addr %s185, 4
      %s187 = scalar_lea.vmem %s4, %s186
      %p188 = scmp.lt.s32.totalorder %s15, 1
      %s189 = scalar_select %p188, %s15, 1
      %s190 = smul.addr %s189, 10
      %s191 = smul.addr %s190, 4
      %s192 = scalar_lea.vmem %s0, %s191
      %p193 = scmp.lt.s32.totalorder %s15, 1
      %s194 = scalar_select %p193, %s15, 1
      %s195 = smul.addr %s194, 8
      %s196 = smul.addr %s195, 4
      %s197 = scalar_lea.vmem %s4, %s196
      %v199 = vld [vmem:[%s1] sm:$0xf]
      %v200 = vld [vmem:[%s1 + $0x4] sm:$0xf]
      %v201 = vld [vmem:[%s1 + $0x8] sm:$0xf]
      %v202 = vld [vmem:[%s1 + $0xc] sm:$0xf]
      %v203 = vld [vmem:[%s192] sm:$0xff]
      %v204 = vld [vmem:[%s192 + $0x8] sm:$0xff]
      %v205 = vld [vmem:[%s192 + $0x10] sm:$0xff]
      %v206 = vld [vmem:[%s192 + $0x18] sm:$0xff]
      %v207 = vld [vmem:[%s192 + $0x20] sm:$0x33]
      %v212 = vunpack.c.l.b16 %v199
      %v213 = vunpack.c.l.b16 %v200
      %v214 = vunpack.c.l.b16 %v201
      %v215 = vunpack.c.l.b16 %v202
      %v216 = vpack.c.b16 %v213, %v212
      %v217 = vpack.c.b16 %v215, %v214
      %v223 = vunpack.c.l.b16 %v203
      %v224 = vunpack.c.h.b16 %v203
      %v225 = vunpack.c.l.b16 %v204
      %v226 = vunpack.c.h.b16 %v204
      %v227 = vunpack.c.l.b16 %v205
      %v228 = vunpack.c.h.b16 %v205
      %v229 = vunpack.c.l.b16 %v206
      %v230 = vunpack.c.h.b16 %v206
      %v231 = vunpack.c.l.b16 %v207
      %v232 = vunpack.c.h.b16 %v207
      %v233 = vpack.c.b16 %v225, %v223
      %v234 = vpack.c.b16 %v226, %v224
      %v235 = vpack.c.b16 %v229, %v227
      %v236 = vpack.c.b16 %v230, %v228
      %v237 = vpack.c.b16 %v231, %v231
      %v238 = vpack.c.b16 %v232, %v232
      %vm243 = vcmask 293888
      %v245 = vsel %vm243, %v216, 0
      %v248 = vsel %vm243, %v217, 0
      %vm250 = vcmask 1041408
      %v252 = vsel %vm250, %v237, 0
      %v255 = vsel %vm250, %v238, 0
      %257 = vmatprep.subr.bf16.mxu0 %v234
      %258 = vmatpush1.bf16.msra.mxu0 %v233
      %259 = vmatprep.subr.bf16.mxu0 %v236
      %260 = vmatpush1.bf16.msra.mxu0 %v235
      %261 = vmatprep.subr.bf16.mxu0 %v255
      %262 = vmatpush1.bf16.msra.mxu0 %v252
      %263 = vmatprep.subr.bf16.mxu0 0
      %264 = vmatpush1.bf16.msra.mxu0 0
      %265 = vmatprep.subr.bf16.mxu0 0
      %266 = vmatpush1.bf16.msra.mxu0 0
      %267 = vmatprep.subr.bf16.mxu0 0
      %268 = vmatpush1.bf16.msra.mxu0 0
      %269 = vmatprep.subr.bf16.mxu0 0
      %270 = vmatpush1.bf16.msra.mxu0 0
      %271 = vmatprep.subr.bf16.mxu0 0
      %272 = vmatpush1.bf16.msra.mxu0 0
      %273 = vmatprep.subr.bf16.mxu0 0
      %274 = vmatpush1.bf16.msra.mxu0 0
      %275 = vmatprep.subr.bf16.mxu0 0
      %276 = vmatpush1.bf16.msra.mxu0 0
      %277 = vmatprep.subr.bf16.mxu0 0
      %278 = vmatpush1.bf16.msra.mxu0 0
      %279 = vmatprep.subr.bf16.mxu0 0
      %280 = vmatpush1.bf16.msra.mxu0 0
      %281 = vmatprep.subr.bf16.mxu0 0
      %282 = vmatpush1.bf16.msra.mxu0 0
      %283 = vmatprep.subr.bf16.mxu0 0
      %284 = vmatpush1.bf16.msra.mxu0 0
      %285 = vmatprep.subr.bf16.mxu0 0
      %286 = vmatpush1.bf16.msra.mxu0 0
      %287 = vmatprep.subr.bf16.mxu0 0
      %288 = vmatpush1.bf16.msra.mxu0 0
      %289 = vmatprep.mubr.bf16.mxu0 0
      %290 = vmatmul.mubr.bf16.gmra.mrb[0].mxu0 %v245
      %v291 = vpop.f32.mrb[0].mxu0
      %v292 = vadd.f32 0.0, %v291
      %v293 = vpop.f32.mrb[0].mxu0
      %v294 = vadd.f32 0.0, %v293
      %v295 = vpop.f32.mrb[0].mxu0
      %v296 = vadd.f32 0.0, %v295
      %v297 = vpop.f32.mrb[0].mxu0
      %v298 = vadd.f32 0.0, %v297
      %299 = vmatprep.mubr.bf16.mxu0 0
      %300 = vmatmul.mubr.bf16.gmra.mrb[0].mxu0 %v248
      %v301 = vpop.f32.mrb[0].mxu0
      %v302 = vadd.f32 0.0, %v301
      %v303 = vpop.f32.mrb[0].mxu0
      %v304 = vadd.f32 0.0, %v303
      %v305 = vpop.f32.mrb[0].mxu0
      %v306 = vadd.f32 0.0, %v305
      %v307 = vpop.f32.mrb[0].mxu0
      %v308 = vadd.f32 0.0, %v307
      %309 = vdwg.mxu0
      %v310 = vld [vmem:[%s2] sm:$0xff]
      %v311 = vld [vmem:[%s2 + $0x8] sm:$0xff]
      %v312 = vld [vmem:[%s2 + $0x10] sm:$0xff]
      %v313 = vld [vmem:[%s2 + $0x18] sm:$0xff]
      %315 = vset.pattern.permute.xlu0 0
      %316 = vperm.xlu0 %315, %v310
      %v317 = vpop.permute.xlu0 %316
      %320 = vset.pattern.permute.xlu0 0
      %321 = vperm.xlu0 %320, %v311
      %v322 = vpop.permute.xlu0 %321
      %325 = vset.pattern.permute.xlu0 0
      %326 = vperm.xlu0 %325, %v312
      %v327 = vpop.permute.xlu0 %326
      %330 = vset.pattern.permute.xlu0 0
      %331 = vperm.xlu0 %330, %v313
      %v332 = vpop.permute.xlu0 %331
      %v334 = vmul.f32 %v292, %v317
      %v335 = vmul.f32 %v294, %v317
      %v336 = vmul.f32 %v296, %v322
      %v337 = vmul.f32 %v298, %v322
      %v338 = vmul.f32 %v302, %v327
      %v339 = vmul.f32 %v304, %v327
      %v340 = vmul.f32 %v306, %v332
      %v341 = vmul.f32 %v308, %v332
      %v342 = vld [vmem:[%s3] sm:$0xff]
      %v343 = vld [vmem:[%s3 + $0x8] sm:$0xff]
      %v344 = vld [vmem:[%s3 + $0x10] sm:$0xff]
      %v345 = vld [vmem:[%s3 + $0x18] sm:$0xff]
      %347 = vset.pattern.permute.xlu0 0
      %348 = vperm.xlu0 %347, %v342
      %v349 = vpop.permute.xlu0 %348
      %352 = vset.pattern.permute.xlu0 0
      %353 = vperm.xlu0 %352, %v343
      %v354 = vpop.permute.xlu0 %353
      %357 = vset.pattern.permute.xlu0 0
      %358 = vperm.xlu0 %357, %v344
      %v359 = vpop.permute.xlu0 %358
      %362 = vset.pattern.permute.xlu0 0
      %363 = vperm.xlu0 %362, %v345
      %v364 = vpop.permute.xlu0 %363
      %v366 = vadd.f32 %v334, %v349
      %v367 = vadd.f32 %v335, %v349
      %v368 = vadd.f32 %v336, %v354
      %v369 = vadd.f32 %v337, %v354
      %v370 = vadd.f32 %v338, %v359
      %v371 = vadd.f32 %v339, %v359
      %v372 = vadd.f32 %v340, %v364
      %v373 = vadd.f32 %v341, %v364
      %v374 = vmax.f32 %v366, 0.0
      %v375 = vmax.f32 %v367, 0.0
      %v376 = vmax.f32 %v368, 0.0
      %v377 = vmax.f32 %v369, 0.0
      %v378 = vmax.f32 %v370, 0.0
      %v379 = vmax.f32 %v371, 0.0
      %v380 = vmax.f32 %v372, 0.0
      %v381 = vmax.f32 %v373, 0.0
      %v382 = vpack.c.bf16 %v376, %v374
      %v383 = vpack.c.bf16 %v377, %v375
      %v384 = vpack.c.bf16 %v380, %v378
      %v385 = vpack.c.bf16 %v381, %v379
      %v390 = vunpack.c.l.b16 %v382
      %v391 = vunpack.c.l.b16 %v383
      %v392 = vunpack.c.h.b16 %v382
      %v393 = vunpack.c.h.b16 %v383
      %v394 = vunpack.c.l.b16 %v384
      %v395 = vunpack.c.l.b16 %v385
      %v396 = vunpack.c.h.b16 %v384
      %v397 = vunpack.c.h.b16 %v385
      %v398 = vpack.c.b16 %v391, %v390
      %v399 = vpack.c.b16 %v393, %v392
      %v400 = vpack.c.b16 %v395, %v394
      %v401 = vpack.c.b16 %v397, %v396
      %406 = vst [vmem:[%s197] sm:$0xff] %v398
      %407 = vst [vmem:[%s197 + $0x8] sm:$0xff] %v399
      %408 = vst [vmem:[%s197 + $0x10] sm:$0xff] %v400
      %409 = vst [vmem:[%s197 + $0x18] sm:$0xff] %v401
      %p410 = scmp.lt.s32.totalorder %s15, 1
      %s411 = scalar_select %p410, %s15, 1
      %s412 = smul.addr %s411, 8
      %s413 = smul.addr %s412, 4
      %s414 = scalar_lea.vmem %s4, %s413
      // Predicated region
      $region37: #{ms_box_head_forward.3} parent=35 // pred_check
        %p415 = pneg %p122
      $region38: #{ms_box_head_forward.3} parent=35 // pred_check_branch
        %417 = sbr.rel (%p415) target = $region40
      $region39: #{ms_box_head_forward.3} parent=35 // pred_region
        _
      $region40: #{ms_box_head_forward.3} parent=35 // pred_fallthru
        _
    $region36: #{ms_box_head_forward.3} parent=5 // pred_fallthru
      _
    %p418 = scmp.le.s32.totalorder 2, %s10
    // Predicated region
    $region41: #{ms_box_head_forward.3} parent=5 // pred_check
      %p419 = pneg %p418
    $region42: #{ms_box_head_forward.3} parent=5 // pred_check_branch
      %421 = sbr.rel (%p419) target = $region44
    $region43: #{ms_box_head_forward.3} parent=5 // pred_region
      %s422 = ssub.s32 %s10, 2
      // Predicated region
      $region45: #{ms_box_head_forward.3} parent=43 // pred_check
        %p423 = pneg %p128
      $region46: #{ms_box_head_forward.3} parent=43 // pred_check_branch
        %425 = sbr.rel (%p423) target = $region48
      $region47: #{ms_box_head_forward.3} parent=43 // pred_region
        %p426 = scmp.lt.s32.totalorder %s16, 1
        %s427 = scalar_select %p426, %s16, 1
        %s428 = smul.addr %s427, 8
        %s429 = smul.addr %s428, 4
        %s430 = scalar_lea.vmem %s4, %s429
      $region48: #{ms_box_head_forward.3} parent=43 // pred_fallthru
        _
    $region44: #{ms_box_head_forward.3} parent=5 // pred_fallthru
      _
  $region6: #{ms_box_head_forward.3} parent=0 // loop_footer
    %s14 = sadd.s32 1, %s10
  $region7: #{ms_box_head_forward.3} parent=0 // loop_footer_branch
    %9 = sbr.rel target = $region3
  $region8: #{ms_box_head_forward.3} parent=0 // loop_exit
    _

// kernel: ms_box_head_forward.4
$region0: #{ms_box_head_forward.4}
  #allocation0 [shape = 'u32[]', space=smem, size = 0x4, offset = 0x4, fixed_abs, tag = 'smem constant byte address 0x4 - core index']
  #allocation1 [shape = 'u32[144,128]{1,0:T(1,128)}', space=vmem, size = 0x12000, scoped, tag = 'internal scratch']
  %s0 = inlined_call_operand.vmem [shape: bf16[2,288,256], index: 0, kind: input, shape index: {}]
  %s1 = inlined_call_operand.vmem [shape: bf16[32,288], index: 1, kind: input, shape index: {}]
  %s2 = inlined_call_operand.vmem [shape: f32[32,1], index: 2, kind: input, shape index: {}]
  %s3 = inlined_call_operand.vmem [shape: f32[32,1], index: 3, kind: input, shape index: {}]
  %s4 = inlined_call_operand.vmem [shape: bf16[2,32,256], index: 4, kind: output, shape index: {}]
  %s5 = sld [smem:[#allocation0]]
  $region49: #{ms_box_head_forward.4} parent=0
    _
  %s7 = ssub.s32 1, %s5
  %s8 = scalar_select 0, %s7, %s5
  loop: start=0, step=1, limit=4
  $region2: #{ms_box_head_forward.4} parent=0 // loop_pre_header
    _
  $region3: #{ms_box_head_forward.4} parent=0 // loop_header
    %s10 = sphi 0, %s14
    %p11 = scmp.ge.s32.totalorder %s10, 4
    %s20 = sphi 0, %s22
    %s23 = sphi 0, %s20
    %s24 = sphi 0, %s23
    %s40 = sphi 0, %s24
    %s44 = sphi 0, %s44
    %s46 = sphi 0, %s44
    %s47 = sphi 0, %s46
    %s61 = sphi 0, %s47
    %s65 = sphi 0, %s65
    %s67 = sphi 0, %s65
    %s68 = sphi 0, %s67
    %s82 = sphi 0, %s68
    %s86 = sphi 0, %s86
    %s88 = sphi 0, %s86
    %s89 = sphi 0, %s88
    %s103 = sphi 0, %s89
    %s109 = sphi 0, %s111
    %s112 = sphi 0, %s109
    %s113 = sphi 0, %s112
    %s129 = sphi 0, %s113
  $region4: #{ms_box_head_forward.4} parent=0 // loop_header_branch
    %13 = sbr.rel (%p11) target = $region8
  $region5: #{ms_box_head_forward.4} parent=0 // loop_body
    %s15 = ssub.s32 %s10, 1
    %s16 = ssub.s32 %s10, 2
    %s17 = sadd.s32 %s10, 1
    %s18 = ssub.s32 %s10, %s17
    %p19 = scmp.eq.s32.totalorder %s18, 0
    %s21 = sadd.s32 %s20, 1
    %s22 = scalar_select %p19, %s20, %s21
    %p25 = pneg %p19
    %p26 = scmp.eq.s32.totalorder %s10, 1
    %p27 = por %p25, %p26
    %p28 = scmp.ne.s32.totalorder %s20, %s23
    %p29 = scmp.eq.s32.totalorder %s10, 0
    %p30 = por %p28, %p29
    %p31 = scmp.ne.s32.totalorder %s20, %s23
    %p32 = scmp.eq.s32.totalorder %s15, 1
    %p33 = por %p31, %p32
    %p34 = scmp.ne.s32.totalorder %s23, %s24
    %p35 = scmp.eq.s32.totalorder %s15, 0
    %p36 = por %p34, %p35
    %p37 = scmp.ne.s32.totalorder %s23, %s24
    %p38 = scmp.eq.s32.totalorder %s16, 1
    %p39 = por %p37, %p38
    %p41 = scmp.ne.s32.totalorder %s24, %s40
    %p42 = scmp.eq.s32.totalorder %s16, 0
    %p43 = por %p41, %p42
    %s45 = sadd.s32 %s44, 1
    %p48 = scmp.eq.s32.totalorder %s10, 1
    %p49 = scmp.ne.s32.totalorder %s44, %s46
    %p50 = scmp.eq.s32.totalorder %s10, 0
    %p51 = por %p49, %p50
    %p52 = scmp.ne.s32.totalorder %s44, %s46
    %p53 = scmp.eq.s32.totalorder %s15, 1
    %p54 = por %p52, %p53
    %p55 = scmp.ne.s32.totalorder %s46, %s47
    %p56 = scmp.eq.s32.totalorder %s15, 0
    %p57 = por %p55, %p56
    %p58 = scmp.ne.s32.totalorder %s46, %s47
    %p59 = scmp.eq.s32.totalorder %s16, 1
    %p60 = por %p58, %p59
    %p62 = scmp.ne.s32.totalorder %s47, %s61
    %p63 = scmp.eq.s32.totalorder %s16, 0
    %p64 = por %p62, %p63
    %s66 = sadd.s32 %s65, 1
    %p69 = scmp.eq.s32.totalorder %s10, 1
    %p70 = scmp.ne.s32.totalorder %s65, %s67
    %p71 = scmp.eq.s32.totalorder %s10, 0
    %p72 = por %p70, %p71
    %p73 = scmp.ne.s32.totalorder %s65, %s67
    %p74 = scmp.eq.s32.totalorder %s15, 1
    %p75 = por %p73, %p74
    %p76 = scmp.ne.s32.totalorder %s67, %s68
    %p77 = scmp.eq.s32.totalorder %s15, 0
    %p78 = por %p76, %p77
    %p79 = scmp.ne.s32.totalorder %s67, %s68
    %p80 = scmp.eq.s32.totalorder %s16, 1
    %p81 = por %p79, %p80
    %p83 = scmp.ne.s32.totalorder %s68, %s82
    %p84 = scmp.eq.s32.totalorder %s16, 0
    %p85 = por %p83, %p84
    %s87 = sadd.s32 %s86, 1
    %p90 = scmp.eq.s32.totalorder %s10, 1
    %p91 = scmp.ne.s32.totalorder %s86, %s88
    %p92 = scmp.eq.s32.totalorder %s10, 0
    %p93 = por %p91, %p92
    %p94 = scmp.ne.s32.totalorder %s86, %s88
    %p95 = scmp.eq.s32.totalorder %s15, 1
    %p96 = por %p94, %p95
    %p97 = scmp.ne.s32.totalorder %s88, %s89
    %p98 = scmp.eq.s32.totalorder %s15, 0
    %p99 = por %p97, %p98
    %p100 = scmp.ne.s32.totalorder %s88, %s89
    %p101 = scmp.eq.s32.totalorder %s16, 1
    %p102 = por %p100, %p101
    %p104 = scmp.ne.s32.totalorder %s89, %s103
    %p105 = scmp.eq.s32.totalorder %s16, 0
    %p106 = por %p104, %p105
    %s107 = ssub.s32 %s10, %s17
    %p108 = scmp.eq.s32.totalorder %s107, 0
    %s110 = sadd.s32 %s109, 1
    %s111 = scalar_select %p108, %s109, %s110
    %p114 = pneg %p108
    %p115 = scmp.eq.s32.totalorder %s10, 1
    %p116 = por %p114, %p115
    %p117 = scmp.ne.s32.totalorder %s109, %s112
    %p118 = scmp.eq.s32.totalorder %s10, 0
    %p119 = por %p117, %p118
    %p120 = scmp.ne.s32.totalorder %s109, %s112
    %p121 = scmp.eq.s32.totalorder %s15, 1
    %p122 = por %p120, %p121
    %p123 = scmp.ne.s32.totalorder %s112, %s113
    %p124 = scmp.eq.s32.totalorder %s15, 0
    %p125 = por %p123, %p124
    %p126 = scmp.ne.s32.totalorder %s112, %s113
    %p127 = scmp.eq.s32.totalorder %s16, 1
    %p128 = por %p126, %p127
    %p130 = scmp.ne.s32.totalorder %s113, %s129
    %p131 = scmp.eq.s32.totalorder %s16, 0
    %p132 = por %p130, %p131
    %p133 = scmp.le.s32.totalorder 1, %s10
    %p134 = scmp.lt.s32.totalorder %s10, 3
    %p135 = pnand %p133, %p134
    %p136 = pneg %p135
    // Predicated region
    $region9: #{ms_box_head_forward.4} parent=5 // pred_check
      _
    $region10: #{ms_box_head_forward.4} parent=5 // pred_check_branch
      %138 = sbr.rel (%p135) target = $region12
    $region11: #{ms_box_head_forward.4} parent=5 // pred_region
      %s139 = ssub.s32 %s10, 1
      // Predicated region
      $region13: #{ms_box_head_forward.4} parent=11 // pred_check
        %p140 = pneg %p57
      $region14: #{ms_box_head_forward.4} parent=11 // pred_check_branch
        %142 = sbr.rel (%p140) target = $region16
      $region15: #{ms_box_head_forward.4} parent=11 // pred_region
        _
      $region16: #{ms_box_head_forward.4} parent=11 // pred_fallthru
        _
      // Predicated region
      $region17: #{ms_box_head_forward.4} parent=11 // pred_check
        %p143 = pneg %p78
      $region18: #{ms_box_head_forward.4} parent=11 // pred_check_branch
        %145 = sbr.rel (%p143) target = $region20
      $region19: #{ms_box_head_forward.4} parent=11 // pred_region
        _
      $region20: #{ms_box_head_forward.4} parent=11 // pred_fallthru
        _
      // Predicated region
      $region21: #{ms_box_head_forward.4} parent=11 // pred_check
        %p146 = pneg %p99
      $region22: #{ms_box_head_forward.4} parent=11 // pred_check_branch
        %148 = sbr.rel (%p146) target = $region24
      $region23: #{ms_box_head_forward.4} parent=11 // pred_region
        _
      $region24: #{ms_box_head_forward.4} parent=11 // pred_fallthru
        _
    $region12: #{ms_box_head_forward.4} parent=5 // pred_fallthru
      _
    %p149 = scmp.lt.s32.totalorder %s10, 2
    // Predicated region
    $region25: #{ms_box_head_forward.4} parent=5 // pred_check
      %p150 = pneg %p149
    $region26: #{ms_box_head_forward.4} parent=5 // pred_check_branch
      %152 = sbr.rel (%p150) target = $region28
    $region27: #{ms_box_head_forward.4} parent=5 // pred_region
      // Predicated region
      $region29: #{ms_box_head_forward.4} parent=27 // pred_check
        %p153 = pneg %p30
      $region30: #{ms_box_head_forward.4} parent=27 // pred_check_branch
        %155 = sbr.rel (%p153) target = $region32
      $region31: #{ms_box_head_forward.4} parent=27 // pred_region
        %p156 = scmp.lt.s32.totalorder %s10, 1
        %s157 = scalar_select %p156, %s10, 1
        %s158 = smul.addr %s157, 72
        %s159 = smul.addr %s158, 4
        %s160 = scalar_lea.vmem %s0, %s159
      $region32: #{ms_box_head_forward.4} parent=27 // pred_fallthru
        _
    $region28: #{ms_box_head_forward.4} parent=5 // pred_fallthru
      _
    %p161 = scmp.le.s32.totalorder 1, %s10
    %p162 = scmp.lt.s32.totalorder %s10, 3
    %p163 = pnand %p161, %p162
    %p164 = pneg %p163
    // Predicated region
    $region33: #{ms_box_head_forward.4} parent=5 // pred_check
      _
    $region34: #{ms_box_head_forward.4} parent=5 // pred_check_branch
      %166 = sbr.rel (%p163) target = $region36
    $region35: #{ms_box_head_forward.4} parent=5 // pred_region
      %s167 = ssub.s32 %s10, 1
      %p168 = scmp.lt.s32.totalorder %s15, 1
      %s169 = scalar_select %p168, %s15, 1
      %s170 = smul.addr %s169, 72
      %s171 = smul.addr %s170, 4
      %s172 = scalar_lea.vmem %s0, %s171
      %p173 = pneg %p36
      %p174 = pneg %p33
      %p175 = pneg %p57
      %p176 = pneg %p54
      %p177 = pneg %p78
      %p178 = pneg %p75
      %p179 = pneg %p99
      %p180 = pneg %p96
      %p181 = pneg %p125
      %p182 = pneg %p122
      %p183 = scmp.lt.s32.totalorder %s15, 1
      %s184 = scalar_select %p183, %s15, 1
      %s185 = smul.addr %s184, 8
      %s186 = smul.addr %s185, 4
      %s187 = scalar_lea.vmem %s4, %s186
      %p188 = scmp.lt.s32.totalorder %s15, 1
      %s189 = scalar_select %p188, %s15, 1
      %s190 = smul.addr %s189, 72
      %s191 = smul.addr %s190, 4
      %s192 = scalar_lea.vmem %s0, %s191
      %p193 = scmp.lt.s32.totalorder %s15, 1
      %s194 = scalar_select %p193, %s15, 1
      %s195 = smul.addr %s194, 8
      %s196 = smul.addr %s195, 4
      %s197 = scalar_lea.vmem %s4, %s196
      %v199 = vld [vmem:[%s1] sm:$0xff]
      %v200 = vld [vmem:[%s1 + $0x8] sm:$0xf]
      %v201 = vld [vmem:[%s1 + $0xc] sm:$0xff]
      %v202 = vld [vmem:[%s1 + $0x14] sm:$0xf]
      %v203 = vld [vmem:[%s1 + $0x18] sm:$0xff]
      %v204 = vld [vmem:[%s1 + $0x20] sm:$0xf]
      %v205 = vld [vmem:[%s1 + $0x24] sm:$0xff]
      %v206 = vld [vmem:[%s1 + $0x2c] sm:$0xf]
      %v207 = vld [vmem:[%s192] sm:$0xff]
      %v208 = vld [vmem:[%s192 + $0x8] sm:$0xff]
      %v209 = vld [vmem:[%s192 + $0x10] sm:$0xff]
      %v210 = vld [vmem:[%s192 + $0x18] sm:$0xff]
      %v211 = vld [vmem:[%s192 + $0x20] sm:$0xff]
      %v212 = vld [vmem:[%s192 + $0x28] sm:$0xff]
      %v213 = vld [vmem:[%s192 + $0x30] sm:$0xff]
      %v214 = vld [vmem:[%s192 + $0x38] sm:$0xff]
      %v215 = vld [vmem:[%s192 + $0x40] sm:$0xff]
      %v216 = vld [vmem:[%s192 + $0x48] sm:$0xff]
      %v217 = vld [vmem:[%s192 + $0x50] sm:$0xff]
      %v218 = vld [vmem:[%s192 + $0x58] sm:$0xff]
      %v219 = vld [vmem:[%s192 + $0x60] sm:$0xff]
      %v220 = vld [vmem:[%s192 + $0x68] sm:$0xff]
      %v221 = vld [vmem:[%s192 + $0x70] sm:$0xff]
      %v222 = vld [vmem:[%s192 + $0x78] sm:$0xff]
      %v223 = vld [vmem:[%s192 + $0x80] sm:$0xff]
      %v224 = vld [vmem:[%s192 + $0x88] sm:$0xff]
      %v225 = vld [vmem:[%s192 + $0x90] sm:$0xff]
      %v226 = vld [vmem:[%s192 + $0x98] sm:$0xff]
      %v227 = vld [vmem:[%s192 + $0xa0] sm:$0xff]
      %v228 = vld [vmem:[%s192 + $0xa8] sm:$0xff]
      %v229 = vld [vmem:[%s192 + $0xb0] sm:$0xff]
      %v230 = vld [vmem:[%s192 + $0xb8] sm:$0xff]
      %v231 = vld [vmem:[%s192 + $0xc0] sm:$0xff]
      %v232 = vld [vmem:[%s192 + $0xc8] sm:$0xff]
      %v233 = vld [vmem:[%s192 + $0xd0] sm:$0xff]
      %v234 = vld [vmem:[%s192 + $0xd8] sm:$0xff]
      %v235 = vld [vmem:[%s192 + $0xe0] sm:$0xff]
      %v236 = vld [vmem:[%s192 + $0xe8] sm:$0xff]
      %v237 = vld [vmem:[%s192 + $0xf0] sm:$0xff]
      %v238 = vld [vmem:[%s192 + $0xf8] sm:$0xff]
      %v239 = vld [vmem:[%s192 + $0x100] sm:$0xff]
      %v240 = vld [vmem:[%s192 + $0x108] sm:$0xff]
      %v241 = vld [vmem:[%s192 + $0x110] sm:$0xff]
      %v242 = vld [vmem:[%s192 + $0x118] sm:$0xff]
      %v251 = vunpack.c.l.b16 %v199
      %v252 = vunpack.c.h.b16 %v199
      %v253 = vunpack.c.l.b16 %v200
      %v254 = vunpack.c.l.b16 %v201
      %v255 = vunpack.c.h.b16 %v201
      %v256 = vunpack.c.l.b16 %v202
      %v257 = vunpack.c.l.b16 %v203
      %v258 = vunpack.c.h.b16 %v203
      %v259 = vunpack.c.l.b16 %v204
      %v260 = vunpack.c.l.b16 %v205
      %v261 = vunpack.c.h.b16 %v205
      %v262 = vunpack.c.l.b16 %v206
      %v263 = vpack.c.b16 %v254, %v251
      %v264 = vpack.c.b16 %v255, %v252
      %v265 = vpack.c.b16 %v256, %v253
      %v266 = vpack.c.b16 %v260, %v257
      %v267 = vpack.c.b16 %v261, %v258
      %v268 = vpack.c.b16 %v262, %v259
      %v309 = vunpack.c.l.b16 %v207
      %v310 = vunpack.c.h.b16 %v207
      %v311 = vunpack.c.l.b16 %v208
      %v312 = vunpack.c.h.b16 %v208
      %v313 = vunpack.c.l.b16 %v209
      %v314 = vunpack.c.h.b16 %v209
      %v315 = vunpack.c.l.b16 %v210
      %v316 = vunpack.c.h.b16 %v210
      %v317 = vunpack.c.l.b16 %v211
      %v318 = vunpack.c.h.b16 %v211
      %v319 = vunpack.c.l.b16 %v212
      %v320 = vunpack.c.h.b16 %v212
      %v321 = vunpack.c.l.b16 %v213
      %v322 = vunpack.c.h.b16 %v213
      %v323 = vunpack.c.l.b16 %v214
      %v324 = vunpack.c.h.b16 %v214
      %v325 = vunpack.c.l.b16 %v215
      %v326 = vunpack.c.h.b16 %v215
      %v327 = vunpack.c.l.b16 %v216
      %v328 = vunpack.c.h.b16 %v216
      %v329 = vunpack.c.l.b16 %v217
      %v330 = vunpack.c.h.b16 %v217
      %v331 = vunpack.c.l.b16 %v218
      %v332 = vunpack.c.h.b16 %v218
      %v333 = vunpack.c.l.b16 %v219
      %v334 = vunpack.c.h.b16 %v219
      %v335 = vunpack.c.l.b16 %v220
      %v336 = vunpack.c.h.b16 %v220
      %v337 = vunpack.c.l.b16 %v221
      %v338 = vunpack.c.h.b16 %v221
      %v339 = vunpack.c.l.b16 %v222
      %v340 = vunpack.c.h.b16 %v222
      %v341 = vunpack.c.l.b16 %v223
      %v342 = vunpack.c.h.b16 %v223
      %v343 = vunpack.c.l.b16 %v224
      %v344 = vunpack.c.h.b16 %v224
      %v345 = vunpack.c.l.b16 %v225
      %v346 = vunpack.c.h.b16 %v225
      %v347 = vunpack.c.l.b16 %v226
      %v348 = vunpack.c.h.b16 %v226
      %v349 = vunpack.c.l.b16 %v227
      %v350 = vunpack.c.h.b16 %v227
      %v351 = vunpack.c.l.b16 %v228
      %v352 = vunpack.c.h.b16 %v228
      %v353 = vunpack.c.l.b16 %v229
      %v354 = vunpack.c.h.b16 %v229
      %v355 = vunpack.c.l.b16 %v230
      %v356 = vunpack.c.h.b16 %v230
      %v357 = vunpack.c.l.b16 %v231
      %v358 = vunpack.c.h.b16 %v231
      %v359 = vunpack.c.l.b16 %v232
      %v360 = vunpack.c.h.b16 %v232
      %v361 = vunpack.c.l.b16 %v233
      %v362 = vunpack.c.h.b16 %v233
      %v363 = vunpack.c.l.b16 %v234
      %v364 = vunpack.c.h.b16 %v234
      %v365 = vunpack.c.l.b16 %v235
      %v366 = vunpack.c.h.b16 %v235
      %v367 = vunpack.c.l.b16 %v236
      %v368 = vunpack.c.h.b16 %v236
      %v369 = vunpack.c.l.b16 %v237
      %v370 = vunpack.c.h.b16 %v237
      %v371 = vunpack.c.l.b16 %v238
      %v372 = vunpack.c.h.b16 %v238
      %v373 = vunpack.c.l.b16 %v239
      %v374 = vunpack.c.h.b16 %v239
      %v375 = vunpack.c.l.b16 %v240
      %v376 = vunpack.c.h.b16 %v240
      %v377 = vunpack.c.l.b16 %v241
      %v378 = vunpack.c.h.b16 %v241
      %v379 = vunpack.c.l.b16 %v242
      %v380 = vunpack.c.h.b16 %v242
      %v381 = vpack.c.b16 %v311, %v309
      %v382 = vpack.c.b16 %v312, %v310
      %v383 = vpack.c.b16 %v315, %v313
      %v384 = vpack.c.b16 %v316, %v314
      %v385 = vpack.c.b16 %v319, %v317
      %v386 = vpack.c.b16 %v320, %v318
      %v387 = vpack.c.b16 %v323, %v321
      %v388 = vpack.c.b16 %v324, %v322
      %v389 = vpack.c.b16 %v327, %v325
      %v390 = vpack.c.b16 %v328, %v326
      %v391 = vpack.c.b16 %v331, %v329
      %v392 = vpack.c.b16 %v332, %v330
      %v393 = vpack.c.b16 %v335, %v333
      %v394 = vpack.c.b16 %v336, %v334
      %v395 = vpack.c.b16 %v339, %v337
      %v396 = vpack.c.b16 %v340, %v338
      %v397 = vpack.c.b16 %v343, %v341
      %v398 = vpack.c.b16 %v344, %v342
      %v399 = vpack.c.b16 %v347, %v345
      %v400 = vpack.c.b16 %v348, %v346
      %v401 = vpack.c.b16 %v351, %v349
      %v402 = vpack.c.b16 %v352, %v350
      %v403 = vpack.c.b16 %v355, %v353
      %v404 = vpack.c.b16 %v356, %v354
      %v405 = vpack.c.b16 %v359, %v357
      %v406 = vpack.c.b16 %v360, %v358
      %v407 = vpack.c.b16 %v363, %v361
      %v408 = vpack.c.b16 %v364, %v362
      %v409 = vpack.c.b16 %v367, %v365
      %v410 = vpack.c.b16 %v368, %v366
      %v411 = vpack.c.b16 %v371, %v369
      %v412 = vpack.c.b16 %v372, %v370
      %v413 = vpack.c.b16 %v375, %v373
      %v414 = vpack.c.b16 %v376, %v374
      %v415 = vpack.c.b16 %v379, %v377
      %v416 = vpack.c.b16 %v380, %v378
      %vm453 = vcmask 261120
      %v455 = vsel %vm453, %v265, 0
      %v458 = vsel %vm453, %v268, 0
      %460 = vmatprep.subr.bf16.mxu0 %v382
      %461 = vmatpush1.bf16.msra.mxu0 %v381
      %462 = vmatprep.subr.bf16.mxu0 %v384
      %463 = vmatpush1.bf16.msra.mxu0 %v383
      %464 = vmatprep.subr.bf16.mxu0 %v386
      %465 = vmatpush1.bf16.msra.mxu0 %v385
      %466 = vmatprep.subr.bf16.mxu0 %v388
      %467 = vmatpush1.bf16.msra.mxu0 %v387
      %468 = vmatprep.subr.bf16.mxu0 %v390
      %469 = vmatpush1.bf16.msra.mxu0 %v389
      %470 = vmatprep.subr.bf16.mxu0 %v392
      %471 = vmatpush1.bf16.msra.mxu0 %v391
      %472 = vmatprep.subr.bf16.mxu0 %v394
      %473 = vmatpush1.bf16.msra.mxu0 %v393
      %474 = vmatprep.subr.bf16.mxu0 %v396
      %475 = vmatpush1.bf16.msra.mxu0 %v395
      %476 = vmatprep.subr.bf16.mxu0 %v398
      %477 = vmatpush1.bf16.msra.mxu0 %v397
      %478 = vmatprep.subr.bf16.mxu0 %v400
      %479 = vmatpush1.bf16.msra.mxu0 %v399
      %480 = vmatprep.subr.bf16.mxu0 %v402
      %481 = vmatpush1.bf16.msra.mxu0 %v401
      %482 = vmatprep.subr.bf16.mxu0 %v404
      %483 = vmatpush1.bf16.msra.mxu0 %v403
      %484 = vmatprep.subr.bf16.mxu0 %v406
      %485 = vmatpush1.bf16.msra.mxu0 %v405
      %486 = vmatprep.subr.bf16.mxu0 %v408
      %487 = vmatpush1.bf16.msra.mxu0 %v407
      %488 = vmatprep.subr.bf16.mxu0 %v410
      %489 = vmatpush1.bf16.msra.mxu0 %v409
      %490 = vmatprep.subr.bf16.mxu0 %v412
      %491 = vmatpush1.bf16.msra.mxu0 %v411
      %492 = vmatprep.mubr.bf16.mxu0 %v264
      %493 = vmatmul.mubr.bf16.gmra.mrb[0].mxu0 %v263
      %v494 = vpop.f32.mrb[0].mxu0
      %v495 = vadd.f32 0.0, %v494
      %v496 = vpop.f32.mrb[0].mxu0
      %v497 = vadd.f32 0.0, %v496
      %v498 = vpop.f32.mrb[0].mxu0
      %v499 = vadd.f32 0.0, %v498
      %v500 = vpop.f32.mrb[0].mxu0
      %v501 = vadd.f32 0.0, %v500
      %502 = vmatprep.mubr.bf16.mxu0 %v267
      %503 = vmatmul.mubr.bf16.gmra.mrb[0].mxu0 %v266
      %v504 = vpop.f32.mrb[0].mxu0
      %v505 = vadd.f32 0.0, %v504
      %v506 = vpop.f32.mrb[0].mxu0
      %v507 = vadd.f32 0.0, %v506
      %v508 = vpop.f32.mrb[0].mxu0
      %v509 = vadd.f32 0.0, %v508
      %v510 = vpop.f32.mrb[0].mxu0
      %v511 = vadd.f32 0.0, %v510
      %512 = vdwg.mxu0
      %513 = vmatprep.subr.bf16.mxu0 %v414
      %514 = vmatpush1.bf16.msra.mxu0 %v413
      %515 = vmatprep.subr.bf16.mxu0 %v416
      %516 = vmatpush1.bf16.msra.mxu0 %v415
      %517 = vmatprep.subr.bf16.mxu0 0
      %518 = vmatpush1.bf16.msra.mxu0 0
      %519 = vmatprep.subr.bf16.mxu0 0
      %520 = vmatpush1.bf16.msra.mxu0 0
      %521 = vmatprep.subr.bf16.mxu0 0
      %522 = vmatpush1.bf16.msra.mxu0 0
      %523 = vmatprep.subr.bf16.mxu0 0
      %524 = vmatpush1.bf16.msra.mxu0 0
      %525 = vmatprep.subr.bf16.mxu0 0
      %526 = vmatpush1.bf16.msra.mxu0 0
      %527 = vmatprep.subr.bf16.mxu0 0
      %528 = vmatpush1.bf16.msra.mxu0 0
      %529 = vmatprep.subr.bf16.mxu0 0
      %530 = vmatpush1.bf16.msra.mxu0 0
      %531 = vmatprep.subr.bf16.mxu0 0
      %532 = vmatpush1.bf16.msra.mxu0 0
      %533 = vmatprep.subr.bf16.mxu0 0
      %534 = vmatpush1.bf16.msra.mxu0 0
      %535 = vmatprep.subr.bf16.mxu0 0
      %536 = vmatpush1.bf16.msra.mxu0 0
      %537 = vmatprep.subr.bf16.mxu0 0
      %538 = vmatpush1.bf16.msra.mxu0 0
      %539 = vmatprep.subr.bf16.mxu0 0
      %540 = vmatpush1.bf16.msra.mxu0 0
      %541 = vmatprep.subr.bf16.mxu0 0
      %542 = vmatpush1.bf16.msra.mxu0 0
      %543 = vmatprep.subr.bf16.mxu0 0
      %544 = vmatpush1.bf16.msra.mxu0 0
      %545 = vmatprep.mubr.bf16.mxu0 0
      %546 = vmatmul.mubr.bf16.gmra.mrb[0].mxu0 %v455
      %v547 = vpop.f32.mrb[0].mxu0
      %v548 = vadd.f32 %v495, %v547
      %v549 = vpop.f32.mrb[0].mxu0
      %v550 = vadd.f32 %v497, %v549
      %v551 = vpop.f32.mrb[0].mxu0
      %v552 = vadd.f32 %v499, %v551
      %v553 = vpop.f32.mrb[0].mxu0
      %v554 = vadd.f32 %v501, %v553
      %555 = vmatprep.mubr.bf16.mxu0 0
      %556 = vmatmul.mubr.bf16.gmra.mrb[0].mxu0 %v458
      %v557 = vpop.f32.mrb[0].mxu0
      %v558 = vadd.f32 %v505, %v557
      %v559 = vpop.f32.mrb[0].mxu0
      %v560 = vadd.f32 %v507, %v559
      %v561 = vpop.f32.mrb[0].mxu0
      %v562 = vadd.f32 %v509, %v561
      %v563 = vpop.f32.mrb[0].mxu0
      %v564 = vadd.f32 %v511, %v563
      %565 = vdwg.mxu0
      %v566 = vld [vmem:[%s2] sm:$0xff]
      %v567 = vld [vmem:[%s2 + $0x8] sm:$0xff]
      %v568 = vld [vmem:[%s2 + $0x10] sm:$0xff]
      %v569 = vld [vmem:[%s2 + $0x18] sm:$0xff]
      %571 = vset.pattern.permute.xlu0 0
      %572 = vperm.xlu0 %571, %v566
      %v573 = vpop.permute.xlu0 %572
      %576 = vset.pattern.permute.xlu0 0
      %577 = vperm.xlu0 %576, %v567
      %v578 = vpop.permute.xlu0 %577
      %581 = vset.pattern.permute.xlu0 0
      %582 = vperm.xlu0 %581, %v568
      %v583 = vpop.permute.xlu0 %582
      %586 = vset.pattern.permute.xlu0 0
      %587 = vperm.xlu0 %586, %v569
      %v588 = vpop.permute.xlu0 %587
      %v590 = vmul.f32 %v548, %v573
      %v591 = vmul.f32 %v550, %v573
      %v592 = vmul.f32 %v552, %v578
      %v593 = vmul.f32 %v554, %v578
      %v594 = vmul.f32 %v558, %v583
      %v595 = vmul.f32 %v560, %v583
      %v596 = vmul.f32 %v562, %v588
      %v597 = vmul.f32 %v564, %v588
      %v598 = vld [vmem:[%s3] sm:$0xff]
      %v599 = vld [vmem:[%s3 + $0x8] sm:$0xff]
      %v600 = vld [vmem:[%s3 + $0x10] sm:$0xff]
      %v601 = vld [vmem:[%s3 + $0x18] sm:$0xff]
      %603 = vset.pattern.permute.xlu0 0
      %604 = vperm.xlu0 %603, %v598
      %v605 = vpop.permute.xlu0 %604
      %608 = vset.pattern.permute.xlu0 0
      %609 = vperm.xlu0 %608, %v599
      %v610 = vpop.permute.xlu0 %609
      %613 = vset.pattern.permute.xlu0 0
      %614 = vperm.xlu0 %613, %v600
      %v615 = vpop.permute.xlu0 %614
      %618 = vset.pattern.permute.xlu0 0
      %619 = vperm.xlu0 %618, %v601
      %v620 = vpop.permute.xlu0 %619
      %v622 = vadd.f32 %v590, %v605
      %v623 = vadd.f32 %v591, %v605
      %v624 = vadd.f32 %v592, %v610
      %v625 = vadd.f32 %v593, %v610
      %v626 = vadd.f32 %v594, %v615
      %v627 = vadd.f32 %v595, %v615
      %v628 = vadd.f32 %v596, %v620
      %v629 = vadd.f32 %v597, %v620
      %v630 = vmax.f32 %v622, 0.0
      %v631 = vmax.f32 %v623, 0.0
      %v632 = vmax.f32 %v624, 0.0
      %v633 = vmax.f32 %v625, 0.0
      %v634 = vmax.f32 %v626, 0.0
      %v635 = vmax.f32 %v627, 0.0
      %v636 = vmax.f32 %v628, 0.0
      %v637 = vmax.f32 %v629, 0.0
      %v638 = vpack.c.bf16 %v632, %v630
      %v639 = vpack.c.bf16 %v633, %v631
      %v640 = vpack.c.bf16 %v636, %v634
      %v641 = vpack.c.bf16 %v637, %v635
      %v646 = vunpack.c.l.b16 %v638
      %v647 = vunpack.c.l.b16 %v639
      %v648 = vunpack.c.h.b16 %v638
      %v649 = vunpack.c.h.b16 %v639
      %v650 = vunpack.c.l.b16 %v640
      %v651 = vunpack.c.l.b16 %v641
      %v652 = vunpack.c.h.b16 %v640
      %v653 = vunpack.c.h.b16 %v641
      %v654 = vpack.c.b16 %v647, %v646
      %v655 = vpack.c.b16 %v649, %v648
      %v656 = vpack.c.b16 %v651, %v650
      %v657 = vpack.c.b16 %v653, %v652
      %662 = vst [vmem:[%s197] sm:$0xff] %v654
      %663 = vst [vmem:[%s197 + $0x8] sm:$0xff] %v655
      %664 = vst [vmem:[%s197 + $0x10] sm:$0xff] %v656
      %665 = vst [vmem:[%s197 + $0x18] sm:$0xff] %v657
      %p666 = scmp.lt.s32.totalorder %s15, 1
      %s667 = scalar_select %p666, %s15, 1
      %s668 = smul.addr %s667, 8
      %s669 = smul.addr %s668, 4
      %s670 = scalar_lea.vmem %s4, %s669
      // Predicated region
      $region37: #{ms_box_head_forward.4} parent=35 // pred_check
        %p671 = pneg %p122
      $region38: #{ms_box_head_forward.4} parent=35 // pred_check_branch
        %673 = sbr.rel (%p671) target = $region40
      $region39: #{ms_box_head_forward.4} parent=35 // pred_region
        _
      $region40: #{ms_box_head_forward.4} parent=35 // pred_fallthru
        _
    $region36: #{ms_box_head_forward.4} parent=5 // pred_fallthru
      _
    %p674 = scmp.le.s32.totalorder 2, %s10
    // Predicated region
    $region41: #{ms_box_head_forward.4} parent=5 // pred_check
      %p675 = pneg %p674
    $region42: #{ms_box_head_forward.4} parent=5 // pred_check_branch
      %677 = sbr.rel (%p675) target = $region44
    $region43: #{ms_box_head_forward.4} parent=5 // pred_region
      %s678 = ssub.s32 %s10, 2
      // Predicated region
      $region45: #{ms_box_head_forward.4} parent=43 // pred_check
        %p679 = pneg %p128
      $region46: #{ms_box_head_forward.4} parent=43 // pred_check_branch
        %681 = sbr.rel (%p679) target = $region48
      $region47: #{ms_box_head_forward.4} parent=43 // pred_region
        %p682 = scmp.lt.s32.totalorder %s16, 1
        %s683 = scalar_select %p682, %s16, 1
        %s684 = smul.addr %s683, 8
        %s685 = smul.addr %s684, 4
        %s686 = scalar_lea.vmem %s4, %s685
      $region48: #{ms_box_head_forward.4} parent=43 // pred_fallthru
        _
    $region44: #{ms_box_head_forward.4} parent=5 // pred_fallthru
      _
  $region6: #{ms_box_head_forward.4} parent=0 // loop_footer
    %s14 = sadd.s32 1, %s10
  $region7: #{ms_box_head_forward.4} parent=0 // loop_footer_branch
    %9 = sbr.rel target = $region3
  $region8: #{ms_box_head_forward.4} parent=0 // loop_exit
    _

// kernel: ms_box_head_forward.5
$region0: #{ms_box_head_forward.5}
  #allocation0 [shape = 'u32[]', space=smem, size = 0x4, offset = 0x4, fixed_abs, tag = 'smem constant byte address 0x4 - core index']
  #allocation1 [shape = 'u32[144,128]{1,0:T(1,128)}', space=vmem, size = 0x12000, scoped, tag = 'internal scratch']
  %s0 = inlined_call_operand.vmem [shape: bf16[2,256,288], index: 0, kind: input, shape index: {}]
  %s1 = inlined_call_operand.vmem [shape: bf16[288,2048], index: 1, kind: input, shape index: {}]
  %s2 = inlined_call_operand.vmem [shape: f32[1,2048], index: 2, kind: input, shape index: {}]
  %s3 = inlined_call_operand.hbm [shape: f32[2,1,2048], index: 3, kind: output, shape index: {}]
  %s4 = sld [smem:[#allocation0]]
  $region68: #{ms_box_head_forward.5} parent=0
    _
  %s6 = ssub.s32 1, %s4
  %s7 = scalar_select 0, %s6, %s4
  $region1: #{ms_box_head_forward.5} parent=0
    #allocation2 [shape = 'u8[1179648]{0}', space=vmem, size = 0x120000, scoped, tag = 'input window, operand 1']
    #allocation3 [shape = 'u8[8192]{0}', space=vmem, size = 0x2000, scoped, tag = 'output window, operand 0']
    #allocation4 [shape = 's32[2]{0}', space=sflag, size = 0x8, scoped, tag = 'scoped memory for ms_box_head_forward.5']
    %8 = vsyncpa [#allocation4], 0
    %s9 = scalar_lea.sflag [#allocation4], 1
    %10 = vsyncpa %s9, 0
    loop: start=0, step=1, limit=6
    $region2: #{ms_box_head_forward.5} parent=1 // loop_pre_header
      _
    $region3: #{ms_box_head_forward.5} parent=1 // loop_header
      %s12 = sphi 0, %s16
      %p13 = scmp.ge.s32.totalorder %s12, 6
      %s19 = sphi 0, %s31
      %s20 = sphi 0, %s27
      %s21 = sphi 0, %s19
      %s22 = sphi 0, %s20
      %s23 = sphi 0, %s21
      %s24 = sphi 0, %s22
      %s34 = sphi 0, %s36
      %s37 = sphi 0, %s34
      %s38 = sphi 0, %s37
      %s54 = sphi 0, %s38
      %s60 = sphi 0, %s62
      %s63 = sphi 0, %s60
      %s64 = sphi 0, %s63
      %s80 = sphi 0, %s64
      %s86 = sphi 0, %s88
      %s89 = sphi 0, %s86
      %s90 = sphi 0, %s89
      %s106 = sphi 0, %s90
      %s114 = sphi 0, %s116
      %s117 = sphi 0, %s114
      %s118 = sphi 0, %s117
      %s134 = sphi 0, %s118
    $region4: #{ms_box_head_forward.5} parent=1 // loop_header_branch
      %15 = sbr.rel (%p13) target = $region8
    $region5: #{ms_box_head_forward.5} parent=1 // loop_body
      %s17 = ssub.s32 %s12, 1
      %s18 = ssub.s32 %s12, 2
      %s25 = sadd.s32 1, %s20
      %p26 = scmp.ge.s32.totalorder %s25, 2
      %s27 = scalar_select %p26, 0, %s25
      %s28 = sadd.s32 1, %s19
      %s29 = scalar_select %p26, %s28, %s19
      %p30 = scmp.ge.s32.totalorder %s29, 2
      %s31 = scalar_select %p30, 0, %s29
      %s32 = ssub.s32 %s19, %s31
      %p33 = scmp.eq.s32.totalorder %s32, 0
      %s35 = sadd.s32 %s34, 1
      %s36 = scalar_select %p33, %s34, %s35
      %p39 = pneg %p33
      %p40 = scmp.eq.s32.totalorder %s12, 3
      %p41 = por %p39, %p40
      %p42 = scmp.ne.s32.totalorder %s34, %s37
      %p43 = scmp.eq.s32.totalorder %s12, 0
      %p44 = por %p42, %p43
      %p45 = scmp.ne.s32.totalorder %s34, %s37
      %p46 = scmp.eq.s32.totalorder %s17, 3
      %p47 = por %p45, %p46
      %p48 = scmp.ne.s32.totalorder %s37, %s38
      %p49 = scmp.eq.s32.totalorder %s17, 0
      %p50 = por %p48, %p49
      %p51 = scmp.ne.s32.totalorder %s37, %s38
      %p52 = scmp.eq.s32.totalorder %s18, 3
      %p53 = por %p51, %p52
      %p55 = scmp.ne.s32.totalorder %s38, %s54
      %p56 = scmp.eq.s32.totalorder %s18, 0
      %p57 = por %p55, %p56
      %s58 = ssub.s32 %s20, %s27
      %p59 = scmp.eq.s32.totalorder %s58, 0
      %s61 = sadd.s32 %s60, 1
      %s62 = scalar_select %p59, %s60, %s61
      %p65 = pneg %p59
      %p66 = scmp.eq.s32.totalorder %s12, 3
      %p67 = por %p65, %p66
      %p68 = scmp.ne.s32.totalorder %s60, %s63
      %p69 = scmp.eq.s32.totalorder %s12, 0
      %p70 = por %p68, %p69
      %p71 = scmp.ne.s32.totalorder %s60, %s63
      %p72 = scmp.eq.s32.totalorder %s17, 3
      %p73 = por %p71, %p72
      %p74 = scmp.ne.s32.totalorder %s63, %s64
      %p75 = scmp.eq.s32.totalorder %s17, 0
      %p76 = por %p74, %p75
      %p77 = scmp.ne.s32.totalorder %s63, %s64
      %p78 = scmp.eq.s32.totalorder %s18, 3
      %p79 = por %p77, %p78
      %p81 = scmp.ne.s32.totalorder %s64, %s80
      %p82 = scmp.eq.s32.totalorder %s18, 0
      %p83 = por %p81, %p82
      %s84 = ssub.s32 %s20, %s27
      %p85 = scmp.eq.s32.totalorder %s84, 0
      %s87 = sadd.s32 %s86, 1
      %s88 = scalar_select %p85, %s86, %s87
      %p91 = pneg %p85
      %p92 = scmp.eq.s32.totalorder %s12, 3
      %p93 = por %p91, %p92
      %p94 = scmp.ne.s32.totalorder %s86, %s89
      %p95 = scmp.eq.s32.totalorder %s12, 0
      %p96 = por %p94, %p95
      %p97 = scmp.ne.s32.totalorder %s86, %s89
      %p98 = scmp.eq.s32.totalorder %s17, 3
      %p99 = por %p97, %p98
      %p100 = scmp.ne.s32.totalorder %s89, %s90
      %p101 = scmp.eq.s32.totalorder %s17, 0
      %p102 = por %p100, %p101
      %p103 = scmp.ne.s32.totalorder %s89, %s90
      %p104 = scmp.eq.s32.totalorder %s18, 3
      %p105 = por %p103, %p104
      %p107 = scmp.ne.s32.totalorder %s90, %s106
      %p108 = scmp.eq.s32.totalorder %s18, 0
      %p109 = por %p107, %p108
      %s110 = ssub.s32 %s19, %s31
      %s111 = ssub.s32 %s20, %s27
      %s112 = sor.u32 %s110, %s111
      %p113 = scmp.eq.s32.totalorder %s112, 0
      %s115 = sadd.s32 %s114, 1
      %s116 = scalar_select %p113, %s114, %s115
      %p119 = pneg %p113
      %p120 = scmp.eq.s32.totalorder %s12, 3
      %p121 = por %p119, %p120
      %p122 = scmp.ne.s32.totalorder %s114, %s117
      %p123 = scmp.eq.s32.totalorder %s12, 0
      %p124 = por %p122, %p123
      %p125 = scmp.ne.s32.totalorder %s114, %s117
      %p126 = scmp.eq.s32.totalorder %s17, 3
      %p127 = por %p125, %p126
      %p128 = scmp.ne.s32.totalorder %s117, %s118
      %p129 = scmp.eq.s32.totalorder %s17, 0
      %p130 = por %p128, %p129
      %p131 = scmp.ne.s32.totalorder %s117, %s118
      %p132 = scmp.eq.s32.totalorder %s18, 3
      %p133 = por %p131, %p132
      %p135 = scmp.ne.s32.totalorder %s118, %s134
      %p136 = scmp.eq.s32.totalorder %s18, 0
      %p137 = por %p135, %p136
      %p138 = scmp.le.s32.totalorder 1, %s12
      %p139 = scmp.lt.s32.totalorder %s12, 5
      %p140 = pnand %p138, %p139
      %p141 = pneg %p140
      // Predicated region
      $region9: #{ms_box_head_forward.5} parent=5 // pred_check
        _
      $region10: #{ms_box_head_forward.5} parent=5 // pred_check_branch
        %143 = sbr.rel (%p140) target = $region12
      $region11: #{ms_box_head_forward.5} parent=5 // pred_region
        %s144 = ssub.s32 %s12, 1
      $region12: #{ms_box_head_forward.5} parent=5 // pred_fallthru
        _
      %p145 = scmp.lt.s32.totalorder %s12, 4
      // Predicated region
      $region13: #{ms_box_head_forward.5} parent=5 // pred_check
        %p146 = pneg %p145
      $region14: #{ms_box_head_forward.5} parent=5 // pred_check_branch
        %148 = sbr.rel (%p146) target = $region16
      $region15: #{ms_box_head_forward.5} parent=5 // pred_region
        // Predicated region
        $region17: #{ms_box_head_forward.5} parent=15 // pred_check
          %p149 = pneg %p44
        $region18: #{ms_box_head_forward.5} parent=15 // pred_check_branch
          %151 = sbr.rel (%p149) target = $region20
        $region19: #{ms_box_head_forward.5} parent=15 // pred_region
          %p152 = scmp.lt.s32.totalorder %s19, 1
          %s153 = scalar_select %p152, %s19, 1
          %s154 = smul.addr %s153, 96
          %s155 = smul.addr %s154, 4
          %s156 = scalar_lea.vmem %s0, %s155
        $region20: #{ms_box_head_forward.5} parent=15 // pred_fallthru
          _
        // Predicated region
        $region21: #{ms_box_head_forward.5} parent=15 // pred_check
          %p157 = pneg %p70
        $region22: #{ms_box_head_forward.5} parent=15 // pred_check_branch
          %159 = sbr.rel (%p157) target = $region24
        $region23: #{ms_box_head_forward.5} parent=15 // pred_region
          %s160 = sand.u32 %s60, 1
          %s161 = sand.u32 %s60, 1
          %s162 = smul.addr %s161, 1152
          %s163 = scalar_lea.vmem [#allocation2], %s162
          %s164 = smul.u32 8, %s20
          %s165 = smul.addr %s164, 4
          %s166 = scalar_lea.vmem %s1, %s165
          // Predicated region
          $region25: #{ms_box_head_forward.5} parent=23 // pred_check
            _
          $region26: #{ms_box_head_forward.5} parent=23 // pred_check_branch
            %168 = sbr.rel (0) target = $region28
          $region27: #{ms_box_head_forward.5} parent=23 // pred_region
            // Predicated region
            $region29: #{ms_box_head_forward.5} parent=27 // pred_check
              _
            $region30: #{ms_box_head_forward.5} parent=27 // pred_check_branch
              %170 = sbr.rel (0) target = $region32
            $region31: #{ms_box_head_forward.5} parent=27 // pred_region
              loop: start=0, step=1, limit=1
              $region33: #{ms_box_head_forward.5} parent=31 // loop_pre_header
                _
              $region34: #{ms_box_head_forward.5} parent=31 // loop_header
                %s172 = sphi 0, %s176
                %p173 = scmp.ge.s32.totalorder %s172, 1
                %s177 = sphi %s166, %s166
                %s178 = sphi %s163, %s163
              $region35: #{ms_box_head_forward.5} parent=31 // loop_header_branch
                %175 = sbr.rel (%p173) target = $region39
              $region36: #{ms_box_head_forward.5} parent=31 // loop_body
                %v179 = vld [vmem:[%s177] sm:$0xff]
                %180 = vst [vmem:[%s178] sm:$0xff] %v179
                %v181 = vld [vmem:[%s177 + $0x8] sm:$0xff]
                %182 = vst [vmem:[%s178 + $0x8] sm:$0xff] %v181
                %v183 = vld [vmem:[%s177 + $0x10] sm:$0xff]
                %184 = vst [vmem:[%s178 + $0x10] sm:$0xff] %v183
                %v185 = vld [vmem:[%s177 + $0x18] sm:$0xff]
                %186 = vst [vmem:[%s178 + $0x18] sm:$0xff] %v185
                %v187 = vld [vmem:[%s177 + $0x40] sm:$0xff]
                %188 = vst [vmem:[%s178 + $0x20] sm:$0xff] %v187
                %v189 = vld [vmem:[%s177 + $0x48] sm:$0xff]
                %190 = vst [vmem:[%s178 + $0x28] sm:$0xff] %v189
                %v191 = vld [vmem:[%s177 + $0x50] sm:$0xff]
                %192 = vst [vmem:[%s178 + $0x30] sm:$0xff] %v191
                %v193 = vld [vmem:[%s177 + $0x58] sm:$0xff]
                %194 = vst [vmem:[%s178 + $0x38] sm:$0xff] %v193
                %v195 = vld [vmem:[%s177 + $0x80] sm:$0xff]
                %196 = vst [vmem:[%s178 + $0x40] sm:$0xff] %v195
                %v197 = vld [vmem:[%s177 + $0x88] sm:$0xff]
                %198 = vst [vmem:[%s178 + $0x48] sm:$0xff] %v197
                %v199 = vld [vmem:[%s177 + $0x90] sm:$0xff]
                %200 = vst [vmem:[%s178 + $0x50] sm:$0xff] %v199
                %v201 = vld [vmem:[%s177 + $0x98] sm:$0xff]
                %202 = vst [vmem:[%s178 + $0x58] sm:$0xff] %v201
                %v203 = vld [vmem:[%s177 + $0xc0] sm:$0xff]
                %204 = vst [vmem:[%s178 + $0x60] sm:$0xff] %v203
                %v205 = vld [vmem:[%s177 + $0xc8] sm:$0xff]
                %206 = vst [vmem:[%s178 + $0x68] sm:$0xff] %v205
                %v207 = vld [vmem:[%s177 + $0xd0] sm:$0xff]
                %208 = vst [vmem:[%s178 + $0x70] sm:$0xff] %v207
                %v209 = vld [vmem:[%s177 + $0xd8] sm:$0xff]
                %210 = vst [vmem:[%s178 + $0x78] sm:$0xff] %v209
                %v211 = vld [vmem:[%s177 + $0x100] sm:$0xff]
                %212 = vst [vmem:[%s178 + $0x80] sm:$0xff] %v211
                %v213 = vld [vmem:[%s177 + $0x108] sm:$0xff]
                %214 = vst [vmem:[%s178 + $0x88] sm:$0xff] %v213
                %v215 = vld [vmem:[%s177 + $0x110] sm:$0xff]
                %216 = vst [vmem:[%s178 + $0x90] sm:$0xff] %v215
                %v217 = vld [vmem:[%s177 + $0x118] sm:$0xff]
                %218 = vst [vmem:[%s178 + $0x98] sm:$0xff] %v217
                %v219 = vld [vmem:[%s177 + $0x140] sm:$0xff]
                %220 = vst [vmem:[%s178 + $0xa0] sm:$0xff] %v219
                %v221 = vld [vmem:[%s177 + $0x148] sm:$0xff]
                %222 = vst [vmem:[%s178 + $0xa8] sm:$0xff] %v221
                %v223 = vld [vmem:[%s177 + $0x150] sm:$0xff]
                %224 = vst [vmem:[%s178 + $0xb0] sm:$0xff] %v223
                %v225 = vld [vmem:[%s177 + $0x158] sm:$0xff]
                %226 = vst [vmem:[%s178 + $0xb8] sm:$0xff] %v225
                %v227 = vld [vmem:[%s177 + $0x180] sm:$0xff]
                %228 = vst [vmem:[%s178 + $0xc0] sm:$0xff] %v227
                %v229 = vld [vmem:[%s177 + $0x188] sm:$0xff]
                %230 = vst [vmem:[%s178 + $0xc8] sm:$0xff] %v229
                %v231 = vld [vmem:[%s177 + $0x190] sm:$0xff]
                %232 = vst [vmem:[%s178 + $0xd0] sm:$0xff] %v231
                %v233 = vld [vmem:[%s177 + $0x198] sm:$0xff]
                %234 = vst [vmem:[%s178 + $0xd8] sm:$0xff] %v233
                %v235 = vld [vmem:[%s177 + $0x1c0] sm:$0xff]
                %236 = vst [vmem:[%s178 + $0xe0] sm:$0xff] %v235
                %v237 = vld [vmem:[%s177 + $0x1c8] sm:$0xff]
                %238 = vst [vmem:[%s178 + $0xe8] sm:$0xff] %v237
                %v239 = vld [vmem:[%s177 + $0x1d0] sm:$0xff]
                %240 = vst [vmem:[%s178 + $0xf0] sm:$0xff] %v239
                %v241 = vld [vmem:[%s177 + $0x1d8] sm:$0xff]
                %242 = vst [vmem:[%s178 + $0xf8] sm:$0xff] %v241
                %v243 = vld [vmem:[%s177 + $0x200] sm:$0xff]
                %244 = vst [vmem:[%s178 + $0x100] sm:$0xff] %v243
                %v245 = vld [vmem:[%s177 + $0x208] sm:$0xff]
                %246 = vst [vmem:[%s178 + $0x108] sm:$0xff] %v245
                %v247 = vld [vmem:[%s177 + $0x210] sm:$0xff]
                %248 = vst [vmem:[%s178 + $0x110] sm:$0xff] %v247
                %v249 = vld [vmem:[%s177 + $0x218] sm:$0xff]
                %250 = vst [vmem:[%s178 + $0x118] sm:$0xff] %v249
                %v251 = vld [vmem:[%s177 + $0x240] sm:$0xff]
                %252 = vst [vmem:[%s178 + $0x120] sm:$0xff] %v251
                %v253 = vld [vmem:[%s177 + $0x248] sm:$0xff]
                %254 = vst [vmem:[%s178 + $0x128] sm:$0xff] %v253
                %v255 = vld [vmem:[%s177 + $0x250] sm:$0xff]
                %256 = vst [vmem:[%s178 + $0x130] sm:$0xff] %v255
                %v257 = vld [vmem:[%s177 + $0x258] sm:$0xff]
                %258 = vst [vmem:[%s178 + $0x138] sm:$0xff] %v257
                %v259 = vld [vmem:[%s177 + $0x280] sm:$0xff]
                %260 = vst [vmem:[%s178 + $0x140] sm:$0xff] %v259
                %v261 = vld [vmem:[%s177 + $0x288] sm:$0xff]
                %262 = vst [vmem:[%s178 + $0x148] sm:$0xff] %v261
                %v263 = vld [vmem:[%s177 + $0x290] sm:$0xff]
                %264 = vst [vmem:[%s178 + $0x150] sm:$0xff] %v263
                %v265 = vld [vmem:[%s177 + $0x298] sm:$0xff]
                %266 = vst [vmem:[%s178 + $0x158] sm:$0xff] %v265
                %v267 = vld [vmem:[%s177 + $0x2c0] sm:$0xff]
                %268 = vst [vmem:[%s178 + $0x160] sm:$0xff] %v267
                %v269 = vld [vmem:[%s177 + $0x2c8] sm:$0xff]
                %270 = vst [vmem:[%s178 + $0x168] sm:$0xff] %v269
                %v271 = vld [vmem:[%s177 + $0x2d0] sm:$0xff]
                %272 = vst [vmem:[%s178 + $0x170] sm:$0xff] %v271
                %v273 = vld [vmem:[%s177 + $0x2d8] sm:$0xff]
                %274 = vst [vmem:[%s178 + $0x178] sm:$0xff] %v273
                %v275 = vld [vmem:[%s177 + $0x300] sm:$0xff]
                %276 = vst [vmem:[%s178 + $0x180] sm:$0xff] %v275
                %v277 = vld [vmem:[%s177 + $0x308] sm:$0xff]
                %278 = vst [vmem:[%s178 + $0x188] sm:$0xff] %v277
                %v279 = vld [vmem:[%s177 + $0x310] sm:$0xff]
                %280 = vst [vmem:[%s178 + $0x190] sm:$0xff] %v279
                %v281 = vld [vmem:[%s177 + $0x318] sm:$0xff]
                %282 = vst [vmem:[%s178 + $0x198] sm:$0xff] %v281
                %v283 = vld [vmem:[%s177 + $0x340] sm:$0xff]
                %284 = vst [vmem:[%s178 + $0x1a0] sm:$0xff] %v283
                %v285 = vld [vmem:[%s177 + $0x348] sm:$0xff]
                %286 = vst [vmem:[%s178 + $0x1a8] sm:$0xff] %v285
                %v287 = vld [vmem:[%s177 + $0x350] sm:$0xff]
                %288 = vst [vmem:[%s178 + $0x1b0] sm:$0xff] %v287
                %v289 = vld [vmem:[%s177 + $0x358] sm:$0xff]
                %290 = vst [vmem:[%s178 + $0x1b8] sm:$0xff] %v289
                %v291 = vld [vmem:[%s177 + $0x380] sm:$0xff]
                %292 = vst [vmem:[%s178 + $0x1c0] sm:$0xff] %v291
                %v293 = vld [vmem:[%s177 + $0x388] sm:$0xff]
                %294 = vst [vmem:[%s178 + $0x1c8] sm:$0xff] %v293
                %v295 = vld [vmem:[%s177 + $0x390] sm:$0xff]
                %296 = vst [vmem:[%s178 + $0x1d0] sm:$0xff] %v295
                %v297 = vld [vmem:[%s177 + $0x398] sm:$0xff]
                %298 = vst [vmem:[%s178 + $0x1d8] sm:$0xff] %v297
                %v299 = vld [vmem:[%s177 + $0x3c0] sm:$0xff]
                %300 = vst [vmem:[%s178 + $0x1e0] sm:$0xff] %v299
                %v301 = vld [vmem:[%s177 + $0x3c8] sm:$0xff]
                %302 = vst [vmem:[%s178 + $0x1e8] sm:$0xff] %v301
                %v303 = vld [vmem:[%s177 + $0x3d0] sm:$0xff]
                %304 = vst [vmem:[%s178 + $0x1f0] sm:$0xff] %v303
                %v305 = vld [vmem:[%s177 + $0x3d8] sm:$0xff]
                %306 = vst [vmem:[%s178 + $0x1f8] sm:$0xff] %v305
                %v307 = vld [vmem:[%s177 + $0x400] sm:$0xff]
                %308 = vst [vmem:[%s178 + $0x200] sm:$0xff] %v307
                %v309 = vld [vmem:[%s177 + $0x408] sm:$0xff]
                %310 = vst [vmem:[%s178 + $0x208] sm:$0xff] %v309
                %v311 = vld [vmem:[%s177 + $0x410] sm:$0xff]
                %312 = vst [vmem:[%s178 + $0x210] sm:$0xff] %v311
                %v313 = vld [vmem:[%s177 + $0x418] sm:$0xff]
                %314 = vst [vmem:[%s178 + $0x218] sm:$0xff] %v313
                %v315 = vld [vmem:[%s177 + $0x440] sm:$0xff]
                %316 = vst [vmem:[%s178 + $0x220] sm:$0xff] %v315
                %v317 = vld [vmem:[%s177 + $0x448] sm:$0xff]
                %318 = vst [vmem:[%s178 + $0x228] sm:$0xff] %v317
                %v319 = vld [vmem:[%s177 + $0x450] sm:$0xff]
                %320 = vst [vmem:[%s178 + $0x230] sm:$0xff] %v319
                %v321 = vld [vmem:[%s177 + $0x458] sm:$0xff]
                %322 = vst [vmem:[%s178 + $0x238] sm:$0xff] %v321
                %v323 = vld [vmem:[%s177 + $0x480] sm:$0xff]
                %324 = vst [vmem:[%s178 + $0x240] sm:$0xff] %v323
                %v325 = vld [vmem:[%s177 + $0x488] sm:$0xff]
                %326 = vst [vmem:[%s178 + $0x248] sm:$0xff] %v325
                %v327 = vld [vmem:[%s177 + $0x490] sm:$0xff]
                %328 = vst [vmem:[%s178 + $0x250] sm:$0xff] %v327
                %v329 = vld [vmem:[%s177 + $0x498] sm:$0xff]
                %330 = vst [vmem:[%s178 + $0x258] sm:$0xff] %v329
                %v331 = vld [vmem:[%s177 + $0x4c0] sm:$0xff]
                %332 = vst [vmem:[%s178 + $0x260] sm:$0xff] %v331
                %v333 = vld [vmem:[%s177 + $0x4c8] sm:$0xff]
                %334 = vst [vmem:[%s178 + $0x268] sm:$0xff] %v333
                %v335 = vld [vmem:[%s177 + $0x4d0] sm:$0xff]
                %336 = vst [vmem:[%s178 + $0x270] sm:$0xff] %v335
                %v337 = vld [vmem:[%s177 + $0x4d8] sm:$0xff]
                %338 = vst [vmem:[%s178 + $0x278] sm:$0xff] %v337
                %v339 = vld [vmem:[%s177 + $0x500] sm:$0xff]
                %340 = vst [vmem:[%s178 + $0x280] sm:$0xff] %v339
                %v341 = vld [vmem:[%s177 + $0x508] sm:$0xff]
                %342 = vst [vmem:[%s178 + $0x288] sm:$0xff] %v341
                %v343 = vld [vmem:[%s177 + $0x510] sm:$0xff]
                %344 = vst [vmem:[%s178 + $0x290] sm:$0xff] %v343
                %v345 = vld [vmem:[%s177 + $0x518] sm:$0xff]
                %346 = vst [vmem:[%s178 + $0x298] sm:$0xff] %v345
                %v347 = vld [vmem:[%s177 + $0x540] sm:$0xff]
                %348 = vst [vmem:[%s178 + $0x2a0] sm:$0xff] %v347
                %v349 = vld [vmem:[%s177 + $0x548] sm:$0xff]
                %350 = vst [vmem:[%s178 + $0x2a8] sm:$0xff] %v349
                %v351 = vld [vmem:[%s177 + $0x550] sm:$0xff]
                %352 = vst [vmem:[%s178 + $0x2b0] sm:$0xff] %v351
                %v353 = vld [vmem:[%s177 + $0x558] sm:$0xff]
                %354 = vst [vmem:[%s178 + $0x2b8] sm:$0xff] %v353
                %v355 = vld [vmem:[%s177 + $0x580] sm:$0xff]
                %356 = vst [vmem:[%s178 + $0x2c0] sm:$0xff] %v355
                %v357 = vld [vmem:[%s177 + $0x588] sm:$0xff]
                %358 = vst [vmem:[%s178 + $0x2c8] sm:$0xff] %v357
                %v359 = vld [vmem:[%s177 + $0x590] sm:$0xff]
                %360 = vst [vmem:[%s178 + $0x2d0] sm:$0xff] %v359
                %v361 = vld [vmem:[%s177 + $0x598] sm:$0xff]
                %362 = vst [vmem:[%s178 + $0x2d8] sm:$0xff] %v361
                %v363 = vld [vmem:[%s177 + $0x5c0] sm:$0xff]
                %364 = vst [vmem:[%s178 + $0x2e0] sm:$0xff] %v363
                %v365 = vld [vmem:[%s177 + $0x5c8] sm:$0xff]
                %366 = vst [vmem:[%s178 + $0x2e8] sm:$0xff] %v365
                %v367 = vld [vmem:[%s177 + $0x5d0] sm:$0xff]
                %368 = vst [vmem:[%s178 + $0x2f0] sm:$0xff] %v367
                %v369 = vld [vmem:[%s177 + $0x5d8] sm:$0xff]
                %370 = vst [vmem:[%s178 + $0x2f8] sm:$0xff] %v369
                %v371 = vld [vmem:[%s177 + $0x600] sm:$0xff]
                %372 = vst [vmem:[%s178 + $0x300] sm:$0xff] %v371
                %v373 = vld [vmem:[%s177 + $0x608] sm:$0xff]
                %374 = vst [vmem:[%s178 + $0x308] sm:$0xff] %v373
                %v375 = vld [vmem:[%s177 + $0x610] sm:$0xff]
                %376 = vst [vmem:[%s178 + $0x310] sm:$0xff] %v375
                %v377 = vld [vmem:[%s177 + $0x618] sm:$0xff]
                %378 = vst [vmem:[%s178 + $0x318] sm:$0xff] %v377
                %v379 = vld [vmem:[%s177 + $0x640] sm:$0xff]
                %380 = vst [vmem:[%s178 + $0x320] sm:$0xff] %v379
                %v381 = vld [vmem:[%s177 + $0x648] sm:$0xff]
                %382 = vst [vmem:[%s178 + $0x328] sm:$0xff] %v381
                %v383 = vld [vmem:[%s177 + $0x650] sm:$0xff]
                %384 = vst [vmem:[%s178 + $0x330] sm:$0xff] %v383
                %v385 = vld [vmem:[%s177 + $0x658] sm:$0xff]
                %386 = vst [vmem:[%s178 + $0x338] sm:$0xff] %v385
                %v387 = vld [vmem:[%s177 + $0x680] sm:$0xff]
                %388 = vst [vmem:[%s178 + $0x340] sm:$0xff] %v387
                %v389 = vld [vmem:[%s177 + $0x688] sm:$0xff]
                %390 = vst [vmem:[%s178 + $0x348] sm:$0xff] %v389
                %v391 = vld [vmem:[%s177 + $0x690] sm:$0xff]
                %392 = vst [vmem:[%s178 + $0x350] sm:$0xff] %v391
                %v393 = vld [vmem:[%s177 + $0x698] sm:$0xff]
                %394 = vst [vmem:[%s178 + $0x358] sm:$0xff] %v393
                %v395 = vld [vmem:[%s177 + $0x6c0] sm:$0xff]
                %396 = vst [vmem:[%s178 + $0x360] sm:$0xff] %v395
                %v397 = vld [vmem:[%s177 + $0x6c8] sm:$0xff]
                %398 = vst [vmem:[%s178 + $0x368] sm:$0xff] %v397
                %v399 = vld [vmem:[%s177 + $0x6d0] sm:$0xff]
                %400 = vst [vmem:[%s178 + $0x370] sm:$0xff] %v399
                %v401 = vld [vmem:[%s177 + $0x6d8] sm:$0xff]
                %402 = vst [vmem:[%s178 + $0x378] sm:$0xff] %v401
                %v403 = vld [vmem:[%s177 + $0x700] sm:$0xff]
                %404 = vst [vmem:[%s178 + $0x380] sm:$0xff] %v403
                %v405 = vld [vmem:[%s177 + $0x708] sm:$0xff]
                %406 = vst [vmem:[%s178 + $0x388] sm:$0xff] %v405
                %v407 = vld [vmem:[%s177 + $0x710] sm:$0xff]
                %408 = vst [vmem:[%s178 + $0x390] sm:$0xff] %v407
                %v409 = vld [vmem:[%s177 + $0x718] sm:$0xff]
                %410 = vst [vmem:[%s178 + $0x398] sm:$0xff] %v409
                %v411 = vld [vmem:[%s177 + $0x740] sm:$0xff]
                %412 = vst [vmem:[%s178 + $0x3a0] sm:$0xff] %v411
                %v413 = vld [vmem:[%s177 + $0x748] sm:$0xff]
                %414 = vst [vmem:[%s178 + $0x3a8] sm:$0xff] %v413
                %v415 = vld [vmem:[%s177 + $0x750] sm:$0xff]
                %416 = vst [vmem:[%s178 + $0x3b0] sm:$0xff] %v415
                %v417 = vld [vmem:[%s177 + $0x758] sm:$0xff]
                %418 = vst [vmem:[%s178 + $0x3b8] sm:$0xff] %v417
                %v419 = vld [vmem:[%s177 + $0x780] sm:$0xff]
                %420 = vst [vmem:[%s178 + $0x3c0] sm:$0xff] %v419
                %v421 = vld [vmem:[%s177 + $0x788] sm:$0xff]
                %422 = vst [vmem:[%s178 + $0x3c8] sm:$0xff] %v421
                %v423 = vld [vmem:[%s177 + $0x790] sm:$0xff]
                %424 = vst [vmem:[%s178 + $0x3d0] sm:$0xff] %v423
                %v425 = vld [vmem:[%s177 + $0x798] sm:$0xff]
                %426 = vst [vmem:[%s178 + $0x3d8] sm:$0xff] %v425
                %v427 = vld [vmem:[%s177 + $0x7c0] sm:$0xff]
                %428 = vst [vmem:[%s178 + $0x3e0] sm:$0xff] %v427
                %v429 = vld [vmem:[%s177 + $0x7c8] sm:$0xff]
                %430 = vst [vmem:[%s178 + $0x3e8] sm:$0xff] %v429
                %v431 = vld [vmem:[%s177 + $0x7d0] sm:$0xff]
                %432 = vst [vmem:[%s178 + $0x3f0] sm:$0xff] %v431
                %v433 = vld [vmem:[%s177 + $0x7d8] sm:$0xff]
                %434 = vst [vmem:[%s178 + $0x3f8] sm:$0xff] %v433
                %v435 = vld [vmem:[%s177 + $0x800] sm:$0xff]
                %436 = vst [vmem:[%s178 + $0x400] sm:$0xff] %v435
                %v437 = vld [vmem:[%s177 + $0x808] sm:$0xff]
                %438 = vst [vmem:[%s178 + $0x408] sm:$0xff] %v437
                %v439 = vld [vmem:[%s177 + $0x810] sm:$0xff]
                %440 = vst [vmem:[%s178 + $0x410] sm:$0xff] %v439
                %v441 = vld [vmem:[%s177 + $0x818] sm:$0xff]
                %442 = vst [vmem:[%s178 + $0x418] sm:$0xff] %v441
                %v443 = vld [vmem:[%s177 + $0x840] sm:$0xff]
                %444 = vst [vmem:[%s178 + $0x420] sm:$0xff] %v443
                %v445 = vld [vmem:[%s177 + $0x848] sm:$0xff]
                %446 = vst [vmem:[%s178 + $0x428] sm:$0xff] %v445
                %v447 = vld [vmem:[%s177 + $0x850] sm:$0xff]
                %448 = vst [vmem:[%s178 + $0x430] sm:$0xff] %v447
                %v449 = vld [vmem:[%s177 + $0x858] sm:$0xff]
                %450 = vst [vmem:[%s178 + $0x438] sm:$0xff] %v449
                %v451 = vld [vmem:[%s177 + $0x880] sm:$0xff]
                %452 = vst [vmem:[%s178 + $0x440] sm:$0xff] %v451
                %v453 = vld [vmem:[%s177 + $0x888] sm:$0xff]
                %454 = vst [vmem:[%s178 + $0x448] sm:$0xff] %v453
                %v455 = vld [vmem:[%s177 + $0x890] sm:$0xff]
                %456 = vst [vmem:[%s178 + $0x450] sm:$0xff] %v455
                %v457 = vld [vmem:[%s177 + $0x898] sm:$0xff]
                %458 = vst [vmem:[%s178 + $0x458] sm:$0xff] %v457
                %v459 = vld [vmem:[%s177 + $0x8c0] sm:$0xff]
                %460 = vst [vmem:[%s178 + $0x460] sm:$0xff] %v459
                %v461 = vld [vmem:[%s177 + $0x8c8] sm:$0xff]
                %462 = vst [vmem:[%s178 + $0x468] sm:$0xff] %v461
                %v463 = vld [vmem:[%s177 + $0x8d0] sm:$0xff]
                %464 = vst [vmem:[%s178 + $0x470] sm:$0xff] %v463
                %v465 = vld [vmem:[%s177 + $0x8d8] sm:$0xff]
                %466 = vst [vmem:[%s178 + $0x478] sm:$0xff] %v465
              $region37: #{ms_box_head_forward.5} parent=31 // loop_footer
                %s176 = sadd.s32 1, %s172
              $region38: #{ms_box_head_forward.5} parent=31 // loop_footer_branch
                %171 = sbr.rel target = $region34
              $region39: #{ms_box_head_forward.5} parent=31 // loop_exit
                _
            $region32: #{ms_box_head_forward.5} parent=27 // pred_fallthru
              _
            // Predicated region
            $region40: #{ms_box_head_forward.5} parent=27 // pred_check
              _
            $region41: #{ms_box_head_forward.5} parent=27 // pred_check_branch
              %468 = sbr.rel target = $region43
            $region42: #{ms_box_head_forward.5} parent=27 // pred_region
              _
            $region43: #{ms_box_head_forward.5} parent=27 // pred_fallthru
              _
          $region28: #{ms_box_head_forward.5} parent=23 // pred_fallthru
            _
          %469 = vnop
        $region24: #{ms_box_head_forward.5} parent=15 // pred_fallthru
          _
        // Predicated region
        $region44: #{ms_box_head_forward.5} parent=15 // pred_check
          %p470 = pneg %p96
        $region45: #{ms_box_head_forward.5} parent=15 // pred_check_branch
          %472 = sbr.rel (%p470) target = $region47
        $region46: #{ms_box_head_forward.5} parent=15 // pred_region
          %s473 = smul.u32 8, %s20
          %p474 = scmp.lt.s32.totalorder %s473, 15
          %s475 = scalar_select %p474, %s473, 15
          %s476 = scalar_lea.vmem %s2, %s475
          %s477 = smul.u32 8, %s20
        $region47: #{ms_box_head_forward.5} parent=15 // pred_fallthru
          _
      $region16: #{ms_box_head_forward.5} parent=5 // pred_fallthru
        _
      %p478 = scmp.le.s32.totalorder 1, %s12
      %p479 = scmp.lt.s32.totalorder %s12, 5
      %p480 = pnand %p478, %p479
      %p481 = pneg %p480
      // Predicated region
      $region48: #{ms_box_head_forward.5} parent=5 // pred_check
        _
      $region49: #{ms_box_head_forward.5} parent=5 // pred_check_branch
        %483 = sbr.rel (%p480) target = $region51
      $region50: #{ms_box_head_forward.5} parent=5 // pred_region
        %s484 = ssub.s32 %s12, 1
        %s485 = sand.u32 %s63, 1
        %s486 = sand.u32 %s63, 1
        %s487 = smul.addr %s486, 1152
        %s488 = scalar_lea.vmem [#allocation2], %s487
        // Predicated region
        $region52: #{ms_box_head_forward.5} parent=50 // pred_check
          %p489 = pneg %p76
        $region53: #{ms_box_head_forward.5} parent=50 // pred_check_branch
          %491 = sbr.rel (%p489) target = $region55
        $region54: #{ms_box_head_forward.5} parent=50 // pred_region
          _
        $region55: #{ms_box_head_forward.5} parent=50 // pred_fallthru
          _
        %p492 = scmp.lt.s32.totalorder %s21, 1
        %s493 = scalar_select %p492, %s21, 1
        %s494 = smul.addr %s493, 96
        %s495 = smul.addr %s494, 4
        %s496 = scalar_lea.vmem %s0, %s495
        %p497 = pneg %p50
        %p498 = pneg %p47
        %s499 = sand.u32 %s63, 1
        %s500 = sand.u32 %s63, 1
        %s501 = smul.addr %s500, 1152
        %s502 = scalar_lea.vmem [#allocation2], %s501
        %p503 = pneg %p76
        %p504 = pneg %p73
        %s505 = smul.u32 8, %s22
        %p506 = scmp.lt.s32.totalorder %s505, 15
        %s507 = scalar_select %p506, %s505, 15
        %s508 = scalar_lea.vmem %s2, %s507
        %p509 = pneg %p102
        %p510 = pneg %p99
        %p511 = pneg %p130
        %p512 = pneg %p127
        %s513 = sand.u32 %s117, 1
        %s514 = scalar_lea.sflag [#allocation4], %s513
        %s515 = sand.u32 %s117, 1
        %s516 = smul.addr %s515, 8
        %s517 = scalar_lea.vmem [#allocation3], %s516
        %p518 = scmp.lt.s32.totalorder %s21, 1
        %s519 = scalar_select %p518, %s21, 1
        %s520 = smul.addr %s519, 96
        %s521 = smul.addr %s520, 4
        %s522 = scalar_lea.vmem %s0, %s521
        %s523 = smul.u32 8, %s22
        %s524 = smul.u32 8, %s22
        %p525 = scmp.lt.s32.totalorder %s524, 15
        %s526 = scalar_select %p525, %s524, 15
        %s527 = scalar_lea.vmem %s2, %s526
        %s528 = smul.u32 8, %s22
        %s529 = smul.u32 8, %s22
        %v531 = vld [vmem:[%s522] sm:$0xff]
        %v532 = vld [vmem:[%s522 + $0x8] sm:$0xf]
        %v533 = vld [vmem:[%s522 + $0xc] sm:$0xff]
        %v534 = vld [vmem:[%s522 + $0x14] sm:$0xf]
        %v535 = vld [vmem:[%s522 + $0x18] sm:$0xff]
        %v536 = vld [vmem:[%s522 + $0x20] sm:$0xf]
        %v537 = vld [vmem:[%s522 + $0x24] sm:$0xff]
        %v538 = vld [vmem:[%s522 + $0x2c] sm:$0xf]
        %v539 = vld [vmem:[%s522 + $0x30] sm:$0xff]
        %v540 = vld [vmem:[%s522 + $0x38] sm:$0xf]
        %v541 = vld [vmem:[%s522 + $0x3c] sm:$0xff]
        %v542 = vld [vmem:[%s522 + $0x44] sm:$0xf]
        %v543 = vld [vmem:[%s522 + $0x48] sm:$0xff]
        %v544 = vld [vmem:[%s522 + $0x50] sm:$0xf]
        %v545 = vld [vmem:[%s522 + $0x54] sm:$0xff]
        %v546 = vld [vmem:[%s522 + $0x5c] sm:$0xf]
        %v547 = vld [vmem:[%s522 + $0x60] sm:$0xff]
        %v548 = vld [vmem:[%s522 + $0x68] sm:$0xf]
        %v549 = vld [vmem:[%s522 + $0x6c] sm:$0xff]
        %v550 = vld [vmem:[%s522 + $0x74] sm:$0xf]
        %v551 = vld [vmem:[%s522 + $0x78] sm:$0xff]
        %v552 = vld [vmem:[%s522 + $0x80] sm:$0xf]
        %v553 = vld [vmem:[%s522 + $0x84] sm:$0xff]
        %v554 = vld [vmem:[%s522 + $0x8c] sm:$0xf]
        %v555 = vld [vmem:[%s522 + $0x90] sm:$0xff]
        %v556 = vld [vmem:[%s522 + $0x98] sm:$0xf]
        %v557 = vld [vmem:[%s522 + $0x9c] sm:$0xff]
        %v558 = vld [vmem:[%s522 + $0xa4] sm:$0xf]
        %v559 = vld [vmem:[%s522 + $0xa8] sm:$0xff]
        %v560 = vld [vmem:[%s522 + $0xb0] sm:$0xf]
        %v561 = vld [vmem:[%s522 + $0xb4] sm:$0xff]
        %v562 = vld [vmem:[%s522 + $0xbc] sm:$0xf]
        %v563 = vld [vmem:[%s522 + $0xc0] sm:$0xff]
        %v564 = vld [vmem:[%s522 + $0xc8] sm:$0xf]
        %v565 = vld [vmem:[%s522 + $0xcc] sm:$0xff]
        %v566 = vld [vmem:[%s522 + $0xd4] sm:$0xf]
        %v567 = vld [vmem:[%s522 + $0xd8] sm:$0xff]
        %v568 = vld [vmem:[%s522 + $0xe0] sm:$0xf]
        %v569 = vld [vmem:[%s522 + $0xe4] sm:$0xff]
        %v570 = vld [vmem:[%s522 + $0xec] sm:$0xf]
        %v571 = vld [vmem:[%s522 + $0xf0] sm:$0xff]
        %v572 = vld [vmem:[%s522 + $0xf8] sm:$0xf]
        %v573 = vld [vmem:[%s522 + $0xfc] sm:$0xff]
        %v574 = vld [vmem:[%s522 + $0x104] sm:$0xf]
        %v575 = vld [vmem:[%s522 + $0x108] sm:$0xff]
        %v576 = vld [vmem:[%s522 + $0x110] sm:$0xf]
        %v577 = vld [vmem:[%s522 + $0x114] sm:$0xff]
        %v578 = vld [vmem:[%s522 + $0x11c] sm:$0xf]
        %v579 = vld [vmem:[%s522 + $0x120] sm:$0xff]
        %v580 = vld [vmem:[%s522 + $0x128] sm:$0xf]
        %v581 = vld [vmem:[%s522 + $0x12c] sm:$0xff]
        %v582 = vld [vmem:[%s522 + $0x134] sm:$0xf]
        %v583 = vld [vmem:[%s522 + $0x138] sm:$0xff]
        %v584 = vld [vmem:[%s522 + $0x140] sm:$0xf]
        %v585 = vld [vmem:[%s522 + $0x144] sm:$0xff]
        %v586 = vld [vmem:[%s522 + $0x14c] sm:$0xf]
        %v587 = vld [vmem:[%s522 + $0x150] sm:$0xff]
        %v588 = vld [vmem:[%s522 + $0x158] sm:$0xf]
        %v589 = vld [vmem:[%s522 + $0x15c] sm:$0xff]
        %v590 = vld [vmem:[%s522 + $0x164] sm:$0xf]
        %v591 = vld [vmem:[%s522 + $0x168] sm:$0xff]
        %v592 = vld [vmem:[%s522 + $0x170] sm:$0xf]
        %v593 = vld [vmem:[%s522 + $0x174] sm:$0xff]
        %v594 = vld [vmem:[%s522 + $0x17c] sm:$0xf]
        %v595 = vld [vmem:[%s488] sm:$0xff]
        %v596 = vld [vmem:[%s488 + $0x8] sm:$0xff]
        %v597 = vld [vmem:[%s488 + $0x10] sm:$0xff]
        %v598 = vld [vmem:[%s488 + $0x18] sm:$0xff]
        %v599 = vld [vmem:[%s488 + $0x20] sm:$0xff]
        %v600 = vld [vmem:[%s488 + $0x28] sm:$0xff]
        %v601 = vld [vmem:[%s488 + $0x30] sm:$0xff]
        %v602 = vld [vmem:[%s488 + $0x38] sm:$0xff]
        %v603 = vld [vmem:[%s488 + $0x40] sm:$0xff]
        %v604 = vld [vmem:[%s488 + $0x48] sm:$0xff]
        %v605 = vld [vmem:[%s488 + $0x50] sm:$0xff]
        %v606 = vld [vmem:[%s488 + $0x58] sm:$0xff]
        %v607 = vld [vmem:[%s488 + $0x60] sm:$0xff]
        %v608 = vld [vmem:[%s488 + $0x68] sm:$0xff]
        %v609 = vld [vmem:[%s488 + $0x70] sm:$0xff]
        %v610 = vld [vmem:[%s488 + $0x78] sm:$0xff]
        %v611 = vld [vmem:[%s488 + $0x80] sm:$0xff]
        %v612 = vld [vmem:[%s488 + $0x88] sm:$0xff]
        %v613 = vld [vmem:[%s488 + $0x90] sm:$0xff]
        %v614 = vld [vmem:[%s488 + $0x98] sm:$0xff]
        %v615 = vld [vmem:[%s488 + $0xa0] sm:$0xff]
        %v616 = vld [vmem:[%s488 + $0xa8] sm:$0xff]
        %v617 = vld [vmem:[%s488 + $0xb0] sm:$0xff]
        %v618 = vld [vmem:[%s488 + $0xb8] sm:$0xff]
        %v619 = vld [vmem:[%s488 + $0xc0] sm:$0xff]
        %v620 = vld [vmem:[%s488 + $0xc8] sm:$0xff]
        %v621 = vld [vmem:[%s488 + $0xd0] sm:$0xff]
        %v622 = vld [vmem:[%s488 + $0xd8] sm:$0xff]
        %v623 = vld [vmem:[%s488 + $0xe0] sm:$0xff]
        %v624 = vld [vmem:[%s488 + $0xe8] sm:$0xff]
        %v625 = vld [vmem:[%s488 + $0xf0] sm:$0xff]
        %v626 = vld [vmem:[%s488 + $0xf8] sm:$0xff]
        %v627 = vld [vmem:[%s488 + $0x100] sm:$0xff]
        %v628 = vld [vmem:[%s488 + $0x108] sm:$0xff]
        %v629 = vld [vmem:[%s488 + $0x110] sm:$0xff]
        %v630 = vld [vmem:[%s488 + $0x118] sm:$0xff]
        %v631 = vld [vmem:[%s488 + $0x120] sm:$0xff]
        %v632 = vld [vmem:[%s488 + $0x128] sm:$0xff]
        %v633 = vld [vmem:[%s488 + $0x130] sm:$0xff]
        %v634 = vld [vmem:[%s488 + $0x138] sm:$0xff]
        %v635 = vld [vmem:[%s488 + $0x140] sm:$0xff]
        %v636 = vld [vmem:[%s488 + $0x148] sm:$0xff]
        %v637 = vld [vmem:[%s488 + $0x150] sm:$0xff]
        %v638 = vld [vmem:[%s488 + $0x158] sm:$0xff]
        %v639 = vld [vmem:[%s488 + $0x160] sm:$0xff]
        %v640 = vld [vmem:[%s488 + $0x168] sm:$0xff]
        %v641 = vld [vmem:[%s488 + $0x170] sm:$0xff]
        %v642 = vld [vmem:[%s488 + $0x178] sm:$0xff]
        %v643 = vld [vmem:[%s488 + $0x180] sm:$0xff]
        %v644 = vld [vmem:[%s488 + $0x188] sm:$0xff]
        %v645 = vld [vmem:[%s488 + $0x190] sm:$0xff]
        %v646 = vld [vmem:[%s488 + $0x198] sm:$0xff]
        %v647 = vld [vmem:[%s488 + $0x1a0] sm:$0xff]
        %v648 = vld [vmem:[%s488 + $0x1a8] sm:$0xff]
        %v649 = vld [vmem:[%s488 + $0x1b0] sm:$0xff]
        %v650 = vld [vmem:[%s488 + $0x1b8] sm:$0xff]
        %v651 = vld [vmem:[%s488 + $0x1c0] sm:$0xff]
        %v652 = vld [vmem:[%s488 + $0x1c8] sm:$0xff]
        %v653 = vld [vmem:[%s488 + $0x1d0] sm:$0xff]
        %v654 = vld [vmem:[%s488 + $0x1d8] sm:$0xff]
        %v655 = vld [vmem:[%s488 + $0x1e0] sm:$0xff]
        %v656 = vld [vmem:[%s488 + $0x1e8] sm:$0xff]
        %v657 = vld [vmem:[%s488 + $0x1f0] sm:$0xff]
        %v658 = vld [vmem:[%s488 + $0x1f8] sm:$0xff]
        %v659 = vld [vmem:[%s488 + $0x200] sm:$0xff]
        %v660 = vld [vmem:[%s488 + $0x208] sm:$0xff]
        %v661 = vld [vmem:[%s488 + $0x210] sm:$0xff]
        %v662 = vld [vmem:[%s488 + $0x218] sm:$0xff]
        %v663 = vld [vmem:[%s488 + $0x220] sm:$0xff]
        %v664 = vld [vmem:[%s488 + $0x228] sm:$0xff]
        %v665 = vld [vmem:[%s488 + $0x230] sm:$0xff]
        %v666 = vld [vmem:[%s488 + $0x238] sm:$0xff]
        %v667 = vld [vmem:[%s488 + $0x240] sm:$0xff]
        %v668 = vld [vmem:[%s488 + $0x248] sm:$0xff]
        %v669 = vld [vmem:[%s488 + $0x250] sm:$0xff]
        %v670 = vld [vmem:[%s488 + $0x258] sm:$0xff]
        %v671 = vld [vmem:[%s488 + $0x260] sm:$0xff]
        %v672 = vld [vmem:[%s488 + $0x268] sm:$0xff]
        %v673 = vld [vmem:[%s488 + $0x270] sm:$0xff]
        %v674 = vld [vmem:[%s488 + $0x278] sm:$0xff]
        %v675 = vld [vmem:[%s488 + $0x280] sm:$0xff]
        %v676 = vld [vmem:[%s488 + $0x288] sm:$0xff]
        %v677 = vld [vmem:[%s488 + $0x290] sm:$0xff]
        %v678 = vld [vmem:[%s488 + $0x298] sm:$0xff]
        %v679 = vld [vmem:[%s488 + $0x2a0] sm:$0xff]
        %v680 = vld [vmem:[%s488 + $0x2a8] sm:$0xff]
        %v681 = vld [vmem:[%s488 + $0x2b0] sm:$0xff]
        %v682 = vld [vmem:[%s488 + $0x2b8] sm:$0xff]
        %v683 = vld [vmem:[%s488 + $0x2c0] sm:$0xff]
        %v684 = vld [vmem:[%s488 + $0x2c8] sm:$0xff]
        %v685 = vld [vmem:[%s488 + $0x2d0] sm:$0xff]
        %v686 = vld [vmem:[%s488 + $0x2d8] sm:$0xff]
        %v687 = vld [vmem:[%s488 + $0x2e0] sm:$0xff]
        %v688 = vld [vmem:[%s488 + $0x2e8] sm:$0xff]
        %v689 = vld [vmem:[%s488 + $0x2f0] sm:$0xff]
        %v690 = vld [vmem:[%s488 + $0x2f8] sm:$0xff]
        %v691 = vld [vmem:[%s488 + $0x300] sm:$0xff]
        %v692 = vld [vmem:[%s488 + $0x308] sm:$0xff]
        %v693 = vld [vmem:[%s488 + $0x310] sm:$0xff]
        %v694 = vld [vmem:[%s488 + $0x318] sm:$0xff]
        %v695 = vld [vmem:[%s488 + $0x320] sm:$0xff]
        %v696 = vld [vmem:[%s488 + $0x328] sm:$0xff]
        %v697 = vld [vmem:[%s488 + $0x330] sm:$0xff]
        %v698 = vld [vmem:[%s488 + $0x338] sm:$0xff]
        %v699 = vld [vmem:[%s488 + $0x340] sm:$0xff]
        %v700 = vld [vmem:[%s488 + $0x348] sm:$0xff]
        %v701 = vld [vmem:[%s488 + $0x350] sm:$0xff]
        %v702 = vld [vmem:[%s488 + $0x358] sm:$0xff]
        %v703 = vld [vmem:[%s488 + $0x360] sm:$0xff]
        %v704 = vld [vmem:[%s488 + $0x368] sm:$0xff]
        %v705 = vld [vmem:[%s488 + $0x370] sm:$0xff]
        %v706 = vld [vmem:[%s488 + $0x378] sm:$0xff]
        %v707 = vld [vmem:[%s488 + $0x380] sm:$0xff]
        %v708 = vld [vmem:[%s488 + $0x388] sm:$0xff]
        %v709 = vld [vmem:[%s488 + $0x390] sm:$0xff]
        %v710 = vld [vmem:[%s488 + $0x398] sm:$0xff]
        %v711 = vld [vmem:[%s488 + $0x3a0] sm:$0xff]
        %v712 = vld [vmem:[%s488 + $0x3a8] sm:$0xff]
        %v713 = vld [vmem:[%s488 + $0x3b0] sm:$0xff]
        %v714 = vld [vmem:[%s488 + $0x3b8] sm:$0xff]
        %v715 = vld [vmem:[%s488 + $0x3c0] sm:$0xff]
        %v716 = vld [vmem:[%s488 + $0x3c8] sm:$0xff]
        %v717 = vld [vmem:[%s488 + $0x3d0] sm:$0xff]
        %v718 = vld [vmem:[%s488 + $0x3d8] sm:$0xff]
        %v719 = vld [vmem:[%s488 + $0x3e0] sm:$0xff]
        %v720 = vld [vmem:[%s488 + $0x3e8] sm:$0xff]
        %v721 = vld [vmem:[%s488 + $0x3f0] sm:$0xff]
        %v722 = vld [vmem:[%s488 + $0x3f8] sm:$0xff]
        %v723 = vld [vmem:[%s488 + $0x400] sm:$0xff]
        %v724 = vld [vmem:[%s488 + $0x408] sm:$0xff]
        %v725 = vld [vmem:[%s488 + $0x410] sm:$0xff]
        %v726 = vld [vmem:[%s488 + $0x418] sm:$0xff]
        %v727 = vld [vmem:[%s488 + $0x420] sm:$0xff]
        %v728 = vld [vmem:[%s488 + $0x428] sm:$0xff]
        %v729 = vld [vmem:[%s488 + $0x430] sm:$0xff]
        %v730 = vld [vmem:[%s488 + $0x438] sm:$0xff]
        %v731 = vld [vmem:[%s488 + $0x440] sm:$0xff]
        %v732 = vld [vmem:[%s488 + $0x448] sm:$0xff]
        %v733 = vld [vmem:[%s488 + $0x450] sm:$0xff]
        %v734 = vld [vmem:[%s488 + $0x458] sm:$0xff]
        %v735 = vld [vmem:[%s488 + $0x460] sm:$0xff]
        %v736 = vld [vmem:[%s488 + $0x468] sm:$0xff]
        %v737 = vld [vmem:[%s488 + $0x470] sm:$0xff]
        %v738 = vld [vmem:[%s488 + $0x478] sm:$0xff]
        %v739 = vld [vmem:[%s527] sm:$0xff]
        %v741 = vlaneseq
        %v742 = vshrl.u32 %v741, 7
        %v743 = vsub.s32 0, %v742
        %v744 = vrot.slane %v739, %v743
        %v745 = vlaneseq
        %v746 = vshrl.u32 %v745, 7
        %v747 = vsub.s32 1, %v746
        %v748 = vrot.slane %v739, %v747
        %v749 = vlaneseq
        %v750 = vshrl.u32 %v749, 7
        %v751 = vsub.s32 2, %v750
        %v752 = vrot.slane %v739, %v751
        %v753 = vlaneseq
        %v754 = vshrl.u32 %v753, 7
        %v755 = vsub.s32 3, %v754
        %v756 = vrot.slane %v739, %v755
        %v757 = vlaneseq
        %v758 = vshrl.u32 %v757, 7
        %v759 = vsub.s32 4, %v758
        %v760 = vrot.slane %v739, %v759
        %v761 = vlaneseq
        %v762 = vshrl.u32 %v761, 7
        %v763 = vsub.s32 5, %v762
        %v764 = vrot.slane %v739, %v763
        %v765 = vlaneseq
        %v766 = vshrl.u32 %v765, 7
        %v767 = vsub.s32 6, %v766
        %v768 = vrot.slane %v739, %v767
        %v769 = vlaneseq
        %v770 = vshrl.u32 %v769, 7
        %v771 = vsub.s32 7, %v770
        %v772 = vrot.slane %v739, %v771
        %v845 = vunpack.c.l.b16 %v531
        %v846 = vunpack.c.h.b16 %v531
        %v847 = vunpack.c.l.b16 %v532
        %v848 = vunpack.c.l.b16 %v533
        %v849 = vunpack.c.h.b16 %v533
        %v850 = vunpack.c.l.b16 %v534
        %v851 = vunpack.c.l.b16 %v535
        %v852 = vunpack.c.h.b16 %v535
        %v853 = vunpack.c.l.b16 %v536
        %v854 = vunpack.c.l.b16 %v537
        %v855 = vunpack.c.h.b16 %v537
        %v856 = vunpack.c.l.b16 %v538
        %v857 = vunpack.c.l.b16 %v539
        %v858 = vunpack.c.h.b16 %v539
        %v859 = vunpack.c.l.b16 %v540
        %v860 = vunpack.c.l.b16 %v541
        %v861 = vunpack.c.h.b16 %v541
        %v862 = vunpack.c.l.b16 %v542
        %v863 = vunpack.c.l.b16 %v543
        %v864 = vunpack.c.h.b16 %v543
        %v865 = vunpack.c.l.b16 %v544
        %v866 = vunpack.c.l.b16 %v545
        %v867 = vunpack.c.h.b16 %v545
        %v868 = vunpack.c.l.b16 %v546
        %v869 = vunpack.c.l.b16 %v547
        %v870 = vunpack.c.h.b16 %v547
        %v871 = vunpack.c.l.b16 %v548
        %v872 = vunpack.c.l.b16 %v549
        %v873 = vunpack.c.h.b16 %v549
        %v874 = vunpack.c.l.b16 %v550
        %v875 = vunpack.c.l.b16 %v551
        %v876 = vunpack.c.h.b16 %v551
        %v877 = vunpack.c.l.b16 %v552
        %v878 = vunpack.c.l.b16 %v553
        %v879 = vunpack.c.h.b16 %v553
        %v880 = vunpack.c.l.b16 %v554
        %v881 = vunpack.c.l.b16 %v555
        %v882 = vunpack.c.h.b16 %v555
        %v883 = vunpack.c.l.b16 %v556
        %v884 = vunpack.c.l.b16 %v557
        %v885 = vunpack.c.h.b16 %v557
        %v886 = vunpack.c.l.b16 %v558
        %v887 = vunpack.c.l.b16 %v559
        %v888 = vunpack.c.h.b16 %v559
        %v889 = vunpack.c.l.b16 %v560
        %v890 = vunpack.c.l.b16 %v561
        %v891 = vunpack.c.h.b16 %v561
        %v892 = vunpack.c.l.b16 %v562
        %v893 = vunpack.c.l.b16 %v563
        %v894 = vunpack.c.h.b16 %v563
        %v895 = vunpack.c.l.b16 %v564
        %v896 = vunpack.c.l.b16 %v565
        %v897 = vunpack.c.h.b16 %v565
        %v898 = vunpack.c.l.b16 %v566
        %v899 = vunpack.c.l.b16 %v567
        %v900 = vunpack.c.h.b16 %v567
        %v901 = vunpack.c.l.b16 %v568
        %v902 = vunpack.c.l.b16 %v569
        %v903 = vunpack.c.h.b16 %v569
        %v904 = vunpack.c.l.b16 %v570
        %v905 = vunpack.c.l.b16 %v571
        %v906 = vunpack.c.h.b16 %v571
        %v907 = vunpack.c.l.b16 %v572
        %v908 = vunpack.c.l.b16 %v573
        %v909 = vunpack.c.h.b16 %v573
        %v910 = vunpack.c.l.b16 %v574
        %v911 = vunpack.c.l.b16 %v575
        %v912 = vunpack.c.h.b16 %v575
        %v913 = vunpack.c.l.b16 %v576
        %v914 = vunpack.c.l.b16 %v577
        %v915 = vunpack.c.h.b16 %v577
        %v916 = vunpack.c.l.b16 %v578
        %v917 = vunpack.c.l.b16 %v579
        %v918 = vunpack.c.h.b16 %v579
        %v919 = vunpack.c.l.b16 %v580
        %v920 = vunpack.c.l.b16 %v581
        %v921 = vunpack.c.h.b16 %v581
        %v922 = vunpack.c.l.b16 %v582
        %v923 = vunpack.c.l.b16 %v583
        %v924 = vunpack.c.h.b16 %v583
        %v925 = vunpack.c.l.b16 %v584
        %v926 = vunpack.c.l.b16 %v585
        %v927 = vunpack.c.h.b16 %v585
        %v928 = vunpack.c.l.b16 %v586
        %v929 = vunpack.c.l.b16 %v587
        %v930 = vunpack.c.h.b16 %v587
        %v931 = vunpack.c.l.b16 %v588
        %v932 = vunpack.c.l.b16 %v589
        %v933 = vunpack.c.h.b16 %v589
        %v934 = vunpack.c.l.b16 %v590
        %v935 = vunpack.c.l.b16 %v591
        %v936 = vunpack.c.h.b16 %v591
        %v937 = vunpack.c.l.b16 %v592
        %v938 = vunpack.c.l.b16 %v593
        %v939 = vunpack.c.h.b16 %v593
        %v940 = vunpack.c.l.b16 %v594
        %v941 = vpack.c.b16 %v848, %v845
        %v942 = vpack.c.b16 %v849, %v846
        %v943 = vpack.c.b16 %v850, %v847
        %v944 = vpack.c.b16 %v854, %v851
        %v945 = vpack.c.b16 %v855, %v852
        %v946 = vpack.c.b16 %v856, %v853
        %v947 = vpack.c.b16 %v860, %v857
        %v948 = vpack.c.b16 %v861, %v858
        %v949 = vpack.c.b16 %v862, %v859
        %v950 = vpack.c.b16 %v866, %v863
        %v951 = vpack.c.b16 %v867, %v864
        %v952 = vpack.c.b16 %v868, %v865
        %v953 = vpack.c.b16 %v872, %v869
        %v954 = vpack.c.b16 %v873, %v870
        %v955 = vpack.c.b16 %v874, %v871
        %v956 = vpack.c.b16 %v878, %v875
        %v957 = vpack.c.b16 %v879, %v876
        %v958 = vpack.c.b16 %v880, %v877
        %v959 = vpack.c.b16 %v884, %v881
        %v960 = vpack.c.b16 %v885, %v882
        %v961 = vpack.c.b16 %v886, %v883
        %v962 = vpack.c.b16 %v890, %v887
        %v963 = vpack.c.b16 %v891, %v888
        %v964 = vpack.c.b16 %v892, %v889
        %v965 = vpack.c.b16 %v896, %v893
        %v966 = vpack.c.b16 %v897, %v894
        %v967 = vpack.c.b16 %v898, %v895
        %v968 = vpack.c.b16 %v902, %v899
        %v969 = vpack.c.b16 %v903, %v900
        %v970 = vpack.c.b16 %v904, %v901
        %v971 = vpack.c.b16 %v908, %v905
        %v972 = vpack.c.b16 %v909, %v906
        %v973 = vpack.c.b16 %v910, %v907
        %v974 = vpack.c.b16 %v914, %v911
        %v975 = vpack.c.b16 %v915, %v912
        %v976 = vpack.c.b16 %v916, %v913
        %v977 = vpack.c.b16 %v920, %v917
        %v978 = vpack.c.b16 %v921, %v918
        %v979 = vpack.c.b16 %v922, %v919
        %v980 = vpack.c.b16 %v926, %v923
        %v981 = vpack.c.b16 %v927, %v924
        %v982 = vpack.c.b16 %v928, %v925
        %v983 = vpack.c.b16 %v932, %v929
        %v984 = vpack.c.b16 %v933, %v930
        %v985 = vpack.c.b16 %v934, %v931
        %v986 = vpack.c.b16 %v938, %v935
        %v987 = vpack.c.b16 %v939, %v936
        %v988 = vpack.c.b16 %v940, %v937
        %v1165 = vunpack.c.l.b16 %v595
        %v1166 = vunpack.c.h.b16 %v595
        %v1167 = vunpack.c.l.b16 %v596
        %v1168 = vunpack.c.h.b16 %v596
        %v1169 = vunpack.c.l.b16 %v597
        %v1170 = vunpack.c.h.b16 %v597
        %v1171 = vunpack.c.l.b16 %v598
        %v1172 = vunpack.c.h.b16 %v598
        %v1173 = vunpack.c.l.b16 %v599
        %v1174 = vunpack.c.h.b16 %v599
        %v1175 = vunpack.c.l.b16 %v600
        %v1176 = vunpack.c.h.b16 %v600
        %v1177 = vunpack.c.l.b16 %v601
        %v1178 = vunpack.c.h.b16 %v601
        %v1179 = vunpack.c.l.b16 %v602
        %v1180 = vunpack.c.h.b16 %v602
        %v1181 = vunpack.c.l.b16 %v603
        %v1182 = vunpack.c.h.b16 %v603
        %v1183 = vunpack.c.l.b16 %v604
        %v1184 = vunpack.c.h.b16 %v604
        %v1185 = vunpack.c.l.b16 %v605
        %v1186 = vunpack.c.h.b16 %v605
        %v1187 = vunpack.c.l.b16 %v606
        %v1188 = vunpack.c.h.b16 %v606
        %v1189 = vunpack.c.l.b16 %v607
        %v1190 = vunpack.c.h.b16 %v607
        %v1191 = vunpack.c.l.b16 %v608
        %v1192 = vunpack.c.h.b16 %v608
        %v1193 = vunpack.c.l.b16 %v609
        %v1194 = vunpack.c.h.b16 %v609
        %v1195 = vunpack.c.l.b16 %v610
        %v1196 = vunpack.c.h.b16 %v610
        %v1197 = vunpack.c.l.b16 %v611
        %v1198 = vunpack.c.h.b16 %v611
        %v1199 = vunpack.c.l.b16 %v612
        %v1200 = vunpack.c.h.b16 %v612
        %v1201 = vunpack.c.l.b16 %v613
        %v1202 = vunpack.c.h.b16 %v613
        %v1203 = vunpack.c.l.b16 %v614
        %v1204 = vunpack.c.h.b16 %v614
        %v1205 = vunpack.c.l.b16 %v615
        %v1206 = vunpack.c.h.b16 %v615
        %v1207 = vunpack.c.l.b16 %v616
        %v1208 = vunpack.c.h.b16 %v616
        %v1209 = vunpack.c.l.b16 %v617
        %v1210 = vunpack.c.h.b16 %v617
        %v1211 = vunpack.c.l.b16 %v618
        %v1212 = vunpack.c.h.b16 %v618
        %v1213 = vunpack.c.l.b16 %v619
        %v1214 = vunpack.c.h.b16 %v619
        %v1215 = vunpack.c.l.b16 %v620
        %v1216 = vunpack.c.h.b16 %v620
        %v1217 = vunpack.c.l.b16 %v621
        %v1218 = vunpack.c.h.b16 %v621
        %v1219 = vunpack.c.l.b16 %v622
        %v1220 = vunpack.c.h.b16 %v622
        %v1221 = vunpack.c.l.b16 %v623
        %v1222 = vunpack.c.h.b16 %v623
        %v1223 = vunpack.c.l.b16 %v624
        %v1224 = vunpack.c.h.b16 %v624
        %v1225 = vunpack.c.l.b16 %v625
        %v1226 = vunpack.c.h.b16 %v625
        %v1227 = vunpack.c.l.b16 %v626
        %v1228 = vunpack.c.h.b16 %v626
        %v1229 = vunpack.c.l.b16 %v627
        %v1230 = vunpack.c.h.b16 %v627
        %v1231 = vunpack.c.l.b16 %v628
        %v1232 = vunpack.c.h.b16 %v628
        %v1233 = vunpack.c.l.b16 %v629
        %v1234 = vunpack.c.h.b16 %v629
        %v1235 = vunpack.c.l.b16 %v630
        %v1236 = vunpack.c.h.b16 %v630
        %v1237 = vunpack.c.l.b16 %v631
        %v1238 = vunpack.c.h.b16 %v631
        %v1239 = vunpack.c.l.b16 %v632
        %v1240 = vunpack.c.h.b16 %v632
        %v1241 = vunpack.c.l.b16 %v633
        %v1242 = vunpack.c.h.b16 %v633
        %v1243 = vunpack.c.l.b16 %v634
        %v1244 = vunpack.c.h.b16 %v634
        %v1245 = vunpack.c.l.b16 %v635
        %v1246 = vunpack.c.h.b16 %v635
        %v1247 = vunpack.c.l.b16 %v636
        %v1248 = vunpack.c.h.b16 %v636
        %v1249 = vunpack.c.l.b16 %v637
        %v1250 = vunpack.c.h.b16 %v637
        %v1251 = vunpack.c.l.b16 %v638
        %v1252 = vunpack.c.h.b16 %v638
        %v1253 = vunpack.c.l.b16 %v639
        %v1254 = vunpack.c.h.b16 %v639
        %v1255 = vunpack.c.l.b16 %v640
        %v1256 = vunpack.c.h.b16 %v640
        %v1257 = vunpack.c.l.b16 %v641
        %v1258 = vunpack.c.h.b16 %v641
        %v1259 = vunpack.c.l.b16 %v642
        %v1260 = vunpack.c.h.b16 %v642
        %v1261 = vunpack.c.l.b16 %v643
        %v1262 = vunpack.c.h.b16 %v643
        %v1263 = vunpack.c.l.b16 %v644
        %v1264 = vunpack.c.h.b16 %v644
        %v1265 = vunpack.c.l.b16 %v645
        %v1266 = vunpack.c.h.b16 %v645
        %v1267 = vunpack.c.l.b16 %v646
        %v1268 = vunpack.c.h.b16 %v646
        %v1269 = vunpack.c.l.b16 %v647
        %v1270 = vunpack.c.h.b16 %v647
        %v1271 = vunpack.c.l.b16 %v648
        %v1272 = vunpack.c.h.b16 %v648
        %v1273 = vunpack.c.l.b16 %v649
        %v1274 = vunpack.c.h.b16 %v649
        %v1275 = vunpack.c.l.b16 %v650
        %v1276 = vunpack.c.h.b16 %v650
        %v1277 = vunpack.c.l.b16 %v651
        %v1278 = vunpack.c.h.b16 %v651
        %v1279 = vunpack.c.l.b16 %v652
        %v1280 = vunpack.c.h.b16 %v652
        %v1281 = vunpack.c.l.b16 %v653
        %v1282 = vunpack.c.h.b16 %v653
        %v1283 = vunpack.c.l.b16 %v654
        %v1284 = vunpack.c.h.b16 %v654
        %v1285 = vunpack.c.l.b16 %v655
        %v1286 = vunpack.c.h.b16 %v655
        %v1287 = vunpack.c.l.b16 %v656
        %v1288 = vunpack.c.h.b16 %v656
        %v1289 = vunpack.c.l.b16 %v657
        %v1290 = vunpack.c.h.b16 %v657
        %v1291 = vunpack.c.l.b16 %v658
        %v1292 = vunpack.c.h.b16 %v658
        %v1293 = vunpack.c.l.b16 %v659
        %v1294 = vunpack.c.h.b16 %v659
        %v1295 = vunpack.c.l.b16 %v660
        %v1296 = vunpack.c.h.b16 %v660
        %v1297 = vunpack.c.l.b16 %v661
        %v1298 = vunpack.c.h.b16 %v661
        %v1299 = vunpack.c.l.b16 %v662
        %v1300 = vunpack.c.h.b16 %v662
        %v1301 = vunpack.c.l.b16 %v663
        %v1302 = vunpack.c.h.b16 %v663
        %v1303 = vunpack.c.l.b16 %v664
        %v1304 = vunpack.c.h.b16 %v664
        %v1305 = vunpack.c.l.b16 %v665
        %v1306 = vunpack.c.h.b16 %v665
        %v1307 = vunpack.c.l.b16 %v666
        %v1308 = vunpack.c.h.b16 %v666
        %v1309 = vunpack.c.l.b16 %v667
        %v1310 = vunpack.c.h.b16 %v667
        %v1311 = vunpack.c.l.b16 %v668
        %v1312 = vunpack.c.h.b16 %v668
        %v1313 = vunpack.c.l.b16 %v669
        %v1314 = vunpack.c.h.b16 %v669
        %v1315 = vunpack.c.l.b16 %v670
        %v1316 = vunpack.c.h.b16 %v670
        %v1317 = vunpack.c.l.b16 %v671
        %v1318 = vunpack.c.h.b16 %v671
        %v1319 = vunpack.c.l.b16 %v672
        %v1320 = vunpack.c.h.b16 %v672
        %v1321 = vunpack.c.l.b16 %v673
        %v1322 = vunpack.c.h.b16 %v673
        %v1323 = vunpack.c.l.b16 %v674
        %v1324 = vunpack.c.h.b16 %v674
        %v1325 = vunpack.c.l.b16 %v675
        %v1326 = vunpack.c.h.b16 %v675
        %v1327 = vunpack.c.l.b16 %v676
        %v1328 = vunpack.c.h.b16 %v676
        %v1329 = vunpack.c.l.b16 %v677
        %v1330 = vunpack.c.h.b16 %v677
        %v1331 = vunpack.c.l.b16 %v678
        %v1332 = vunpack.c.h.b16 %v678
        %v1333 = vunpack.c.l.b16 %v679
        %v1334 = vunpack.c.h.b16 %v679
        %v1335 = vunpack.c.l.b16 %v680
        %v1336 = vunpack.c.h.b16 %v680
        %v1337 = vunpack.c.l.b16 %v681
        %v1338 = vunpack.c.h.b16 %v681
        %v1339 = vunpack.c.l.b16 %v682
        %v1340 = vunpack.c.h.b16 %v682
        %v1341 = vunpack.c.l.b16 %v683
        %v1342 = vunpack.c.h.b16 %v683
        %v1343 = vunpack.c.l.b16 %v684
        %v1344 = vunpack.c.h.b16 %v684
        %v1345 = vunpack.c.l.b16 %v685
        %v1346 = vunpack.c.h.b16 %v685
        %v1347 = vunpack.c.l.b16 %v686
        %v1348 = vunpack.c.h.b16 %v686
        %v1349 = vunpack.c.l.b16 %v687
        %v1350 = vunpack.c.h.b16 %v687
        %v1351 = vunpack.c.l.b16 %v688
        %v1352 = vunpack.c.h.b16 %v688
        %v1353 = vunpack.c.l.b16 %v689
        %v1354 = vunpack.c.h.b16 %v689
        %v1355 = vunpack.c.l.b16 %v690
        %v1356 = vunpack.c.h.b16 %v690
        %v1357 = vunpack.c.l.b16 %v691
        %v1358 = vunpack.c.h.b16 %v691
        %v1359 = vunpack.c.l.b16 %v692
        %v1360 = vunpack.c.h.b16 %v692
        %v1361 = vunpack.c.l.b16 %v693
        %v1362 = vunpack.c.h.b16 %v693
        %v1363 = vunpack.c.l.b16 %v694
        %v1364 = vunpack.c.h.b16 %v694
        %v1365 = vunpack.c.l.b16 %v695
        %v1366 = vunpack.c.h.b16 %v695
        %v1367 = vunpack.c.l.b16 %v696
        %v1368 = vunpack.c.h.b16 %v696
        %v1369 = vunpack.c.l.b16 %v697
        %v1370 = vunpack.c.h.b16 %v697
        %v1371 = vunpack.c.l.b16 %v698
        %v1372 = vunpack.c.h.b16 %v698
        %v1373 = vunpack.c.l.b16 %v699
        %v1374 = vunpack.c.h.b16 %v699
        %v1375 = vunpack.c.l.b16 %v700
        %v1376 = vunpack.c.h.b16 %v700
        %v1377 = vunpack.c.l.b16 %v701
        %v1378 = vunpack.c.h.b16 %v701
        %v1379 = vunpack.c.l.b16 %v702
        %v1380 = vunpack.c.h.b16 %v702
        %v1381 = vunpack.c.l.b16 %v703
        %v1382 = vunpack.c.h.b16 %v703
        %v1383 = vunpack.c.l.b16 %v704
        %v1384 = vunpack.c.h.b16 %v704
        %v1385 = vunpack.c.l.b16 %v705
        %v1386 = vunpack.c.h.b16 %v705
        %v1387 = vunpack.c.l.b16 %v706
        %v1388 = vunpack.c.h.b16 %v706
        %v1389 = vunpack.c.l.b16 %v707
        %v1390 = vunpack.c.h.b16 %v707
        %v1391 = vunpack.c.l.b16 %v708
        %v1392 = vunpack.c.h.b16 %v708
        %v1393 = vunpack.c.l.b16 %v709
        %v1394 = vunpack.c.h.b16 %v709
        %v1395 = vunpack.c.l.b16 %v710
        %v1396 = vunpack.c.h.b16 %v710
        %v1397 = vunpack.c.l.b16 %v711
        %v1398 = vunpack.c.h.b16 %v711
        %v1399 = vunpack.c.l.b16 %v712
        %v1400 = vunpack.c.h.b16 %v712
        %v1401 = vunpack.c.l.b16 %v713
        %v1402 = vunpack.c.h.b16 %v713
        %v1403 = vunpack.c.l.b16 %v714
        %v1404 = vunpack.c.h.b16 %v714
        %v1405 = vunpack.c.l.b16 %v715
        %v1406 = vunpack.c.h.b16 %v715
        %v1407 = vunpack.c.l.b16 %v716
        %v1408 = vunpack.c.h.b16 %v716
        %v1409 = vunpack.c.l.b16 %v717
        %v1410 = vunpack.c.h.b16 %v717
        %v1411 = vunpack.c.l.b16 %v718
        %v1412 = vunpack.c.h.b16 %v718
        %v1413 = vunpack.c.l.b16 %v719
        %v1414 = vunpack.c.h.b16 %v719
        %v1415 = vunpack.c.l.b16 %v720
        %v1416 = vunpack.c.h.b16 %v720
        %v1417 = vunpack.c.l.b16 %v721
        %v1418 = vunpack.c.h.b16 %v721
        %v1419 = vunpack.c.l.b16 %v722
        %v1420 = vunpack.c.h.b16 %v722
        %v1421 = vunpack.c.l.b16 %v723
        %v1422 = vunpack.c.h.b16 %v723
        %v1423 = vunpack.c.l.b16 %v724
        %v1424 = vunpack.c.h.b16 %v724
        %v1425 = vunpack.c.l.b16 %v725
        %v1426 = vunpack.c.h.b16 %v725
        %v1427 = vunpack.c.l.b16 %v726
        %v1428 = vunpack.c.h.b16 %v726
        %v1429 = vunpack.c.l.b16 %v727
        %v1430 = vunpack.c.h.b16 %v727
        %v1431 = vunpack.c.l.b16 %v728
        %v1432 = vunpack.c.h.b16 %v728
        %v1433 = vunpack.c.l.b16 %v729
        %v1434 = vunpack.c.h.b16 %v729
        %v1435 = vunpack.c.l.b16 %v730
        %v1436 = vunpack.c.h.b16 %v730
        %v1437 = vunpack.c.l.b16 %v731
        %v1438 = vunpack.c.h.b16 %v731
        %v1439 = vunpack.c.l.b16 %v732
        %v1440 = vunpack.c.h.b16 %v732
        %v1441 = vunpack.c.l.b16 %v733
        %v1442 = vunpack.c.h.b16 %v733
        %v1443 = vunpack.c.l.b16 %v734
        %v1444 = vunpack.c.h.b16 %v734
        %v1445 = vunpack.c.l.b16 %v735
        %v1446 = vunpack.c.h.b16 %v735
        %v1447 = vunpack.c.l.b16 %v736
        %v1448 = vunpack.c.h.b16 %v736
        %v1449 = vunpack.c.l.b16 %v737
        %v1450 = vunpack.c.h.b16 %v737
        %v1451 = vunpack.c.l.b16 %v738
        %v1452 = vunpack.c.h.b16 %v738
        %v1453 = vpack.c.b16 %v1173, %v1165
        %v1454 = vpack.c.b16 %v1174, %v1166
        %v1455 = vpack.c.b16 %v1175, %v1167
        %v1456 = vpack.c.b16 %v1176, %v1168
        %v1457 = vpack.c.b16 %v1177, %v1169
        %v1458 = vpack.c.b16 %v1178, %v1170
        %v1459 = vpack.c.b16 %v1179, %v1171
        %v1460 = vpack.c.b16 %v1180, %v1172
        %v1461 = vpack.c.b16 %v1189, %v1181
        %v1462 = vpack.c.b16 %v1190, %v1182
        %v1463 = vpack.c.b16 %v1191, %v1183
        %v1464 = vpack.c.b16 %v1192, %v1184
        %v1465 = vpack.c.b16 %v1193, %v1185
        %v1466 = vpack.c.b16 %v1194, %v1186
        %v1467 = vpack.c.b16 %v1195, %v1187
        %v1468 = vpack.c.b16 %v1196, %v1188
        %v1469 = vpack.c.b16 %v1205, %v1197
        %v1470 = vpack.c.b16 %v1206, %v1198
        %v1471 = vpack.c.b16 %v1207, %v1199
        %v1472 = vpack.c.b16 %v1208, %v1200
        %v1473 = vpack.c.b16 %v1209, %v1201
        %v1474 = vpack.c.b16 %v1210, %v1202
        %v1475 = vpack.c.b16 %v1211, %v1203
        %v1476 = vpack.c.b16 %v1212, %v1204
        %v1477 = vpack.c.b16 %v1221, %v1213
        %v1478 = vpack.c.b16 %v1222, %v1214
        %v1479 = vpack.c.b16 %v1223, %v1215
        %v1480 = vpack.c.b16 %v1224, %v1216
        %v1481 = vpack.c.b16 %v1225, %v1217
        %v1482 = vpack.c.b16 %v1226, %v1218
        %v1483 = vpack.c.b16 %v1227, %v1219
        %v1484 = vpack.c.b16 %v1228, %v1220
        %v1485 = vpack.c.b16 %v1237, %v1229
        %v1486 = vpack.c.b16 %v1238, %v1230
        %v1487 = vpack.c.b16 %v1239, %v1231
        %v1488 = vpack.c.b16 %v1240, %v1232
        %v1489 = vpack.c.b16 %v1241, %v1233
        %v1490 = vpack.c.b16 %v1242, %v1234
        %v1491 = vpack.c.b16 %v1243, %v1235
        %v1492 = vpack.c.b16 %v1244, %v1236
        %v1493 = vpack.c.b16 %v1253, %v1245
        %v1494 = vpack.c.b16 %v1254, %v1246
        %v1495 = vpack.c.b16 %v1255, %v1247
        %v1496 = vpack.c.b16 %v1256, %v1248
        %v1497 = vpack.c.b16 %v1257, %v1249
        %v1498 = vpack.c.b16 %v1258, %v1250
        %v1499 = vpack.c.b16 %v1259, %v1251
        %v1500 = vpack.c.b16 %v1260, %v1252
        %v1501 = vpack.c.b16 %v1269, %v1261
        %v1502 = vpack.c.b16 %v1270, %v1262
        %v1503 = vpack.c.b16 %v1271, %v1263
        %v1504 = vpack.c.b16 %v1272, %v1264
        %v1505 = vpack.c.b16 %v1273, %v1265
        %v1506 = vpack.c.b16 %v1274, %v1266
        %v1507 = vpack.c.b16 %v1275, %v1267
        %v1508 = vpack.c.b16 %v1276, %v1268
        %v1509 = vpack.c.b16 %v1285, %v1277
        %v1510 = vpack.c.b16 %v1286, %v1278
        %v1511 = vpack.c.b16 %v1287, %v1279
        %v1512 = vpack.c.b16 %v1288, %v1280
        %v1513 = vpack.c.b16 %v1289, %v1281
        %v1514 = vpack.c.b16 %v1290, %v1282
        %v1515 = vpack.c.b16 %v1291, %v1283
        %v1516 = vpack.c.b16 %v1292, %v1284
        %v1517 = vpack.c.b16 %v1301, %v1293
        %v1518 = vpack.c.b16 %v1302, %v1294
        %v1519 = vpack.c.b16 %v1303, %v1295
        %v1520 = vpack.c.b16 %v1304, %v1296
        %v1521 = vpack.c.b16 %v1305, %v1297
        %v1522 = vpack.c.b16 %v1306, %v1298
        %v1523 = vpack.c.b16 %v1307, %v1299
        %v1524 = vpack.c.b16 %v1308, %v1300
        %v1525 = vpack.c.b16 %v1317, %v1309
        %v1526 = vpack.c.b16 %v1318, %v1310
        %v1527 = vpack.c.b16 %v1319, %v1311
        %v1528 = vpack.c.b16 %v1320, %v1312
        %v1529 = vpack.c.b16 %v1321, %v1313
        %v1530 = vpack.c.b16 %v1322, %v1314
        %v1531 = vpack.c.b16 %v1323, %v1315
        %v1532 = vpack.c.b16 %v1324, %v1316
        %v1533 = vpack.c.b16 %v1333, %v1325
        %v1534 = vpack.c.b16 %v1334, %v1326
        %v1535 = vpack.c.b16 %v1335, %v1327
        %v1536 = vpack.c.b16 %v1336, %v1328
        %v1537 = vpack.c.b16 %v1337, %v1329
        %v1538 = vpack.c.b16 %v1338, %v1330
        %v1539 = vpack.c.b16 %v1339, %v1331
        %v1540 = vpack.c.b16 %v1340, %v1332
        %v1541 = vpack.c.b16 %v1349, %v1341
        %v1542 = vpack.c.b16 %v1350, %v1342
        %v1543 = vpack.c.b16 %v1351, %v1343
        %v1544 = vpack.c.b16 %v1352, %v1344
        %v1545 = vpack.c.b16 %v1353, %v1345
        %v1546 = vpack.c.b16 %v1354, %v1346
        %v1547 = vpack.c.b16 %v1355, %v1347
        %v1548 = vpack.c.b16 %v1356, %v1348
        %v1549 = vpack.c.b16 %v1365, %v1357
        %v1550 = vpack.c.b16 %v1366, %v1358
        %v1551 = vpack.c.b16 %v1367, %v1359
        %v1552 = vpack.c.b16 %v1368, %v1360
        %v1553 = vpack.c.b16 %v1369, %v1361
        %v1554 = vpack.c.b16 %v1370, %v1362
        %v1555 = vpack.c.b16 %v1371, %v1363
        %v1556 = vpack.c.b16 %v1372, %v1364
        %v1557 = vpack.c.b16 %v1381, %v1373
        %v1558 = vpack.c.b16 %v1382, %v1374
        %v1559 = vpack.c.b16 %v1383, %v1375
        %v1560 = vpack.c.b16 %v1384, %v1376
        %v1561 = vpack.c.b16 %v1385, %v1377
        %v1562 = vpack.c.b16 %v1386, %v1378
        %v1563 = vpack.c.b16 %v1387, %v1379
        %v1564 = vpack.c.b16 %v1388, %v1380
        %v1565 = vpack.c.b16 %v1397, %v1389
        %v1566 = vpack.c.b16 %v1398, %v1390
        %v1567 = vpack.c.b16 %v1399, %v1391
        %v1568 = vpack.c.b16 %v1400, %v1392
        %v1569 = vpack.c.b16 %v1401, %v1393
        %v1570 = vpack.c.b16 %v1402, %v1394
        %v1571 = vpack.c.b16 %v1403, %v1395
        %v1572 = vpack.c.b16 %v1404, %v1396
        %v1573 = vpack.c.b16 %v1413, %v1405
        %v1574 = vpack.c.b16 %v1414, %v1406
        %v1575 = vpack.c.b16 %v1415, %v1407
        %v1576 = vpack.c.b16 %v1416, %v1408
        %v1577 = vpack.c.b16 %v1417, %v1409
        %v1578 = vpack.c.b16 %v1418, %v1410
        %v1579 = vpack.c.b16 %v1419, %v1411
        %v1580 = vpack.c.b16 %v1420, %v1412
        %v1581 = vpack.c.b16 %v1429, %v1421
        %v1582 = vpack.c.b16 %v1430, %v1422
        %v1583 = vpack.c.b16 %v1431, %v1423
        %v1584 = vpack.c.b16 %v1432, %v1424
        %v1585 = vpack.c.b16 %v1433, %v1425
        %v1586 = vpack.c.b16 %v1434, %v1426
        %v1587 = vpack.c.b16 %v1435, %v1427
        %v1588 = vpack.c.b16 %v1436, %v1428
        %v1589 = vpack.c.b16 %v1445, %v1437
        %v1590 = vpack.c.b16 %v1446, %v1438
        %v1591 = vpack.c.b16 %v1447, %v1439
        %v1592 = vpack.c.b16 %v1448, %v1440
        %v1593 = vpack.c.b16 %v1449, %v1441
        %v1594 = vpack.c.b16 %v1450, %v1442
        %v1595 = vpack.c.b16 %v1451, %v1443
        %v1596 = vpack.c.b16 %v1452, %v1444
        %vm1741 = vcmask 261120
        %v1743 = vsel %vm1741, %v943, 0
        %v1746 = vsel %vm1741, %v946, 0
        %v1749 = vsel %vm1741, %v949, 0
        %v1752 = vsel %vm1741, %v952, 0
        %v1755 = vsel %vm1741, %v955, 0
        %v1758 = vsel %vm1741, %v958, 0
        %v1761 = vsel %vm1741, %v961, 0
        %v1764 = vsel %vm1741, %v964, 0
        %v1767 = vsel %vm1741, %v967, 0
        %v1770 = vsel %vm1741, %v970, 0
        %v1773 = vsel %vm1741, %v973, 0
        %v1776 = vsel %vm1741, %v976, 0
        %v1779 = vsel %vm1741, %v979, 0
        %v1782 = vsel %vm1741, %v982, 0
        %v1785 = vsel %vm1741, %v985, 0
        %v1788 = vsel %vm1741, %v988, 0
        %1790 = vmatprep.subr.bf16.mxu0 %v1454
        %1791 = vmatpush1.bf16.msra.mxu0 %v1453
        %1792 = vmatprep.subr.bf16.mxu0 %v1462
        %1793 = vmatpush1.bf16.msra.mxu0 %v1461
        %1794 = vmatprep.subr.bf16.mxu0 %v1470
        %1795 = vmatpush1.bf16.msra.mxu0 %v1469
        %1796 = vmatprep.subr.bf16.mxu0 %v1478
        %1797 = vmatpush1.bf16.msra.mxu0 %v1477
        %1798 = vmatprep.subr.bf16.mxu0 %v1486
        %1799 = vmatpush1.bf16.msra.mxu0 %v1485
        %1800 = vmatprep.subr.bf16.mxu0 %v1494
        %1801 = vmatpush1.bf16.msra.mxu0 %v1493
        %1802 = vmatprep.subr.bf16.mxu0 %v1502
        %1803 = vmatpush1.bf16.msra.mxu0 %v1501
        %1804 = vmatprep.subr.bf16.mxu0 %v1510
        %1805 = vmatpush1.bf16.msra.mxu0 %v1509
        %1806 = vmatprep.subr.bf16.mxu0 %v1518
        %1807 = vmatpush1.bf16.msra.mxu0 %v1517
        %1808 = vmatprep.subr.bf16.mxu0 %v1526
        %1809 = vmatpush1.bf16.msra.mxu0 %v1525
        %1810 = vmatprep.subr.bf16.mxu0 %v1534
        %1811 = vmatpush1.bf16.msra.mxu0 %v1533
        %1812 = vmatprep.subr.bf16.mxu0 %v1542
        %1813 = vmatpush1.bf16.msra.mxu0 %v1541
        %1814 = vmatprep.subr.bf16.mxu0 %v1550
        %1815 = vmatpush1.bf16.msra.mxu0 %v1549
        %1816 = vmatprep.subr.bf16.mxu0 %v1558
        %1817 = vmatpush1.bf16.msra.mxu0 %v1557
        %1818 = vmatprep.subr.bf16.mxu0 %v1566
        %1819 = vmatpush1.bf16.msra.mxu0 %v1565
        %1820 = vmatprep.subr.bf16.mxu0 %v1574
        %1821 = vmatpush1.bf16.msra.mxu0 %v1573
        %1822 = vmatprep.mubr.bf16.mxu0 %v942
        %1823 = vmatmul.mubr.bf16.gmra.mrb[0].mxu0 %v941
        %v1824 = vpop.f32.mrb[0].mxu0
        %v1825 = vadd.f32 %v744, %v1824
        %v1826 = vpop.f32.mrb[0].mxu0
        %v1827 = vadd.f32 %v748, %v1826
        %v1828 = vpop.f32.mrb[0].mxu0
        %v1829 = vadd.f32 %v744, %v1828
        %v1830 = vpop.f32.mrb[0].mxu0
        %v1831 = vadd.f32 %v748, %v1830
        %1832 = vmatprep.mubr.bf16.mxu0 %v945
        %1833 = vmatmul.mubr.bf16.gmra.mrb[0].mxu0 %v944
        %v1834 = vpop.f32.mrb[0].mxu0
        %v1835 = vadd.f32 %v744, %v1834
        %v1836 = vpop.f32.mrb[0].mxu0
        %v1837 = vadd.f32 %v748, %v1836
        %v1838 = vpop.f32.mrb[0].mxu0
        %v1839 = vadd.f32 %v744, %v1838
        %v1840 = vpop.f32.mrb[0].mxu0
        %v1841 = vadd.f32 %v748, %v1840
        %1842 = vmatprep.mubr.bf16.mxu0 %v948
        %1843 = vmatmul.mubr.bf16.gmra.mrb[0].mxu0 %v947
        %v1844 = vpop.f32.mrb[0].mxu0
        %v1845 = vadd.f32 %v744, %v1844
        %v1846 = vpop.f32.mrb[0].mxu0
        %v1847 = vadd.f32 %v748, %v1846
        %v1848 = vpop.f32.mrb[0].mxu0
        %v1849 = vadd.f32 %v744, %v1848
        %v1850 = vpop.f32.mrb[0].mxu0
        %v1851 = vadd.f32 %v748, %v1850
        %1852 = vmatprep.mubr.bf16.mxu0 %v951
        %1853 = vmatmul.mubr.bf16.gmra.mrb[0].mxu0 %v950
        %v1854 = vpop.f32.mrb[0].mxu0
        %v1855 = vadd.f32 %v744, %v1854
        %v1856 = vpop.f32.mrb[0].mxu0
        %v1857 = vadd.f32 %v748, %v1856
        %v1858 = vpop.f32.mrb[0].mxu0
        %v1859 = vadd.f32 %v744, %v1858
        %v1860 = vpop.f32.mrb[0].mxu0
        %v1861 = vadd.f32 %v748, %v1860
        %1862 = vmatprep.mubr.bf16.mxu0 %v954
        %1863 = vmatmul.mubr.bf16.gmra.mrb[0].mxu0 %v953
        %v1864 = vpop.f32.mrb[0].mxu0
        %v1865 = vadd.f32 %v744, %v1864
        %v1866 = vpop.f32.mrb[0].mxu0
        %v1867 = vadd.f32 %v748, %v1866
        %v1868 = vpop.f32.mrb[0].mxu0
        %v1869 = vadd.f32 %v744, %v1868
        %v1870 = vpop.f32.mrb[0].mxu0
        %v1871 = vadd.f32 %v748, %v1870
        %1872 = vmatprep.mubr.bf16.mxu0 %v957
        %1873 = vmatmul.mubr.bf16.gmra.mrb[0].mxu0 %v956
        %v1874 = vpop.f32.mrb[0].mxu0
        %v1875 = vadd.f32 %v744, %v1874
        %v1876 = vpop.f32.mrb[0].mxu0
        %v1877 = vadd.f32 %v748, %v1876
        %v1878 = vpop.f32.mrb[0].mxu0
        %v1879 = vadd.f32 %v744, %v1878
        %v1880 = vpop.f32.mrb[0].mxu0
        %v1881 = vadd.f32 %v748, %v1880
        %1882 = vmatprep.mubr.bf16.mxu0 %v960
        %1883 = vmatmul.mubr.bf16.gmra.mrb[0].mxu0 %v959
        %v1884 = vpop.f32.mrb[0].mxu0
        %v1885 = vadd.f32 %v744, %v1884
        %v1886 = vpop.f32.mrb[0].mxu0
        %v1887 = vadd.f32 %v748, %v1886
        %v1888 = vpop.f32.mrb[0].mxu0
        %v1889 = vadd.f32 %v744, %v1888
        %v1890 = vpop.f32.mrb[0].mxu0
        %v1891 = vadd.f32 %v748, %v1890
        %1892 = vmatprep.mubr.bf16.mxu0 %v963
        %1893 = vmatmul.mubr.bf16.gmra.mrb[0].mxu0 %v962
        %v1894 = vpop.f32.mrb[0].mxu0
        %v1895 = vadd.f32 %v744, %v1894
        %v1896 = vpop.f32.mrb[0].mxu0
        %v1897 = vadd.f32 %v748, %v1896
        %v1898 = vpop.f32.mrb[0].mxu0
        %v1899 = vadd.f32 %v744, %v1898
        %v1900 = vpop.f32.mrb[0].mxu0
        %v1901 = vadd.f32 %v748, %v1900
        %1902 = vmatprep.mubr.bf16.mxu0 %v966
        %1903 = vmatmul.mubr.bf16.gmra.mrb[0].mxu0 %v965
        %v1904 = vpop.f32.mrb[0].mxu0
        %v1905 = vadd.f32 %v744, %v1904
        %v1906 = vpop.f32.mrb[0].mxu0
        %v1907 = vadd.f32 %v748, %v1906
        %v1908 = vpop.f32.mrb[0].mxu0
        %v1909 = vadd.f32 %v744, %v1908
        %v1910 = vpop.f32.mrb[0].mxu0
        %v1911 = vadd.f32 %v748, %v1910
        %1912 = vmatprep.mubr.bf16.mxu0 %v969
        %1913 = vmatmul.mubr.bf16.gmra.mrb[0].mxu0 %v968
        %v1914 = vpop.f32.mrb[0].mxu0
        %v1915 = vadd.f32 %v744, %v1914
        %v1916 = vpop.f32.mrb[0].mxu0
        %v1917 = vadd.f32 %v748, %v1916
        %v1918 = vpop.f32.mrb[0].mxu0
        %v1919 = vadd.f32 %v744, %v1918
        %v1920 = vpop.f32.mrb[0].mxu0
        %v1921 = vadd.f32 %v748, %v1920
        %1922 = vmatprep.mubr.bf16.mxu0 %v972
        %1923 = vmatmul.mubr.bf16.gmra.mrb[0].mxu0 %v971
        %v1924 = vpop.f32.mrb[0].mxu0
        %v1925 = vadd.f32 %v744, %v1924
        %v1926 = vpop.f32.mrb[0].mxu0
        %v1927 = vadd.f32 %v748, %v1926
        %v1928 = vpop.f32.mrb[0].mxu0
        %v1929 = vadd.f32 %v744, %v1928
        %v1930 = vpop.f32.mrb[0].mxu0
        %v1931 = vadd.f32 %v748, %v1930
        %1932 = vmatprep.mubr.bf16.mxu0 %v975
        %1933 = vmatmul.mubr.bf16.gmra.mrb[0].mxu0 %v974
        %v1934 = vpop.f32.mrb[0].mxu0
        %v1935 = vadd.f32 %v744, %v1934
        %v1936 = vpop.f32.mrb[0].mxu0
        %v1937 = vadd.f32 %v748, %v1936
        %v1938 = vpop.f32.mrb[0].mxu0
        %v1939 = vadd.f32 %v744, %v1938
        %v1940 = vpop.f32.mrb[0].mxu0
        %v1941 = vadd.f32 %v748, %v1940
        %1942 = vmatprep.mubr.bf16.mxu0 %v978
        %1943 = vmatmul.mubr.bf16.gmra.mrb[0].mxu0 %v977
        %v1944 = vpop.f32.mrb[0].mxu0
        %v1945 = vadd.f32 %v744, %v1944
        %v1946 = vpop.f32.mrb[0].mxu0
        %v1947 = vadd.f32 %v748, %v1946
        %v1948 = vpop.f32.mrb[0].mxu0
        %v1949 = vadd.f32 %v744, %v1948
        %v1950 = vpop.f32.mrb[0].mxu0
        %v1951 = vadd.f32 %v748, %v1950
        %1952 = vmatprep.mubr.bf16.mxu0 %v981
        %1953 = vmatmul.mubr.bf16.gmra.mrb[0].mxu0 %v980
        %v1954 = vpop.f32.mrb[0].mxu0
        %v1955 = vadd.f32 %v744, %v1954
        %v1956 = vpop.f32.mrb[0].mxu0
        %v1957 = vadd.f32 %v748, %v1956
        %v1958 = vpop.f32.mrb[0].mxu0
        %v1959 = vadd.f32 %v744, %v1958
        %v1960 = vpop.f32.mrb[0].mxu0
        %v1961 = vadd.f32 %v748, %v1960
        %1962 = vmatprep.mubr.bf16.mxu0 %v984
        %1963 = vmatmul.mubr.bf16.gmra.mrb[0].mxu0 %v983
        %v1964 = vpop.f32.mrb[0].mxu0
        %v1965 = vadd.f32 %v744, %v1964
        %v1966 = vpop.f32.mrb[0].mxu0
        %v1967 = vadd.f32 %v748, %v1966
        %v1968 = vpop.f32.mrb[0].mxu0
        %v1969 = vadd.f32 %v744, %v1968
        %v1970 = vpop.f32.mrb[0].mxu0
        %v1971 = vadd.f32 %v748, %v1970
        %1972 = vmatprep.mubr.bf16.mxu0 %v987
        %1973 = vmatmul.mubr.bf16.gmra.mrb[0].mxu0 %v986
        %v1974 = vpop.f32.mrb[0].mxu0
        %v1975 = vadd.f32 %v744, %v1974
        %v1976 = vpop.f32.mrb[0].mxu0
        %v1977 = vadd.f32 %v748, %v1976
        %v1978 = vpop.f32.mrb[0].mxu0
        %v1979 = vadd.f32 %v744, %v1978
        %v1980 = vpop.f32.mrb[0].mxu0
        %v1981 = vadd.f32 %v748, %v1980
        %1982 = vdwg.mxu0
        %1983 = vmatprep.subr.bf16.mxu0 %v1582
        %1984 = vmatpush1.bf16.msra.mxu0 %v1581
        %1985 = vmatprep.subr.bf16.mxu0 %v1590
        %1986 = vmatpush1.bf16.msra.mxu0 %v1589
        %1987 = vmatprep.subr.bf16.mxu0 0
        %1988 = vmatpush1.bf16.msra.mxu0 0
        %1989 = vmatprep.subr.bf16.mxu0 0
        %1990 = vmatpush1.bf16.msra.mxu0 0
        %1991 = vmatprep.subr.bf16.mxu0 0
        %1992 = vmatpush1.bf16.msra.mxu0 0
        %1993 = vmatprep.subr.bf16.mxu0 0
        %1994 = vmatpush1.bf16.msra.mxu0 0
        %1995 = vmatprep.subr.bf16.mxu0 0
        %1996 = vmatpush1.bf16.msra.mxu0 0
        %1997 = vmatprep.subr.bf16.mxu0 0
        %1998 = vmatpush1.bf16.msra.mxu0 0
        %1999 = vmatprep.subr.bf16.mxu0 0
        %2000 = vmatpush1.bf16.msra.mxu0 0
        %2001 = vmatprep.subr.bf16.mxu0 0
        %2002 = vmatpush1.bf16.msra.mxu0 0
        %2003 = vmatprep.subr.bf16.mxu0 0
        %2004 = vmatpush1.bf16.msra.mxu0 0
        %2005 = vmatprep.subr.bf16.mxu0 0
        %2006 = vmatpush1.bf16.msra.mxu0 0
        %2007 = vmatprep.subr.bf16.mxu0 0
        %2008 = vmatpush1.bf16.msra.mxu0 0
        %2009 = vmatprep.subr.bf16.mxu0 0
        %2010 = vmatpush1.bf16.msra.mxu0 0
        %2011 = vmatprep.subr.bf16.mxu0 0
        %2012 = vmatpush1.bf16.msra.mxu0 0
        %2013 = vmatprep.subr.bf16.mxu0 0
        %2014 = vmatpush1.bf16.msra.mxu0 0
        %2015 = vmatprep.mubr.bf16.mxu0 0
        %2016 = vmatmul.mubr.bf16.gmra.mrb[0].mxu0 %v1743
        %v2017 = vpop.f32.mrb[0].mxu0
        %v2018 = vadd.f32 %v1825, %v2017
        %v2019 = vpop.f32.mrb[0].mxu0
        %v2020 = vadd.f32 %v1827, %v2019
        %v2021 = vpop.f32.mrb[0].mxu0
        %v2022 = vadd.f32 %v1829, %v2021
        %v2023 = vpop.f32.mrb[0].mxu0
        %v2024 = vadd.f32 %v1831, %v2023
        %2025 = vmatprep.mubr.bf16.mxu0 0
        %2026 = vmatmul.mubr.bf16.gmra.mrb[0].mxu0 %v1746
        %v2027 = vpop.f32.mrb[0].mxu0
        %v2028 = vadd.f32 %v1835, %v2027
        %v2029 = vpop.f32.mrb[0].mxu0
        %v2030 = vadd.f32 %v1837, %v2029
        %v2031 = vpop.f32.mrb[0].mxu0
        %v2032 = vadd.f32 %v1839, %v2031
        %v2033 = vpop.f32.mrb[0].mxu0
        %v2034 = vadd.f32 %v1841, %v2033
        %2035 = vmatprep.mubr.bf16.mxu0 0
        %2036 = vmatmul.mubr.bf16.gmra.mrb[0].mxu0 %v1749
        %v2037 = vpop.f32.mrb[0].mxu0
        %v2038 = vadd.f32 %v1845, %v2037
        %v2039 = vpop.f32.mrb[0].mxu0
        %v2040 = vadd.f32 %v1847, %v2039
        %v2041 = vpop.f32.mrb[0].mxu0
        %v2042 = vadd.f32 %v1849, %v2041
        %v2043 = vpop.f32.mrb[0].mxu0
        %v2044 = vadd.f32 %v1851, %v2043
        %2045 = vmatprep.mubr.bf16.mxu0 0
        %2046 = vmatmul.mubr.bf16.gmra.mrb[0].mxu0 %v1752
        %v2047 = vpop.f32.mrb[0].mxu0
        %v2048 = vadd.f32 %v1855, %v2047
        %v2049 = vpop.f32.mrb[0].mxu0
        %v2050 = vadd.f32 %v1857, %v2049
        %v2051 = vpop.f32.mrb[0].mxu0
        %v2052 = vadd.f32 %v1859, %v2051
        %v2053 = vpop.f32.mrb[0].mxu0
        %v2054 = vadd.f32 %v1861, %v2053
        %2055 = vmatprep.mubr.bf16.mxu0 0
        %2056 = vmatmul.mubr.bf16.gmra.mrb[0].mxu0 %v1755
        %v2057 = vpop.f32.mrb[0].mxu0
        %v2058 = vadd.f32 %v1865, %v2057
        %v2059 = vpop.f32.mrb[0].mxu0
        %v2060 = vadd.f32 %v1867, %v2059
        %v2061 = vpop.f32.mrb[0].mxu0
        %v2062 = vadd.f32 %v1869, %v2061
        %v2063 = vpop.f32.mrb[0].mxu0
        %v2064 = vadd.f32 %v1871, %v2063
        %2065 = vmatprep.mubr.bf16.mxu0 0
        %2066 = vmatmul.mubr.bf16.gmra.mrb[0].mxu0 %v1758
        %v2067 = vpop.f32.mrb[0].mxu0
        %v2068 = vadd.f32 %v1875, %v2067
        %v2069 = vpop.f32.mrb[0].mxu0
        %v2070 = vadd.f32 %v1877, %v2069
        %v2071 = vpop.f32.mrb[0].mxu0
        %v2072 = vadd.f32 %v1879, %v2071
        %v2073 = vpop.f32.mrb[0].mxu0
        %v2074 = vadd.f32 %v1881, %v2073
        %2075 = vmatprep.mubr.bf16.mxu0 0
        %2076 = vmatmul.mubr.bf16.gmra.mrb[0].mxu0 %v1761
        %v2077 = vpop.f32.mrb[0].mxu0
        %v2078 = vadd.f32 %v1885, %v2077
        %v2079 = vpop.f32.mrb[0].mxu0
        %v2080 = vadd.f32 %v1887, %v2079
        %v2081 = vpop.f32.mrb[0].mxu0
        %v2082 = vadd.f32 %v1889, %v2081
        %v2083 = vpop.f32.mrb[0].mxu0
        %v2084 = vadd.f32 %v1891, %v2083
        %2085 = vmatprep.mubr.bf16.mxu0 0
        %2086 = vmatmul.mubr.bf16.gmra.mrb[0].mxu0 %v1764
        %v2087 = vpop.f32.mrb[0].mxu0
        %v2088 = vadd.f32 %v1895, %v2087
        %v2089 = vpop.f32.mrb[0].mxu0
        %v2090 = vadd.f32 %v1897, %v2089
        %v2091 = vpop.f32.mrb[0].mxu0
        %v2092 = vadd.f32 %v1899, %v2091
        %v2093 = vpop.f32.mrb[0].mxu0
        %v2094 = vadd.f32 %v1901, %v2093
        %2095 = vmatprep.mubr.bf16.mxu0 0
        %2096 = vmatmul.mubr.bf16.gmra.mrb[0].mxu0 %v1767
        %v2097 = vpop.f32.mrb[0].mxu0
        %v2098 = vadd.f32 %v1905, %v2097
        %v2099 = vpop.f32.mrb[0].mxu0
        %v2100 = vadd.f32 %v1907, %v2099
        %v2101 = vpop.f32.mrb[0].mxu0
        %v2102 = vadd.f32 %v1909, %v2101
        %v2103 = vpop.f32.mrb[0].mxu0
        %v2104 = vadd.f32 %v1911, %v2103
        %2105 = vmatprep.mubr.bf16.mxu0 0
        %2106 = vmatmul.mubr.bf16.gmra.mrb[0].mxu0 %v1770
        %v2107 = vpop.f32.mrb[0].mxu0
        %v2108 = vadd.f32 %v1915, %v2107
        %v2109 = vpop.f32.mrb[0].mxu0
        %v2110 = vadd.f32 %v1917, %v2109
        %v2111 = vpop.f32.mrb[0].mxu0
        %v2112 = vadd.f32 %v1919, %v2111
        %v2113 = vpop.f32.mrb[0].mxu0
        %v2114 = vadd.f32 %v1921, %v2113
        %2115 = vmatprep.mubr.bf16.mxu0 0
        %2116 = vmatmul.mubr.bf16.gmra.mrb[0].mxu0 %v1773
        %v2117 = vpop.f32.mrb[0].mxu0
        %v2118 = vadd.f32 %v1925, %v2117
        %v2119 = vpop.f32.mrb[0].mxu0
        %v2120 = vadd.f32 %v1927, %v2119
        %v2121 = vpop.f32.mrb[0].mxu0
        %v2122 = vadd.f32 %v1929, %v2121
        %v2123 = vpop.f32.mrb[0].mxu0
        %v2124 = vadd.f32 %v1931, %v2123
        %2125 = vmatprep.mubr.bf16.mxu0 0
        %2126 = vmatmul.mubr.bf16.gmra.mrb[0].mxu0 %v1776
        %v2127 = vpop.f32.mrb[0].mxu0
        %v2128 = vadd.f32 %v1935, %v2127
        %v2129 = vpop.f32.mrb[0].mxu0
        %v2130 = vadd.f32 %v1937, %v2129
        %v2131 = vpop.f32.mrb[0].mxu0
        %v2132 = vadd.f32 %v1939, %v2131
        %v2133 = vpop.f32.mrb[0].mxu0
        %v2134 = vadd.f32 %v1941, %v2133
        %2135 = vmatprep.mubr.bf16.mxu0 0
        %2136 = vmatmul.mubr.bf16.gmra.mrb[0].mxu0 %v1779
        %v2137 = vpop.f32.mrb[0].mxu0
        %v2138 = vadd.f32 %v1945, %v2137
        %v2139 = vpop.f32.mrb[0].mxu0
        %v2140 = vadd.f32 %v1947, %v2139
        %v2141 = vpop.f32.mrb[0].mxu0
        %v2142 = vadd.f32 %v1949, %v2141
        %v2143 = vpop.f32.mrb[0].mxu0
        %v2144 = vadd.f32 %v1951, %v2143
        %2145 = vmatprep.mubr.bf16.mxu0 0
        %2146 = vmatmul.mubr.bf16.gmra.mrb[0].mxu0 %v1782
        %v2147 = vpop.f32.mrb[0].mxu0
        %v2148 = vadd.f32 %v1955, %v2147
        %v2149 = vpop.f32.mrb[0].mxu0
        %v2150 = vadd.f32 %v1957, %v2149
        %v2151 = vpop.f32.mrb[0].mxu0
        %v2152 = vadd.f32 %v1959, %v2151
        %v2153 = vpop.f32.mrb[0].mxu0
        %v2154 = vadd.f32 %v1961, %v2153
        %2155 = vmatprep.mubr.bf16.mxu0 0
        %2156 = vmatmul.mubr.bf16.gmra.mrb[0].mxu0 %v1785
        %v2157 = vpop.f32.mrb[0].mxu0
        %v2158 = vadd.f32 %v1965, %v2157
        %v2159 = vpop.f32.mrb[0].mxu0
        %v2160 = vadd.f32 %v1967, %v2159
        %v2161 = vpop.f32.mrb[0].mxu0
        %v2162 = vadd.f32 %v1969, %v2161
        %v2163 = vpop.f32.mrb[0].mxu0
        %v2164 = vadd.f32 %v1971, %v2163
        %2165 = vmatprep.mubr.bf16.mxu0 0
        %2166 = vmatmul.mubr.bf16.gmra.mrb[0].mxu0 %v1788
        %v2167 = vpop.f32.mrb[0].mxu0
        %v2168 = vadd.f32 %v1975, %v2167
        %v2169 = vpop.f32.mrb[0].mxu0
        %v2170 = vadd.f32 %v1977, %v2169
        %v2171 = vpop.f32.mrb[0].mxu0
        %v2172 = vadd.f32 %v1979, %v2171
        %v2173 = vpop.f32.mrb[0].mxu0
        %v2174 = vadd.f32 %v1981, %v2173
        %2175 = vdwg.mxu0
        %2176 = vmatprep.subr.bf16.mxu0 %v1456
        %2177 = vmatpush1.bf16.msra.mxu0 %v1455
        %2178 = vmatprep.subr.bf16.mxu0 %v1464
        %2179 = vmatpush1.bf16.msra.mxu0 %v1463
        %2180 = vmatprep.subr.bf16.mxu0 %v1472
        %2181 = vmatpush1.bf16.msra.mxu0 %v1471
        %2182 = vmatprep.subr.bf16.mxu0 %v1480
        %2183 = vmatpush1.bf16.msra.mxu0 %v1479
        %2184 = vmatprep.subr.bf16.mxu0 %v1488
        %2185 = vmatpush1.bf16.msra.mxu0 %v1487
        %2186 = vmatprep.subr.bf16.mxu0 %v1496
        %2187 = vmatpush1.bf16.msra.mxu0 %v1495
        %2188 = vmatprep.subr.bf16.mxu0 %v1504
        %2189 = vmatpush1.bf16.msra.mxu0 %v1503
        %2190 = vmatprep.subr.bf16.mxu0 %v1512
        %2191 = vmatpush1.bf16.msra.mxu0 %v1511
        %2192 = vmatprep.subr.bf16.mxu0 %v1520
        %2193 = vmatpush1.bf16.msra.mxu0 %v1519
        %2194 = vmatprep.subr.bf16.mxu0 %v1528
        %2195 = vmatpush1.bf16.msra.mxu0 %v1527
        %2196 = vmatprep.subr.bf16.mxu0 %v1536
        %2197 = vmatpush1.bf16.msra.mxu0 %v1535
        %2198 = vmatprep.subr.bf16.mxu0 %v1544
        %2199 = vmatpush1.bf16.msra.mxu0 %v1543
        %2200 = vmatprep.subr.bf16.mxu0 %v1552
        %2201 = vmatpush1.bf16.msra.mxu0 %v1551
        %2202 = vmatprep.subr.bf16.mxu0 %v1560
        %2203 = vmatpush1.bf16.msra.mxu0 %v1559
        %2204 = vmatprep.subr.bf16.mxu0 %v1568
        %2205 = vmatpush1.bf16.msra.mxu0 %v1567
        %2206 = vmatprep.subr.bf16.mxu0 %v1576
        %2207 = vmatpush1.bf16.msra.mxu0 %v1575
        %2208 = vmatprep.mubr.bf16.mxu0 %v942
        %2209 = vmatmul.mubr.bf16.gmra.mrb[0].mxu0 %v941
        %v2210 = vpop.f32.mrb[0].mxu0
        %v2211 = vadd.f32 %v752, %v2210
        %v2212 = vpop.f32.mrb[0].mxu0
        %v2213 = vadd.f32 %v756, %v2212
        %v2214 = vpop.f32.mrb[0].mxu0
        %v2215 = vadd.f32 %v752, %v2214
        %v2216 = vpop.f32.mrb[0].mxu0
        %v2217 = vadd.f32 %v756, %v2216
        %2218 = vmatprep.mubr.bf16.mxu0 %v945
        %2219 = vmatmul.mubr.bf16.gmra.mrb[0].mxu0 %v944
        %v2220 = vpop.f32.mrb[0].mxu0
        %v2221 = vadd.f32 %v752, %v2220
        %v2222 = vpop.f32.mrb[0].mxu0
        %v2223 = vadd.f32 %v756, %v2222
        %v2224 = vpop.f32.mrb[0].mxu0
        %v2225 = vadd.f32 %v752, %v2224
        %v2226 = vpop.f32.mrb[0].mxu0
        %v2227 = vadd.f32 %v756, %v2226
        %2228 = vmatprep.mubr.bf16.mxu0 %v948
        %2229 = vmatmul.mubr.bf16.gmra.mrb[0].mxu0 %v947
        %v2230 = vpop.f32.mrb[0].mxu0
        %v2231 = vadd.f32 %v752, %v2230
        %v2232 = vpop.f32.mrb[0].mxu0
        %v2233 = vadd.f32 %v756, %v2232
        %v2234 = vpop.f32.mrb[0].mxu0
        %v2235 = vadd.f32 %v752, %v2234
        %v2236 = vpop.f32.mrb[0].mxu0
        %v2237 = vadd.f32 %v756, %v2236
        %2238 = vmatprep.mubr.bf16.mxu0 %v951
        %2239 = vmatmul.mubr.bf16.gmra.mrb[0].mxu0 %v950
        %v2240 = vpop.f32.mrb[0].mxu0
        %v2241 = vadd.f32 %v752, %v2240
        %v2242 = vpop.f32.mrb[0].mxu0
        %v2243 = vadd.f32 %v756, %v2242
        %v2244 = vpop.f32.mrb[0].mxu0
        %v2245 = vadd.f32 %v752, %v2244
        %v2246 = vpop.f32.mrb[0].mxu0
        %v2247 = vadd.f32 %v756, %v2246
        %2248 = vmatprep.mubr.bf16.mxu0 %v954
        %2249 = vmatmul.mubr.bf16.gmra.mrb[0].mxu0 %v953
        %v2250 = vpop.f32.mrb[0].mxu0
        %v2251 = vadd.f32 %v752, %v2250
        %v2252 = vpop.f32.mrb[0].mxu0
        %v2253 = vadd.f32 %v756, %v2252
        %v2254 = vpop.f32.mrb[0].mxu0
        %v2255 = vadd.f32 %v752, %v2254
        %v2256 = vpop.f32.mrb[0].mxu0
        %v2257 = vadd.f32 %v756, %v2256
        %2258 = vmatprep.mubr.bf16.mxu0 %v957
        %2259 = vmatmul.mubr.bf16.gmra.mrb[0].mxu0 %v956
        %v2260 = vpop.f32.mrb[0].mxu0
        %v2261 = vadd.f32 %v752, %v2260
        %v2262 = vpop.f32.mrb[0].mxu0
        %v2263 = vadd.f32 %v756, %v2262
        %v2264 = vpop.f32.mrb[0].mxu0
        %v2265 = vadd.f32 %v752, %v2264
        %v2266 = vpop.f32.mrb[0].mxu0
        %v2267 = vadd.f32 %v756, %v2266
        %2268 = vmatprep.mubr.bf16.mxu0 %v960
        %2269 = vmatmul.mubr.bf16.gmra.mrb[0].mxu0 %v959
        %v2270 = vpop.f32.mrb[0].mxu0
        %v2271 = vadd.f32 %v752, %v2270
        %v2272 = vpop.f32.mrb[0].mxu0
        %v2273 = vadd.f32 %v756, %v2272
        %v2274 = vpop.f32.mrb[0].mxu0
        %v2275 = vadd.f32 %v752, %v2274
        %v2276 = vpop.f32.mrb[0].mxu0
        %v2277 = vadd.f32 %v756, %v2276
        %2278 = vmatprep.mubr.bf16.mxu0 %v963
        %2279 = vmatmul.mubr.bf16.gmra.mrb[0].mxu0 %v962
        %v2280 = vpop.f32.mrb[0].mxu0
        %v2281 = vadd.f32 %v752, %v2280
        %v2282 = vpop.f32.mrb[0].mxu0
        %v2283 = vadd.f32 %v756, %v2282
        %v2284 = vpop.f32.mrb[0].mxu0
        %v2285 = vadd.f32 %v752, %v2284
        %v2286 = vpop.f32.mrb[0].mxu0
        %v2287 = vadd.f32 %v756, %v2286
        %2288 = vmatprep.mubr.bf16.mxu0 %v966
        %2289 = vmatmul.mubr.bf16.gmra.mrb[0].mxu0 %v965
        %v2290 = vpop.f32.mrb[0].mxu0
        %v2291 = vadd.f32 %v752, %v2290
        %v2292 = vpop.f32.mrb[0].mxu0
        %v2293 = vadd.f32 %v756, %v2292
        %v2294 = vpop.f32.mrb[0].mxu0
        %v2295 = vadd.f32 %v752, %v2294
        %v2296 = vpop.f32.mrb[0].mxu0
        %v2297 = vadd.f32 %v756, %v2296
        %2298 = vmatprep.mubr.bf16.mxu0 %v969
        %2299 = vmatmul.mubr.bf16.gmra.mrb[0].mxu0 %v968
        %v2300 = vpop.f32.mrb[0].mxu0
        %v2301 = vadd.f32 %v752, %v2300
        %v2302 = vpop.f32.mrb[0].mxu0
        %v2303 = vadd.f32 %v756, %v2302
        %v2304 = vpop.f32.mrb[0].mxu0
        %v2305 = vadd.f32 %v752, %v2304
        %v2306 = vpop.f32.mrb[0].mxu0
        %v2307 = vadd.f32 %v756, %v2306
        %2308 = vmatprep.mubr.bf16.mxu0 %v972
        %2309 = vmatmul.mubr.bf16.gmra.mrb[0].mxu0 %v971
        %v2310 = vpop.f32.mrb[0].mxu0
        %v2311 = vadd.f32 %v752, %v2310
        %v2312 = vpop.f32.mrb[0].mxu0
        %v2313 = vadd.f32 %v756, %v2312
        %v2314 = vpop.f32.mrb[0].mxu0
        %v2315 = vadd.f32 %v752, %v2314
        %v2316 = vpop.f32.mrb[0].mxu0
        %v2317 = vadd.f32 %v756, %v2316
        %2318 = vmatprep.mubr.bf16.mxu0 %v975
        %2319 = vmatmul.mubr.bf16.gmra.mrb[0].mxu0 %v974
        %v2320 = vpop.f32.mrb[0].mxu0
        %v2321 = vadd.f32 %v752, %v2320
        %v2322 = vpop.f32.mrb[0].mxu0
        %v2323 = vadd.f32 %v756, %v2322
        %v2324 = vpop.f32.mrb[0].mxu0
        %v2325 = vadd.f32 %v752, %v2324
        %v2326 = vpop.f32.mrb[0].mxu0
        %v2327 = vadd.f32 %v756, %v2326
        %2328 = vmatprep.mubr.bf16.mxu0 %v978
        %2329 = vmatmul.mubr.bf16.gmra.mrb[0].mxu0 %v977
        %v2330 = vpop.f32.mrb[0].mxu0
        %v2331 = vadd.f32 %v752, %v2330
        %v2332 = vpop.f32.mrb[0].mxu0
        %v2333 = vadd.f32 %v756, %v2332
        %v2334 = vpop.f32.mrb[0].mxu0
        %v2335 = vadd.f32 %v752, %v2334
        %v2336 = vpop.f32.mrb[0].mxu0
        %v2337 = vadd.f32 %v756, %v2336
        %2338 = vmatprep.mubr.bf16.mxu0 %v981
        %2339 = vmatmul.mubr.bf16.gmra.mrb[0].mxu0 %v980
        %v2340 = vpop.f32.mrb[0].mxu0
        %v2341 = vadd.f32 %v752, %v2340
        %v2342 = vpop.f32.mrb[0].mxu0
        %v2343 = vadd.f32 %v756, %v2342
        %v2344 = vpop.f32.mrb[0].mxu0
        %v2345 = vadd.f32 %v752, %v2344
        %v2346 = vpop.f32.mrb[0].mxu0
        %v2347 = vadd.f32 %v756, %v2346
        %2348 = vmatprep.mubr.bf16.mxu0 %v984
        %2349 = vmatmul.mubr.bf16.gmra.mrb[0].mxu0 %v983
        %v2350 = vpop.f32.mrb[0].mxu0
        %v2351 = vadd.f32 %v752, %v2350
        %v2352 = vpop.f32.mrb[0].mxu0
        %v2353 = vadd.f32 %v756, %v2352
        %v2354 = vpop.f32.mrb[0].mxu0
        %v2355 = vadd.f32 %v752, %v2354
        %v2356 = vpop.f32.mrb[0].mxu0
        %v2357 = vadd.f32 %v756, %v2356
        %2358 = vmatprep.mubr.bf16.mxu0 %v987
        %2359 = vmatmul.mubr.bf16.gmra.mrb[0].mxu0 %v986
        %v2360 = vpop.f32.mrb[0].mxu0
        %v2361 = vadd.f32 %v752, %v2360
        %v2362 = vpop.f32.mrb[0].mxu0
        %v2363 = vadd.f32 %v756, %v2362
        %v2364 = vpop.f32.mrb[0].mxu0
        %v2365 = vadd.f32 %v752, %v2364
        %v2366 = vpop.f32.mrb[0].mxu0
        %v2367 = vadd.f32 %v756, %v2366
        %2368 = vdwg.mxu0
        %2369 = vmatprep.subr.bf16.mxu0 %v1584
        %2370 = vmatpush1.bf16.msra.mxu0 %v1583
        %2371 = vmatprep.subr.bf16.mxu0 %v1592
        %2372 = vmatpush1.bf16.msra.mxu0 %v1591
        %2373 = vmatprep.subr.bf16.mxu0 0
        %2374 = vmatpush1.bf16.msra.mxu0 0
        %2375 = vmatprep.subr.bf16.mxu0 0
        %2376 = vmatpush1.bf16.msra.mxu0 0
        %2377 = vmatprep.subr.bf16.mxu0 0
        %2378 = vmatpush1.bf16.msra.mxu0 0
        %2379 = vmatprep.subr.bf16.mxu0 0
        %2380 = vmatpush1.bf16.msra.mxu0 0
        %2381 = vmatprep.subr.bf16.mxu0 0
        %2382 = vmatpush1.bf16.msra.mxu0 0
        %2383 = vmatprep.subr.bf16.mxu0 0
        %2384 = vmatpush1.bf16.msra.mxu0 0
        %2385 = vmatprep.subr.bf16.mxu0 0
        %2386 = vmatpush1.bf16.msra.mxu0 0
        %2387 = vmatprep.subr.bf16.mxu0 0
        %2388 = vmatpush1.bf16.msra.mxu0 0
        %2389 = vmatprep.subr.bf16.mxu0 0
        %2390 = vmatpush1.bf16.msra.mxu0 0
        %2391 = vmatprep.subr.bf16.mxu0 0
        %2392 = vmatpush1.bf16.msra.mxu0 0
        %2393 = vmatprep.subr.bf16.mxu0 0
        %2394 = vmatpush1.bf16.msra.mxu0 0
        %2395 = vmatprep.subr.bf16.mxu0 0
        %2396 = vmatpush1.bf16.msra.mxu0 0
        %2397 = vmatprep.subr.bf16.mxu0 0
        %2398 = vmatpush1.bf16.msra.mxu0 0
        %2399 = vmatprep.subr.bf16.mxu0 0
        %2400 = vmatpush1.bf16.msra.mxu0 0
        %2401 = vmatprep.mubr.bf16.mxu0 0
        %2402 = vmatmul.mubr.bf16.gmra.mrb[0].mxu0 %v1743
        %v2403 = vpop.f32.mrb[0].mxu0
        %v2404 = vadd.f32 %v2211, %v2403
        %v2405 = vpop.f32.mrb[0].mxu0
        %v2406 = vadd.f32 %v2213, %v2405
        %v2407 = vpop.f32.mrb[0].mxu0
        %v2408 = vadd.f32 %v2215, %v2407
        %v2409 = vpop.f32.mrb[0].mxu0
        %v2410 = vadd.f32 %v2217, %v2409
        %2411 = vmatprep.mubr.bf16.mxu0 0
        %2412 = vmatmul.mubr.bf16.gmra.mrb[0].mxu0 %v1746
        %v2413 = vpop.f32.mrb[0].mxu0
        %v2414 = vadd.f32 %v2221, %v2413
        %v2415 = vpop.f32.mrb[0].mxu0
        %v2416 = vadd.f32 %v2223, %v2415
        %v2417 = vpop.f32.mrb[0].mxu0
        %v2418 = vadd.f32 %v2225, %v2417
        %v2419 = vpop.f32.mrb[0].mxu0
        %v2420 = vadd.f32 %v2227, %v2419
        %2421 = vmatprep.mubr.bf16.mxu0 0
        %2422 = vmatmul.mubr.bf16.gmra.mrb[0].mxu0 %v1749
        %v2423 = vpop.f32.mrb[0].mxu0
        %v2424 = vadd.f32 %v2231, %v2423
        %v2425 = vpop.f32.mrb[0].mxu0
        %v2426 = vadd.f32 %v2233, %v2425
        %v2427 = vpop.f32.mrb[0].mxu0
        %v2428 = vadd.f32 %v2235, %v2427
        %v2429 = vpop.f32.mrb[0].mxu0
        %v2430 = vadd.f32 %v2237, %v2429
        %2431 = vmatprep.mubr.bf16.mxu0 0
        %2432 = vmatmul.mubr.bf16.gmra.mrb[0].mxu0 %v1752
        %v2433 = vpop.f32.mrb[0].mxu0
        %v2434 = vadd.f32 %v2241, %v2433
        %v2435 = vpop.f32.mrb[0].mxu0
        %v2436 = vadd.f32 %v2243, %v2435
        %v2437 = vpop.f32.mrb[0].mxu0
        %v2438 = vadd.f32 %v2245, %v2437
        %v2439 = vpop.f32.mrb[0].mxu0
        %v2440 = vadd.f32 %v2247, %v2439
        %2441 = vmatprep.mubr.bf16.mxu0 0
        %2442 = vmatmul.mubr.bf16.gmra.mrb[0].mxu0 %v1755
        %v2443 = vpop.f32.mrb[0].mxu0
        %v2444 = vadd.f32 %v2251, %v2443
        %v2445 = vpop.f32.mrb[0].mxu0
        %v2446 = vadd.f32 %v2253, %v2445
        %v2447 = vpop.f32.mrb[0].mxu0
        %v2448 = vadd.f32 %v2255, %v2447
        %v2449 = vpop.f32.mrb[0].mxu0
        %v2450 = vadd.f32 %v2257, %v2449
        %2451 = vmatprep.mubr.bf16.mxu0 0
        %2452 = vmatmul.mubr.bf16.gmra.mrb[0].mxu0 %v1758
        %v2453 = vpop.f32.mrb[0].mxu0
        %v2454 = vadd.f32 %v2261, %v2453
        %v2455 = vpop.f32.mrb[0].mxu0
        %v2456 = vadd.f32 %v2263, %v2455
        %v2457 = vpop.f32.mrb[0].mxu0
        %v2458 = vadd.f32 %v2265, %v2457
        %v2459 = vpop.f32.mrb[0].mxu0
        %v2460 = vadd.f32 %v2267, %v2459
        %2461 = vmatprep.mubr.bf16.mxu0 0
        %2462 = vmatmul.mubr.bf16.gmra.mrb[0].mxu0 %v1761
        %v2463 = vpop.f32.mrb[0].mxu0
        %v2464 = vadd.f32 %v2271, %v2463
        %v2465 = vpop.f32.mrb[0].mxu0
        %v2466 = vadd.f32 %v2273, %v2465
        %v2467 = vpop.f32.mrb[0].mxu0
        %v2468 = vadd.f32 %v2275, %v2467
        %v2469 = vpop.f32.mrb[0].mxu0
        %v2470 = vadd.f32 %v2277, %v2469
        %2471 = vmatprep.mubr.bf16.mxu0 0
        %2472 = vmatmul.mubr.bf16.gmra.mrb[0].mxu0 %v1764
        %v2473 = vpop.f32.mrb[0].mxu0
        %v2474 = vadd.f32 %v2281, %v2473
        %v2475 = vpop.f32.mrb[0].mxu0
        %v2476 = vadd.f32 %v2283, %v2475
        %v2477 = vpop.f32.mrb[0].mxu0
        %v2478 = vadd.f32 %v2285, %v2477
        %v2479 = vpop.f32.mrb[0].mxu0
        %v2480 = vadd.f32 %v2287, %v2479
        %2481 = vmatprep.mubr.bf16.mxu0 0
        %2482 = vmatmul.mubr.bf16.gmra.mrb[0].mxu0 %v1767
        %v2483 = vpop.f32.mrb[0].mxu0
        %v2484 = vadd.f32 %v2291, %v2483
        %v2485 = vpop.f32.mrb[0].mxu0
        %v2486 = vadd.f32 %v2293, %v2485
        %v2487 = vpop.f32.mrb[0].mxu0
        %v2488 = vadd.f32 %v2295, %v2487
        %v2489 = vpop.f32.mrb[0].mxu0
        %v2490 = vadd.f32 %v2297, %v2489
        %2491 = vmatprep.mubr.bf16.mxu0 0
        %2492 = vmatmul.mubr.bf16.gmra.mrb[0].mxu0 %v1770
        %v2493 = vpop.f32.mrb[0].mxu0
        %v2494 = vadd.f32 %v2301, %v2493
        %v2495 = vpop.f32.mrb[0].mxu0
        %v2496 = vadd.f32 %v2303, %v2495
        %v2497 = vpop.f32.mrb[0].mxu0
        %v2498 = vadd.f32 %v2305, %v2497
        %v2499 = vpop.f32.mrb[0].mxu0
        %v2500 = vadd.f32 %v2307, %v2499
        %2501 = vmatprep.mubr.bf16.mxu0 0
        %2502 = vmatmul.mubr.bf16.gmra.mrb[0].mxu0 %v1773
        %v2503 = vpop.f32.mrb[0].mxu0
        %v2504 = vadd.f32 %v2311, %v2503
        %v2505 = vpop.f32.mrb[0].mxu0
        %v2506 = vadd.f32 %v2313, %v2505
        %v2507 = vpop.f32.mrb[0].mxu0
        %v2508 = vadd.f32 %v2315, %v2507
        %v2509 = vpop.f32.mrb[0].mxu0
        %v2510 = vadd.f32 %v2317, %v2509
        %2511 = vmatprep.mubr.bf16.mxu0 0
        %2512 = vmatmul.mubr.bf16.gmra.mrb[0].mxu0 %v1776
        %v2513 = vpop.f32.mrb[0].mxu0
        %v2514 = vadd.f32 %v2321, %v2513
        %v2515 = vpop.f32.mrb[0].mxu0
        %v2516 = vadd.f32 %v2323, %v2515
        %v2517 = vpop.f32.mrb[0].mxu0
        %v2518 = vadd.f32 %v2325, %v2517
        %v2519 = vpop.f32.mrb[0].mxu0
        %v2520 = vadd.f32 %v2327, %v2519
        %2521 = vmatprep.mubr.bf16.mxu0 0
        %2522 = vmatmul.mubr.bf16.gmra.mrb[0].mxu0 %v1779
        %v2523 = vpop.f32.mrb[0].mxu0
        %v2524 = vadd.f32 %v2331, %v2523
        %v2525 = vpop.f32.mrb[0].mxu0
        %v2526 = vadd.f32 %v2333, %v2525
        %v2527 = vpop.f32.mrb[0].mxu0
        %v2528 = vadd.f32 %v2335, %v2527
        %v2529 = vpop.f32.mrb[0].mxu0
        %v2530 = vadd.f32 %v2337, %v2529
        %2531 = vmatprep.mubr.bf16.mxu0 0
        %2532 = vmatmul.mubr.bf16.gmra.mrb[0].mxu0 %v1782
        %v2533 = vpop.f32.mrb[0].mxu0
        %v2534 = vadd.f32 %v2341, %v2533
        %v2535 = vpop.f32.mrb[0].mxu0
        %v2536 = vadd.f32 %v2343, %v2535
        %v2537 = vpop.f32.mrb[0].mxu0
        %v2538 = vadd.f32 %v2345, %v2537
        %v2539 = vpop.f32.mrb[0].mxu0
        %v2540 = vadd.f32 %v2347, %v2539
        %2541 = vmatprep.mubr.bf16.mxu0 0
        %2542 = vmatmul.mubr.bf16.gmra.mrb[0].mxu0 %v1785
        %v2543 = vpop.f32.mrb[0].mxu0
        %v2544 = vadd.f32 %v2351, %v2543
        %v2545 = vpop.f32.mrb[0].mxu0
        %v2546 = vadd.f32 %v2353, %v2545
        %v2547 = vpop.f32.mrb[0].mxu0
        %v2548 = vadd.f32 %v2355, %v2547
        %v2549 = vpop.f32.mrb[0].mxu0
        %v2550 = vadd.f32 %v2357, %v2549
        %2551 = vmatprep.mubr.bf16.mxu0 0
        %2552 = vmatmul.mubr.bf16.gmra.mrb[0].mxu0 %v1788
        %v2553 = vpop.f32.mrb[0].mxu0
        %v2554 = vadd.f32 %v2361, %v2553
        %v2555 = vpop.f32.mrb[0].mxu0
        %v2556 = vadd.f32 %v2363, %v2555
        %v2557 = vpop.f32.mrb[0].mxu0
        %v2558 = vadd.f32 %v2365, %v2557
        %v2559 = vpop.f32.mrb[0].mxu0
        %v2560 = vadd.f32 %v2367, %v2559
        %2561 = vdwg.mxu0
        %2562 = vmatprep.subr.bf16.mxu0 %v1458
        %2563 = vmatpush1.bf16.msra.mxu0 %v1457
        %2564 = vmatprep.subr.bf16.mxu0 %v1466
        %2565 = vmatpush1.bf16.msra.mxu0 %v1465
        %2566 = vmatprep.subr.bf16.mxu0 %v1474
        %2567 = vmatpush1.bf16.msra.mxu0 %v1473
        %2568 = vmatprep.subr.bf16.mxu0 %v1482
        %2569 = vmatpush1.bf16.msra.mxu0 %v1481
        %2570 = vmatprep.subr.bf16.mxu0 %v1490
        %2571 = vmatpush1.bf16.msra.mxu0 %v1489
        %2572 = vmatprep.subr.bf16.mxu0 %v1498
        %2573 = vmatpush1.bf16.msra.mxu0 %v1497
        %2574 = vmatprep.subr.bf16.mxu0 %v1506
        %2575 = vmatpush1.bf16.msra.mxu0 %v1505
        %2576 = vmatprep.subr.bf16.mxu0 %v1514
        %2577 = vmatpush1.bf16.msra.mxu0 %v1513
        %2578 = vmatprep.subr.bf16.mxu0 %v1522
        %2579 = vmatpush1.bf16.msra.mxu0 %v1521
        %2580 = vmatprep.subr.bf16.mxu0 %v1530
        %2581 = vmatpush1.bf16.msra.mxu0 %v1529
        %2582 = vmatprep.subr.bf16.mxu0 %v1538
        %2583 = vmatpush1.bf16.msra.mxu0 %v1537
        %2584 = vmatprep.subr.bf16.mxu0 %v1546
        %2585 = vmatpush1.bf16.msra.mxu0 %v1545
        %2586 = vmatprep.subr.bf16.mxu0 %v1554
        %2587 = vmatpush1.bf16.msra.mxu0 %v1553
        %2588 = vmatprep.subr.bf16.mxu0 %v1562
        %2589 = vmatpush1.bf16.msra.mxu0 %v1561
        %2590 = vmatprep.subr.bf16.mxu0 %v1570
        %2591 = vmatpush1.bf16.msra.mxu0 %v1569
        %2592 = vmatprep.subr.bf16.mxu0 %v1578
        %2593 = vmatpush1.bf16.msra.mxu0 %v1577
        %2594 = vmatprep.mubr.bf16.mxu0 %v942
        %2595 = vmatmul.mubr.bf16.gmra.mrb[0].mxu0 %v941
        %v2596 = vpop.f32.mrb[0].mxu0
        %v2597 = vadd.f32 %v760, %v2596
        %v2598 = vpop.f32.mrb[0].mxu0
        %v2599 = vadd.f32 %v764, %v2598
        %v2600 = vpop.f32.mrb[0].mxu0
        %v2601 = vadd.f32 %v760, %v2600
        %v2602 = vpop.f32.mrb[0].mxu0
        %v2603 = vadd.f32 %v764, %v2602
        %2604 = vmatprep.mubr.bf16.mxu0 %v945
        %2605 = vmatmul.mubr.bf16.gmra.mrb[0].mxu0 %v944
        %v2606 = vpop.f32.mrb[0].mxu0
        %v2607 = vadd.f32 %v760, %v2606
        %v2608 = vpop.f32.mrb[0].mxu0
        %v2609 = vadd.f32 %v764, %v2608
        %v2610 = vpop.f32.mrb[0].mxu0
        %v2611 = vadd.f32 %v760, %v2610
        %v2612 = vpop.f32.mrb[0].mxu0
        %v2613 = vadd.f32 %v764, %v2612
        %2614 = vmatprep.mubr.bf16.mxu0 %v948
        %2615 = vmatmul.mubr.bf16.gmra.mrb[0].mxu0 %v947
        %v2616 = vpop.f32.mrb[0].mxu0
        %v2617 = vadd.f32 %v760, %v2616
        %v2618 = vpop.f32.mrb[0].mxu0
        %v2619 = vadd.f32 %v764, %v2618
        %v2620 = vpop.f32.mrb[0].mxu0
        %v2621 = vadd.f32 %v760, %v2620
        %v2622 = vpop.f32.mrb[0].mxu0
        %v2623 = vadd.f32 %v764, %v2622
        %2624 = vmatprep.mubr.bf16.mxu0 %v951
        %2625 = vmatmul.mubr.bf16.gmra.mrb[0].mxu0 %v950
        %v2626 = vpop.f32.mrb[0].mxu0
        %v2627 = vadd.f32 %v760, %v2626
        %v2628 = vpop.f32.mrb[0].mxu0
        %v2629 = vadd.f32 %v764, %v2628
        %v2630 = vpop.f32.mrb[0].mxu0
        %v2631 = vadd.f32 %v760, %v2630
        %v2632 = vpop.f32.mrb[0].mxu0
        %v2633 = vadd.f32 %v764, %v2632
        %2634 = vmatprep.mubr.bf16.mxu0 %v954
        %2635 = vmatmul.mubr.bf16.gmra.mrb[0].mxu0 %v953
        %v2636 = vpop.f32.mrb[0].mxu0
        %v2637 = vadd.f32 %v760, %v2636
        %v2638 = vpop.f32.mrb[0].mxu0
        %v2639 = vadd.f32 %v764, %v2638
        %v2640 = vpop.f32.mrb[0].mxu0
        %v2641 = vadd.f32 %v760, %v2640
        %v2642 = vpop.f32.mrb[0].mxu0
        %v2643 = vadd.f32 %v764, %v2642
        %2644 = vmatprep.mubr.bf16.mxu0 %v957
        %2645 = vmatmul.mubr.bf16.gmra.mrb[0].mxu0 %v956
        %v2646 = vpop.f32.mrb[0].mxu0
        %v2647 = vadd.f32 %v760, %v2646
        %v2648 = vpop.f32.mrb[0].mxu0
        %v2649 = vadd.f32 %v764, %v2648
        %v2650 = vpop.f32.mrb[0].mxu0
        %v2651 = vadd.f32 %v760, %v2650
        %v2652 = vpop.f32.mrb[0].mxu0
        %v2653 = vadd.f32 %v764, %v2652
        %2654 = vmatprep.mubr.bf16.mxu0 %v960
        %2655 = vmatmul.mubr.bf16.gmra.mrb[0].mxu0 %v959
        %v2656 = vpop.f32.mrb[0].mxu0
        %v2657 = vadd.f32 %v760, %v2656
        %v2658 = vpop.f32.mrb[0].mxu0
        %v2659 = vadd.f32 %v764, %v2658
        %v2660 = vpop.f32.mrb[0].mxu0
        %v2661 = vadd.f32 %v760, %v2660
        %v2662 = vpop.f32.mrb[0].mxu0
        %v2663 = vadd.f32 %v764, %v2662
        %2664 = vmatprep.mubr.bf16.mxu0 %v963
        %2665 = vmatmul.mubr.bf16.gmra.mrb[0].mxu0 %v962
        %v2666 = vpop.f32.mrb[0].mxu0
        %v2667 = vadd.f32 %v760, %v2666
        %v2668 = vpop.f32.mrb[0].mxu0
        %v2669 = vadd.f32 %v764, %v2668
        %v2670 = vpop.f32.mrb[0].mxu0
        %v2671 = vadd.f32 %v760, %v2670
        %v2672 = vpop.f32.mrb[0].mxu0
        %v2673 = vadd.f32 %v764, %v2672
        %2674 = vmatprep.mubr.bf16.mxu0 %v966
        %2675 = vmatmul.mubr.bf16.gmra.mrb[0].mxu0 %v965
        %v2676 = vpop.f32.mrb[0].mxu0
        %v2677 = vadd.f32 %v760, %v2676
        %v2678 = vpop.f32.mrb[0].mxu0
        %v2679 = vadd.f32 %v764, %v2678
        %v2680 = vpop.f32.mrb[0].mxu0
        %v2681 = vadd.f32 %v760, %v2680
        %v2682 = vpop.f32.mrb[0].mxu0
        %v2683 = vadd.f32 %v764, %v2682
        %2684 = vmatprep.mubr.bf16.mxu0 %v969
        %2685 = vmatmul.mubr.bf16.gmra.mrb[0].mxu0 %v968
        %v2686 = vpop.f32.mrb[0].mxu0
        %v2687 = vadd.f32 %v760, %v2686
        %v2688 = vpop.f32.mrb[0].mxu0
        %v2689 = vadd.f32 %v764, %v2688
        %v2690 = vpop.f32.mrb[0].mxu0
        %v2691 = vadd.f32 %v760, %v2690
        %v2692 = vpop.f32.mrb[0].mxu0
        %v2693 = vadd.f32 %v764, %v2692
        %2694 = vmatprep.mubr.bf16.mxu0 %v972
        %2695 = vmatmul.mubr.bf16.gmra.mrb[0].mxu0 %v971
        %v2696 = vpop.f32.mrb[0].mxu0
        %v2697 = vadd.f32 %v760, %v2696
        %v2698 = vpop.f32.mrb[0].mxu0
        %v2699 = vadd.f32 %v764, %v2698
        %v2700 = vpop.f32.mrb[0].mxu0
        %v2701 = vadd.f32 %v760, %v2700
        %v2702 = vpop.f32.mrb[0].mxu0
        %v2703 = vadd.f32 %v764, %v2702
        %2704 = vmatprep.mubr.bf16.mxu0 %v975
        %2705 = vmatmul.mubr.bf16.gmra.mrb[0].mxu0 %v974
        %v2706 = vpop.f32.mrb[0].mxu0
        %v2707 = vadd.f32 %v760, %v2706
        %v2708 = vpop.f32.mrb[0].mxu0
        %v2709 = vadd.f32 %v764, %v2708
        %v2710 = vpop.f32.mrb[0].mxu0
        %v2711 = vadd.f32 %v760, %v2710
        %v2712 = vpop.f32.mrb[0].mxu0
        %v2713 = vadd.f32 %v764, %v2712
        %2714 = vmatprep.mubr.bf16.mxu0 %v978
        %2715 = vmatmul.mubr.bf16.gmra.mrb[0].mxu0 %v977
        %v2716 = vpop.f32.mrb[0].mxu0
        %v2717 = vadd.f32 %v760, %v2716
        %v2718 = vpop.f32.mrb[0].mxu0
        %v2719 = vadd.f32 %v764, %v2718
        %v2720 = vpop.f32.mrb[0].mxu0
        %v2721 = vadd.f32 %v760, %v2720
        %v2722 = vpop.f32.mrb[0].mxu0
        %v2723 = vadd.f32 %v764, %v2722
        %2724 = vmatprep.mubr.bf16.mxu0 %v981
        %2725 = vmatmul.mubr.bf16.gmra.mrb[0].mxu0 %v980
        %v2726 = vpop.f32.mrb[0].mxu0
        %v2727 = vadd.f32 %v760, %v2726
        %v2728 = vpop.f32.mrb[0].mxu0
        %v2729 = vadd.f32 %v764, %v2728
        %v2730 = vpop.f32.mrb[0].mxu0
        %v2731 = vadd.f32 %v760, %v2730
        %v2732 = vpop.f32.mrb[0].mxu0
        %v2733 = vadd.f32 %v764, %v2732
        %2734 = vmatprep.mubr.bf16.mxu0 %v984
        %2735 = vmatmul.mubr.bf16.gmra.mrb[0].mxu0 %v983
        %v2736 = vpop.f32.mrb[0].mxu0
        %v2737 = vadd.f32 %v760, %v2736
        %v2738 = vpop.f32.mrb[0].mxu0
        %v2739 = vadd.f32 %v764, %v2738
        %v2740 = vpop.f32.mrb[0].mxu0
        %v2741 = vadd.f32 %v760, %v2740
        %v2742 = vpop.f32.mrb[0].mxu0
        %v2743 = vadd.f32 %v764, %v2742
        %2744 = vmatprep.mubr.bf16.mxu0 %v987
        %2745 = vmatmul.mubr.bf16.gmra.mrb[0].mxu0 %v986
        %v2746 = vpop.f32.mrb[0].mxu0
        %v2747 = vadd.f32 %v760, %v2746
        %v2748 = vpop.f32.mrb[0].mxu0
        %v2749 = vadd.f32 %v764, %v2748
        %v2750 = vpop.f32.mrb[0].mxu0
        %v2751 = vadd.f32 %v760, %v2750
        %v2752 = vpop.f32.mrb[0].mxu0
        %v2753 = vadd.f32 %v764, %v2752
        %2754 = vdwg.mxu0
        %2755 = vmatprep.subr.bf16.mxu0 %v1586
        %2756 = vmatpush1.bf16.msra.mxu0 %v1585
        %2757 = vmatprep.subr.bf16.mxu0 %v1594
        %2758 = vmatpush1.bf16.msra.mxu0 %v1593
        %2759 = vmatprep.subr.bf16.mxu0 0
        %2760 = vmatpush1.bf16.msra.mxu0 0
        %2761 = vmatprep.subr.bf16.mxu0 0
        %2762 = vmatpush1.bf16.msra.mxu0 0
        %2763 = vmatprep.subr.bf16.mxu0 0
        %2764 = vmatpush1.bf16.msra.mxu0 0
        %2765 = vmatprep.subr.bf16.mxu0 0
        %2766 = vmatpush1.bf16.msra.mxu0 0
        %2767 = vmatprep.subr.bf16.mxu0 0
        %2768 = vmatpush1.bf16.msra.mxu0 0
        %2769 = vmatprep.subr.bf16.mxu0 0
        %2770 = vmatpush1.bf16.msra.mxu0 0
        %2771 = vmatprep.subr.bf16.mxu0 0
        %2772 = vmatpush1.bf16.msra.mxu0 0
        %2773 = vmatprep.subr.bf16.mxu0 0
        %2774 = vmatpush1.bf16.msra.mxu0 0
        %2775 = vmatprep.subr.bf16.mxu0 0
        %2776 = vmatpush1.bf16.msra.mxu0 0
        %2777 = vmatprep.subr.bf16.mxu0 0
        %2778 = vmatpush1.bf16.msra.mxu0 0
        %2779 = vmatprep.subr.bf16.mxu0 0
        %2780 = vmatpush1.bf16.msra.mxu0 0
        %2781 = vmatprep.subr.bf16.mxu0 0
        %2782 = vmatpush1.bf16.msra.mxu0 0
        %2783 = vmatprep.subr.bf16.mxu0 0
        %2784 = vmatpush1.bf16.msra.mxu0 0
        %2785 = vmatprep.subr.bf16.mxu0 0
        %2786 = vmatpush1.bf16.msra.mxu0 0
        %2787 = vmatprep.mubr.bf16.mxu0 0
        %2788 = vmatmul.mubr.bf16.gmra.mrb[0].mxu0 %v1743
        %v2789 = vpop.f32.mrb[0].mxu0
        %v2790 = vadd.f32 %v2597, %v2789
        %v2791 = vpop.f32.mrb[0].mxu0
        %v2792 = vadd.f32 %v2599, %v2791
        %v2793 = vpop.f32.mrb[0].mxu0
        %v2794 = vadd.f32 %v2601, %v2793
        %v2795 = vpop.f32.mrb[0].mxu0
        %v2796 = vadd.f32 %v2603, %v2795
        %2797 = vmatprep.mubr.bf16.mxu0 0
        %2798 = vmatmul.mubr.bf16.gmra.mrb[0].mxu0 %v1746
        %v2799 = vpop.f32.mrb[0].mxu0
        %v2800 = vadd.f32 %v2607, %v2799
        %v2801 = vpop.f32.mrb[0].mxu0
        %v2802 = vadd.f32 %v2609, %v2801
        %v2803 = vpop.f32.mrb[0].mxu0
        %v2804 = vadd.f32 %v2611, %v2803
        %v2805 = vpop.f32.mrb[0].mxu0
        %v2806 = vadd.f32 %v2613, %v2805
        %2807 = vmatprep.mubr.bf16.mxu0 0
        %2808 = vmatmul.mubr.bf16.gmra.mrb[0].mxu0 %v1749
        %v2809 = vpop.f32.mrb[0].mxu0
        %v2810 = vadd.f32 %v2617, %v2809
        %v2811 = vpop.f32.mrb[0].mxu0
        %v2812 = vadd.f32 %v2619, %v2811
        %v2813 = vpop.f32.mrb[0].mxu0
        %v2814 = vadd.f32 %v2621, %v2813
        %v2815 = vpop.f32.mrb[0].mxu0
        %v2816 = vadd.f32 %v2623, %v2815
        %2817 = vmatprep.mubr.bf16.mxu0 0
        %2818 = vmatmul.mubr.bf16.gmra.mrb[0].mxu0 %v1752
        %v2819 = vpop.f32.mrb[0].mxu0
        %v2820 = vadd.f32 %v2627, %v2819
        %v2821 = vpop.f32.mrb[0].mxu0
        %v2822 = vadd.f32 %v2629, %v2821
        %v2823 = vpop.f32.mrb[0].mxu0
        %v2824 = vadd.f32 %v2631, %v2823
        %v2825 = vpop.f32.mrb[0].mxu0
        %v2826 = vadd.f32 %v2633, %v2825
        %2827 = vmatprep.mubr.bf16.mxu0 0
        %2828 = vmatmul.mubr.bf16.gmra.mrb[0].mxu0 %v1755
        %v2829 = vpop.f32.mrb[0].mxu0
        %v2830 = vadd.f32 %v2637, %v2829
        %v2831 = vpop.f32.mrb[0].mxu0
        %v2832 = vadd.f32 %v2639, %v2831
        %v2833 = vpop.f32.mrb[0].mxu0
        %v2834 = vadd.f32 %v2641, %v2833
        %v2835 = vpop.f32.mrb[0].mxu0
        %v2836 = vadd.f32 %v2643, %v2835
        %2837 = vmatprep.mubr.bf16.mxu0 0
        %2838 = vmatmul.mubr.bf16.gmra.mrb[0].mxu0 %v1758
        %v2839 = vpop.f32.mrb[0].mxu0
        %v2840 = vadd.f32 %v2647, %v2839
        %v2841 = vpop.f32.mrb[0].mxu0
        %v2842 = vadd.f32 %v2649, %v2841
        %v2843 = vpop.f32.mrb[0].mxu0
        %v2844 = vadd.f32 %v2651, %v2843
        %v2845 = vpop.f32.mrb[0].mxu0
        %v2846 = vadd.f32 %v2653, %v2845
        %2847 = vmatprep.mubr.bf16.mxu0 0
        %2848 = vmatmul.mubr.bf16.gmra.mrb[0].mxu0 %v1761
        %v2849 = vpop.f32.mrb[0].mxu0
        %v2850 = vadd.f32 %v2657, %v2849
        %v2851 = vpop.f32.mrb[0].mxu0
        %v2852 = vadd.f32 %v2659, %v2851
        %v2853 = vpop.f32.mrb[0].mxu0
        %v2854 = vadd.f32 %v2661, %v2853
        %v2855 = vpop.f32.mrb[0].mxu0
        %v2856 = vadd.f32 %v2663, %v2855
        %2857 = vmatprep.mubr.bf16.mxu0 0
        %2858 = vmatmul.mubr.bf16.gmra.mrb[0].mxu0 %v1764
        %v2859 = vpop.f32.mrb[0].mxu0
        %v2860 = vadd.f32 %v2667, %v2859
        %v2861 = vpop.f32.mrb[0].mxu0
        %v2862 = vadd.f32 %v2669, %v2861
        %v2863 = vpop.f32.mrb[0].mxu0
        %v2864 = vadd.f32 %v2671, %v2863
        %v2865 = vpop.f32.mrb[0].mxu0
        %v2866 = vadd.f32 %v2673, %v2865
        %2867 = vmatprep.mubr.bf16.mxu0 0
        %2868 = vmatmul.mubr.bf16.gmra.mrb[0].mxu0 %v1767
        %v2869 = vpop.f32.mrb[0].mxu0
        %v2870 = vadd.f32 %v2677, %v2869
        %v2871 = vpop.f32.mrb[0].mxu0
        %v2872 = vadd.f32 %v2679, %v2871
        %v2873 = vpop.f32.mrb[0].mxu0
        %v2874 = vadd.f32 %v2681, %v2873
        %v2875 = vpop.f32.mrb[0].mxu0
        %v2876 = vadd.f32 %v2683, %v2875
        %2877 = vmatprep.mubr.bf16.mxu0 0
        %2878 = vmatmul.mubr.bf16.gmra.mrb[0].mxu0 %v1770
        %v2879 = vpop.f32.mrb[0].mxu0
        %v2880 = vadd.f32 %v2687, %v2879
        %v2881 = vpop.f32.mrb[0].mxu0
        %v2882 = vadd.f32 %v2689, %v2881
        %v2883 = vpop.f32.mrb[0].mxu0
        %v2884 = vadd.f32 %v2691, %v2883
        %v2885 = vpop.f32.mrb[0].mxu0
        %v2886 = vadd.f32 %v2693, %v2885
        %2887 = vmatprep.mubr.bf16.mxu0 0
        %2888 = vmatmul.mubr.bf16.gmra.mrb[0].mxu0 %v1773
        %v2889 = vpop.f32.mrb[0].mxu0
        %v2890 = vadd.f32 %v2697, %v2889
        %v2891 = vpop.f32.mrb[0].mxu0
        %v2892 = vadd.f32 %v2699, %v2891
        %v2893 = vpop.f32.mrb[0].mxu0
        %v2894 = vadd.f32 %v2701, %v2893
        %v2895 = vpop.f32.mrb[0].mxu0
        %v2896 = vadd.f32 %v2703, %v2895
        %2897 = vmatprep.mubr.bf16.mxu0 0
        %2898 = vmatmul.mubr.bf16.gmra.mrb[0].mxu0 %v1776
        %v2899 = vpop.f32.mrb[0].mxu0
        %v2900 = vadd.f32 %v2707, %v2899
        %v2901 = vpop.f32.mrb[0].mxu0
        %v2902 = vadd.f32 %v2709, %v2901
        %v2903 = vpop.f32.mrb[0].mxu0
        %v2904 = vadd.f32 %v2711, %v2903
        %v2905 = vpop.f32.mrb[0].mxu0
        %v2906 = vadd.f32 %v2713, %v2905
        %2907 = vmatprep.mubr.bf16.mxu0 0
        %2908 = vmatmul.mubr.bf16.gmra.mrb[0].mxu0 %v1779
        %v2909 = vpop.f32.mrb[0].mxu0
        %v2910 = vadd.f32 %v2717, %v2909
        %v2911 = vpop.f32.mrb[0].mxu0
        %v2912 = vadd.f32 %v2719, %v2911
        %v2913 = vpop.f32.mrb[0].mxu0
        %v2914 = vadd.f32 %v2721, %v2913
        %v2915 = vpop.f32.mrb[0].mxu0
        %v2916 = vadd.f32 %v2723, %v2915
        %2917 = vmatprep.mubr.bf16.mxu0 0
        %2918 = vmatmul.mubr.bf16.gmra.mrb[0].mxu0 %v1782
        %v2919 = vpop.f32.mrb[0].mxu0
        %v2920 = vadd.f32 %v2727, %v2919
        %v2921 = vpop.f32.mrb[0].mxu0
        %v2922 = vadd.f32 %v2729, %v2921
        %v2923 = vpop.f32.mrb[0].mxu0
        %v2924 = vadd.f32 %v2731, %v2923
        %v2925 = vpop.f32.mrb[0].mxu0
        %v2926 = vadd.f32 %v2733, %v2925
        %2927 = vmatprep.mubr.bf16.mxu0 0
        %2928 = vmatmul.mubr.bf16.gmra.mrb[0].mxu0 %v1785
        %v2929 = vpop.f32.mrb[0].mxu0
        %v2930 = vadd.f32 %v2737, %v2929
        %v2931 = vpop.f32.mrb[0].mxu0
        %v2932 = vadd.f32 %v2739, %v2931
        %v2933 = vpop.f32.mrb[0].mxu0
        %v2934 = vadd.f32 %v2741, %v2933
        %v2935 = vpop.f32.mrb[0].mxu0
        %v2936 = vadd.f32 %v2743, %v2935
        %2937 = vmatprep.mubr.bf16.mxu0 0
        %2938 = vmatmul.mubr.bf16.gmra.mrb[0].mxu0 %v1788
        %v2939 = vpop.f32.mrb[0].mxu0
        %v2940 = vadd.f32 %v2747, %v2939
        %v2941 = vpop.f32.mrb[0].mxu0
        %v2942 = vadd.f32 %v2749, %v2941
        %v2943 = vpop.f32.mrb[0].mxu0
        %v2944 = vadd.f32 %v2751, %v2943
        %v2945 = vpop.f32.mrb[0].mxu0
        %v2946 = vadd.f32 %v2753, %v2945
        %2947 = vdwg.mxu0
        %2948 = vmatprep.subr.bf16.mxu0 %v1460
        %2949 = vmatpush1.bf16.msra.mxu0 %v1459
        %2950 = vmatprep.subr.bf16.mxu0 %v1468
        %2951 = vmatpush1.bf16.msra.mxu0 %v1467
        %2952 = vmatprep.subr.bf16.mxu0 %v1476
        %2953 = vmatpush1.bf16.msra.mxu0 %v1475
        %2954 = vmatprep.subr.bf16.mxu0 %v1484
        %2955 = vmatpush1.bf16.msra.mxu0 %v1483
        %2956 = vmatprep.subr.bf16.mxu0 %v1492
        %2957 = vmatpush1.bf16.msra.mxu0 %v1491
        %2958 = vmatprep.subr.bf16.mxu0 %v1500
        %2959 = vmatpush1.bf16.msra.mxu0 %v1499
        %2960 = vmatprep.subr.bf16.mxu0 %v1508
        %2961 = vmatpush1.bf16.msra.mxu0 %v1507
        %2962 = vmatprep.subr.bf16.mxu0 %v1516
        %2963 = vmatpush1.bf16.msra.mxu0 %v1515
        %2964 = vmatprep.subr.bf16.mxu0 %v1524
        %2965 = vmatpush1.bf16.msra.mxu0 %v1523
        %2966 = vmatprep.subr.bf16.mxu0 %v1532
        %2967 = vmatpush1.bf16.msra.mxu0 %v1531
        %2968 = vmatprep.subr.bf16.mxu0 %v1540
        %2969 = vmatpush1.bf16.msra.mxu0 %v1539
        %2970 = vmatprep.subr.bf16.mxu0 %v1548
        %2971 = vmatpush1.bf16.msra.mxu0 %v1547
        %2972 = vmatprep.subr.bf16.mxu0 %v1556
        %2973 = vmatpush1.bf16.msra.mxu0 %v1555
        %2974 = vmatprep.subr.bf16.mxu0 %v1564
        %2975 = vmatpush1.bf16.msra.mxu0 %v1563
        %2976 = vmatprep.subr.bf16.mxu0 %v1572
        %2977 = vmatpush1.bf16.msra.mxu0 %v1571
        %2978 = vmatprep.subr.bf16.mxu0 %v1580
        %2979 = vmatpush1.bf16.msra.mxu0 %v1579
        %2980 = vmatprep.mubr.bf16.mxu0 %v942
        %2981 = vmatmul.mubr.bf16.gmra.mrb[0].mxu0 %v941
        %v2982 = vpop.f32.mrb[0].mxu0
        %v2983 = vadd.f32 %v768, %v2982
        %v2984 = vpop.f32.mrb[0].mxu0
        %v2985 = vadd.f32 %v772, %v2984
        %v2986 = vpop.f32.mrb[0].mxu0
        %v2987 = vadd.f32 %v768, %v2986
        %v2988 = vpop.f32.mrb[0].mxu0
        %v2989 = vadd.f32 %v772, %v2988
        %2990 = vmatprep.mubr.bf16.mxu0 %v945
        %2991 = vmatmul.mubr.bf16.gmra.mrb[0].mxu0 %v944
        %v2992 = vpop.f32.mrb[0].mxu0
        %v2993 = vadd.f32 %v768, %v2992
        %v2994 = vpop.f32.mrb[0].mxu0
        %v2995 = vadd.f32 %v772, %v2994
        %v2996 = vpop.f32.mrb[0].mxu0
        %v2997 = vadd.f32 %v768, %v2996
        %v2998 = vpop.f32.mrb[0].mxu0
        %v2999 = vadd.f32 %v772, %v2998
        %3000 = vmatprep.mubr.bf16.mxu0 %v948
        %3001 = vmatmul.mubr.bf16.gmra.mrb[0].mxu0 %v947
        %v3002 = vpop.f32.mrb[0].mxu0
        %v3003 = vadd.f32 %v768, %v3002
        %v3004 = vpop.f32.mrb[0].mxu0
        %v3005 = vadd.f32 %v772, %v3004
        %v3006 = vpop.f32.mrb[0].mxu0
        %v3007 = vadd.f32 %v768, %v3006
        %v3008 = vpop.f32.mrb[0].mxu0
        %v3009 = vadd.f32 %v772, %v3008
        %3010 = vmatprep.mubr.bf16.mxu0 %v951
        %3011 = vmatmul.mubr.bf16.gmra.mrb[0].mxu0 %v950
        %v3012 = vpop.f32.mrb[0].mxu0
        %v3013 = vadd.f32 %v768, %v3012
        %v3014 = vpop.f32.mrb[0].mxu0
        %v3015 = vadd.f32 %v772, %v3014
        %v3016 = vpop.f32.mrb[0].mxu0
        %v3017 = vadd.f32 %v768, %v3016
        %v3018 = vpop.f32.mrb[0].mxu0
        %v3019 = vadd.f32 %v772, %v3018
        %3020 = vmatprep.mubr.bf16.mxu0 %v954
        %3021 = vmatmul.mubr.bf16.gmra.mrb[0].mxu0 %v953
        %v3022 = vpop.f32.mrb[0].mxu0
        %v3023 = vadd.f32 %v768, %v3022
        %v3024 = vpop.f32.mrb[0].mxu0
        %v3025 = vadd.f32 %v772, %v3024
        %v3026 = vpop.f32.mrb[0].mxu0
        %v3027 = vadd.f32 %v768, %v3026
        %v3028 = vpop.f32.mrb[0].mxu0
        %v3029 = vadd.f32 %v772, %v3028
        %3030 = vmatprep.mubr.bf16.mxu0 %v957
        %3031 = vmatmul.mubr.bf16.gmra.mrb[0].mxu0 %v956
        %v3032 = vpop.f32.mrb[0].mxu0
        %v3033 = vadd.f32 %v768, %v3032
        %v3034 = vpop.f32.mrb[0].mxu0
        %v3035 = vadd.f32 %v772, %v3034
        %v3036 = vpop.f32.mrb[0].mxu0
        %v3037 = vadd.f32 %v768, %v3036
        %v3038 = vpop.f32.mrb[0].mxu0
        %v3039 = vadd.f32 %v772, %v3038
        %3040 = vmatprep.mubr.bf16.mxu0 %v960
        %3041 = vmatmul.mubr.bf16.gmra.mrb[0].mxu0 %v959
        %v3042 = vpop.f32.mrb[0].mxu0
        %v3043 = vadd.f32 %v768, %v3042
        %v3044 = vpop.f32.mrb[0].mxu0
        %v3045 = vadd.f32 %v772, %v3044
        %v3046 = vpop.f32.mrb[0].mxu0
        %v3047 = vadd.f32 %v768, %v3046
        %v3048 = vpop.f32.mrb[0].mxu0
        %v3049 = vadd.f32 %v772, %v3048
        %3050 = vmatprep.mubr.bf16.mxu0 %v963
        %3051 = vmatmul.mubr.bf16.gmra.mrb[0].mxu0 %v962
        %v3052 = vpop.f32.mrb[0].mxu0
        %v3053 = vadd.f32 %v768, %v3052
        %v3054 = vpop.f32.mrb[0].mxu0
        %v3055 = vadd.f32 %v772, %v3054
        %v3056 = vpop.f32.mrb[0].mxu0
        %v3057 = vadd.f32 %v768, %v3056
        %v3058 = vpop.f32.mrb[0].mxu0
        %v3059 = vadd.f32 %v772, %v3058
        %3060 = vmatprep.mubr.bf16.mxu0 %v966
        %3061 = vmatmul.mubr.bf16.gmra.mrb[0].mxu0 %v965
        %v3062 = vpop.f32.mrb[0].mxu0
        %v3063 = vadd.f32 %v768, %v3062
        %v3064 = vpop.f32.mrb[0].mxu0
        %v3065 = vadd.f32 %v772, %v3064
        %v3066 = vpop.f32.mrb[0].mxu0
        %v3067 = vadd.f32 %v768, %v3066
        %v3068 = vpop.f32.mrb[0].mxu0
        %v3069 = vadd.f32 %v772, %v3068
        %3070 = vmatprep.mubr.bf16.mxu0 %v969
        %3071 = vmatmul.mubr.bf16.gmra.mrb[0].mxu0 %v968
        %v3072 = vpop.f32.mrb[0].mxu0
        %v3073 = vadd.f32 %v768, %v3072
        %v3074 = vpop.f32.mrb[0].mxu0
        %v3075 = vadd.f32 %v772, %v3074
        %v3076 = vpop.f32.mrb[0].mxu0
        %v3077 = vadd.f32 %v768, %v3076
        %v3078 = vpop.f32.mrb[0].mxu0
        %v3079 = vadd.f32 %v772, %v3078
        %3080 = vmatprep.mubr.bf16.mxu0 %v972
        %3081 = vmatmul.mubr.bf16.gmra.mrb[0].mxu0 %v971
        %v3082 = vpop.f32.mrb[0].mxu0
        %v3083 = vadd.f32 %v768, %v3082
        %v3084 = vpop.f32.mrb[0].mxu0
        %v3085 = vadd.f32 %v772, %v3084
        %v3086 = vpop.f32.mrb[0].mxu0
        %v3087 = vadd.f32 %v768, %v3086
        %v3088 = vpop.f32.mrb[0].mxu0
        %v3089 = vadd.f32 %v772, %v3088
        %3090 = vmatprep.mubr.bf16.mxu0 %v975
        %3091 = vmatmul.mubr.bf16.gmra.mrb[0].mxu0 %v974
        %v3092 = vpop.f32.mrb[0].mxu0
        %v3093 = vadd.f32 %v768, %v3092
        %v3094 = vpop.f32.mrb[0].mxu0
        %v3095 = vadd.f32 %v772, %v3094
        %v3096 = vpop.f32.mrb[0].mxu0
        %v3097 = vadd.f32 %v768, %v3096
        %v3098 = vpop.f32.mrb[0].mxu0
        %v3099 = vadd.f32 %v772, %v3098
        %3100 = vmatprep.mubr.bf16.mxu0 %v978
        %3101 = vmatmul.mubr.bf16.gmra.mrb[0].mxu0 %v977
        %v3102 = vpop.f32.mrb[0].mxu0
        %v3103 = vadd.f32 %v768, %v3102
        %v3104 = vpop.f32.mrb[0].mxu0
        %v3105 = vadd.f32 %v772, %v3104
        %v3106 = vpop.f32.mrb[0].mxu0
        %v3107 = vadd.f32 %v768, %v3106
        %v3108 = vpop.f32.mrb[0].mxu0
        %v3109 = vadd.f32 %v772, %v3108
        %3110 = vmatprep.mubr.bf16.mxu0 %v981
        %3111 = vmatmul.mubr.bf16.gmra.mrb[0].mxu0 %v980
        %v3112 = vpop.f32.mrb[0].mxu0
        %v3113 = vadd.f32 %v768, %v3112
        %v3114 = vpop.f32.mrb[0].mxu0
        %v3115 = vadd.f32 %v772, %v3114
        %v3116 = vpop.f32.mrb[0].mxu0
        %v3117 = vadd.f32 %v768, %v3116
        %v3118 = vpop.f32.mrb[0].mxu0
        %v3119 = vadd.f32 %v772, %v3118
        %3120 = vmatprep.mubr.bf16.mxu0 %v984
        %3121 = vmatmul.mubr.bf16.gmra.mrb[0].mxu0 %v983
        %v3122 = vpop.f32.mrb[0].mxu0
        %v3123 = vadd.f32 %v768, %v3122
        %v3124 = vpop.f32.mrb[0].mxu0
        %v3125 = vadd.f32 %v772, %v3124
        %v3126 = vpop.f32.mrb[0].mxu0
        %v3127 = vadd.f32 %v768, %v3126
        %v3128 = vpop.f32.mrb[0].mxu0
        %v3129 = vadd.f32 %v772, %v3128
        %3130 = vmatprep.mubr.bf16.mxu0 %v987
        %3131 = vmatmul.mubr.bf16.gmra.mrb[0].mxu0 %v986
        %v3132 = vpop.f32.mrb[0].mxu0
        %v3133 = vadd.f32 %v768, %v3132
        %v3134 = vpop.f32.mrb[0].mxu0
        %v3135 = vadd.f32 %v772, %v3134
        %v3136 = vpop.f32.mrb[0].mxu0
        %v3137 = vadd.f32 %v768, %v3136
        %v3138 = vpop.f32.mrb[0].mxu0
        %v3139 = vadd.f32 %v772, %v3138
        %3140 = vdwg.mxu0
        %3141 = vmatprep.subr.bf16.mxu0 %v1588
        %3142 = vmatpush1.bf16.msra.mxu0 %v1587
        %3143 = vmatprep.subr.bf16.mxu0 %v1596
        %3144 = vmatpush1.bf16.msra.mxu0 %v1595
        %3145 = vmatprep.subr.bf16.mxu0 0
        %3146 = vmatpush1.bf16.msra.mxu0 0
        %3147 = vmatprep.subr.bf16.mxu0 0
        %3148 = vmatpush1.bf16.msra.mxu0 0
        %3149 = vmatprep.subr.bf16.mxu0 0
        %3150 = vmatpush1.bf16.msra.mxu0 0
        %3151 = vmatprep.subr.bf16.mxu0 0
        %3152 = vmatpush1.bf16.msra.mxu0 0
        %3153 = vmatprep.subr.bf16.mxu0 0
        %3154 = vmatpush1.bf16.msra.mxu0 0
        %3155 = vmatprep.subr.bf16.mxu0 0
        %3156 = vmatpush1.bf16.msra.mxu0 0
        %3157 = vmatprep.subr.bf16.mxu0 0
        %3158 = vmatpush1.bf16.msra.mxu0 0
        %3159 = vmatprep.subr.bf16.mxu0 0
        %3160 = vmatpush1.bf16.msra.mxu0 0
        %3161 = vmatprep.subr.bf16.mxu0 0
        %3162 = vmatpush1.bf16.msra.mxu0 0
        %3163 = vmatprep.subr.bf16.mxu0 0
        %3164 = vmatpush1.bf16.msra.mxu0 0
        %3165 = vmatprep.subr.bf16.mxu0 0
        %3166 = vmatpush1.bf16.msra.mxu0 0
        %3167 = vmatprep.subr.bf16.mxu0 0
        %3168 = vmatpush1.bf16.msra.mxu0 0
        %3169 = vmatprep.subr.bf16.mxu0 0
        %3170 = vmatpush1.bf16.msra.mxu0 0
        %3171 = vmatprep.subr.bf16.mxu0 0
        %3172 = vmatpush1.bf16.msra.mxu0 0
        %3173 = vmatprep.mubr.bf16.mxu0 0
        %3174 = vmatmul.mubr.bf16.gmra.mrb[0].mxu0 %v1743
        %v3175 = vpop.f32.mrb[0].mxu0
        %v3176 = vadd.f32 %v2983, %v3175
        %v3177 = vpop.f32.mrb[0].mxu0
        %v3178 = vadd.f32 %v2985, %v3177
        %v3179 = vpop.f32.mrb[0].mxu0
        %v3180 = vadd.f32 %v2987, %v3179
        %v3181 = vpop.f32.mrb[0].mxu0
        %v3182 = vadd.f32 %v2989, %v3181
        %3183 = vmatprep.mubr.bf16.mxu0 0
        %3184 = vmatmul.mubr.bf16.gmra.mrb[0].mxu0 %v1746
        %v3185 = vpop.f32.mrb[0].mxu0
        %v3186 = vadd.f32 %v2993, %v3185
        %v3187 = vpop.f32.mrb[0].mxu0
        %v3188 = vadd.f32 %v2995, %v3187
        %v3189 = vpop.f32.mrb[0].mxu0
        %v3190 = vadd.f32 %v2997, %v3189
        %v3191 = vpop.f32.mrb[0].mxu0
        %v3192 = vadd.f32 %v2999, %v3191
        %3193 = vmatprep.mubr.bf16.mxu0 0
        %3194 = vmatmul.mubr.bf16.gmra.mrb[0].mxu0 %v1749
        %v3195 = vpop.f32.mrb[0].mxu0
        %v3196 = vadd.f32 %v3003, %v3195
        %v3197 = vpop.f32.mrb[0].mxu0
        %v3198 = vadd.f32 %v3005, %v3197
        %v3199 = vpop.f32.mrb[0].mxu0
        %v3200 = vadd.f32 %v3007, %v3199
        %v3201 = vpop.f32.mrb[0].mxu0
        %v3202 = vadd.f32 %v3009, %v3201
        %3203 = vmatprep.mubr.bf16.mxu0 0
        %3204 = vmatmul.mubr.bf16.gmra.mrb[0].mxu0 %v1752
        %v3205 = vpop.f32.mrb[0].mxu0
        %v3206 = vadd.f32 %v3013, %v3205
        %v3207 = vpop.f32.mrb[0].mxu0
        %v3208 = vadd.f32 %v3015, %v3207
        %v3209 = vpop.f32.mrb[0].mxu0
        %v3210 = vadd.f32 %v3017, %v3209
        %v3211 = vpop.f32.mrb[0].mxu0
        %v3212 = vadd.f32 %v3019, %v3211
        %3213 = vmatprep.mubr.bf16.mxu0 0
        %3214 = vmatmul.mubr.bf16.gmra.mrb[0].mxu0 %v1755
        %v3215 = vpop.f32.mrb[0].mxu0
        %v3216 = vadd.f32 %v3023, %v3215
        %v3217 = vpop.f32.mrb[0].mxu0
        %v3218 = vadd.f32 %v3025, %v3217
        %v3219 = vpop.f32.mrb[0].mxu0
        %v3220 = vadd.f32 %v3027, %v3219
        %v3221 = vpop.f32.mrb[0].mxu0
        %v3222 = vadd.f32 %v3029, %v3221
        %3223 = vmatprep.mubr.bf16.mxu0 0
        %3224 = vmatmul.mubr.bf16.gmra.mrb[0].mxu0 %v1758
        %v3225 = vpop.f32.mrb[0].mxu0
        %v3226 = vadd.f32 %v3033, %v3225
        %v3227 = vpop.f32.mrb[0].mxu0
        %v3228 = vadd.f32 %v3035, %v3227
        %v3229 = vpop.f32.mrb[0].mxu0
        %v3230 = vadd.f32 %v3037, %v3229
        %v3231 = vpop.f32.mrb[0].mxu0
        %v3232 = vadd.f32 %v3039, %v3231
        %3233 = vmatprep.mubr.bf16.mxu0 0
        %3234 = vmatmul.mubr.bf16.gmra.mrb[0].mxu0 %v1761
        %v3235 = vpop.f32.mrb[0].mxu0
        %v3236 = vadd.f32 %v3043, %v3235
        %v3237 = vpop.f32.mrb[0].mxu0
        %v3238 = vadd.f32 %v3045, %v3237
        %v3239 = vpop.f32.mrb[0].mxu0
        %v3240 = vadd.f32 %v3047, %v3239
        %v3241 = vpop.f32.mrb[0].mxu0
        %v3242 = vadd.f32 %v3049, %v3241
        %3243 = vmatprep.mubr.bf16.mxu0 0
        %3244 = vmatmul.mubr.bf16.gmra.mrb[0].mxu0 %v1764
        %v3245 = vpop.f32.mrb[0].mxu0
        %v3246 = vadd.f32 %v3053, %v3245
        %v3247 = vpop.f32.mrb[0].mxu0
        %v3248 = vadd.f32 %v3055, %v3247
        %v3249 = vpop.f32.mrb[0].mxu0
        %v3250 = vadd.f32 %v3057, %v3249
        %v3251 = vpop.f32.mrb[0].mxu0
        %v3252 = vadd.f32 %v3059, %v3251
        %3253 = vmatprep.mubr.bf16.mxu0 0
        %3254 = vmatmul.mubr.bf16.gmra.mrb[0].mxu0 %v1767
        %v3255 = vpop.f32.mrb[0].mxu0
        %v3256 = vadd.f32 %v3063, %v3255
        %v3257 = vpop.f32.mrb[0].mxu0
        %v3258 = vadd.f32 %v3065, %v3257
        %v3259 = vpop.f32.mrb[0].mxu0
        %v3260 = vadd.f32 %v3067, %v3259
        %v3261 = vpop.f32.mrb[0].mxu0
        %v3262 = vadd.f32 %v3069, %v3261
        %3263 = vmatprep.mubr.bf16.mxu0 0
        %3264 = vmatmul.mubr.bf16.gmra.mrb[0].mxu0 %v1770
        %v3265 = vpop.f32.mrb[0].mxu0
        %v3266 = vadd.f32 %v3073, %v3265
        %v3267 = vpop.f32.mrb[0].mxu0
        %v3268 = vadd.f32 %v3075, %v3267
        %v3269 = vpop.f32.mrb[0].mxu0
        %v3270 = vadd.f32 %v3077, %v3269
        %v3271 = vpop.f32.mrb[0].mxu0
        %v3272 = vadd.f32 %v3079, %v3271
        %3273 = vmatprep.mubr.bf16.mxu0 0
        %3274 = vmatmul.mubr.bf16.gmra.mrb[0].mxu0 %v1773
        %v3275 = vpop.f32.mrb[0].mxu0
        %v3276 = vadd.f32 %v3083, %v3275
        %v3277 = vpop.f32.mrb[0].mxu0
        %v3278 = vadd.f32 %v3085, %v3277
        %v3279 = vpop.f32.mrb[0].mxu0
        %v3280 = vadd.f32 %v3087, %v3279
        %v3281 = vpop.f32.mrb[0].mxu0
        %v3282 = vadd.f32 %v3089, %v3281
        %3283 = vmatprep.mubr.bf16.mxu0 0
        %3284 = vmatmul.mubr.bf16.gmra.mrb[0].mxu0 %v1776
        %v3285 = vpop.f32.mrb[0].mxu0
        %v3286 = vadd.f32 %v3093, %v3285
        %v3287 = vpop.f32.mrb[0].mxu0
        %v3288 = vadd.f32 %v3095, %v3287
        %v3289 = vpop.f32.mrb[0].mxu0
        %v3290 = vadd.f32 %v3097, %v3289
        %v3291 = vpop.f32.mrb[0].mxu0
        %v3292 = vadd.f32 %v3099, %v3291
        %3293 = vmatprep.mubr.bf16.mxu0 0
        %3294 = vmatmul.mubr.bf16.gmra.mrb[0].mxu0 %v1779
        %v3295 = vpop.f32.mrb[0].mxu0
        %v3296 = vadd.f32 %v3103, %v3295
        %v3297 = vpop.f32.mrb[0].mxu0
        %v3298 = vadd.f32 %v3105, %v3297
        %v3299 = vpop.f32.mrb[0].mxu0
        %v3300 = vadd.f32 %v3107, %v3299
        %v3301 = vpop.f32.mrb[0].mxu0
        %v3302 = vadd.f32 %v3109, %v3301
        %3303 = vmatprep.mubr.bf16.mxu0 0
        %3304 = vmatmul.mubr.bf16.gmra.mrb[0].mxu0 %v1782
        %v3305 = vpop.f32.mrb[0].mxu0
        %v3306 = vadd.f32 %v3113, %v3305
        %v3307 = vpop.f32.mrb[0].mxu0
        %v3308 = vadd.f32 %v3115, %v3307
        %v3309 = vpop.f32.mrb[0].mxu0
        %v3310 = vadd.f32 %v3117, %v3309
        %v3311 = vpop.f32.mrb[0].mxu0
        %v3312 = vadd.f32 %v3119, %v3311
        %3313 = vmatprep.mubr.bf16.mxu0 0
        %3314 = vmatmul.mubr.bf16.gmra.mrb[0].mxu0 %v1785
        %v3315 = vpop.f32.mrb[0].mxu0
        %v3316 = vadd.f32 %v3123, %v3315
        %v3317 = vpop.f32.mrb[0].mxu0
        %v3318 = vadd.f32 %v3125, %v3317
        %v3319 = vpop.f32.mrb[0].mxu0
        %v3320 = vadd.f32 %v3127, %v3319
        %v3321 = vpop.f32.mrb[0].mxu0
        %v3322 = vadd.f32 %v3129, %v3321
        %3323 = vmatprep.mubr.bf16.mxu0 0
        %3324 = vmatmul.mubr.bf16.gmra.mrb[0].mxu0 %v1788
        %v3325 = vpop.f32.mrb[0].mxu0
        %v3326 = vadd.f32 %v3133, %v3325
        %v3327 = vpop.f32.mrb[0].mxu0
        %v3328 = vadd.f32 %v3135, %v3327
        %v3329 = vpop.f32.mrb[0].mxu0
        %v3330 = vadd.f32 %v3137, %v3329
        %v3331 = vpop.f32.mrb[0].mxu0
        %v3332 = vadd.f32 %v3139, %v3331
        %3333 = vdwg.mxu0
        %v3334 = vmax.f32 %v2018, %v2022
        %v3335 = vmax.f32 %v3334, %v2028
        %v3336 = vmax.f32 %v3335, %v2032
        %v3337 = vmax.f32 %v3336, %v2038
        %v3338 = vmax.f32 %v3337, %v2042
        %v3339 = vmax.f32 %v3338, %v2048
        %v3340 = vmax.f32 %v3339, %v2052
        %v3341 = vmax.f32 %v3340, %v2058
        %v3342 = vmax.f32 %v3341, %v2062
        %v3343 = vmax.f32 %v3342, %v2068
        %v3344 = vmax.f32 %v3343, %v2072
        %v3345 = vmax.f32 %v3344, %v2078
        %v3346 = vmax.f32 %v3345, %v2082
        %v3347 = vmax.f32 %v3346, %v2088
        %v3348 = vmax.f32 %v3347, %v2092
        %v3349 = vmax.f32 %v3348, %v2098
        %v3350 = vmax.f32 %v3349, %v2102
        %v3351 = vmax.f32 %v3350, %v2108
        %v3352 = vmax.f32 %v3351, %v2112
        %v3353 = vmax.f32 %v3352, %v2118
        %v3354 = vmax.f32 %v3353, %v2122
        %v3355 = vmax.f32 %v3354, %v2128
        %v3356 = vmax.f32 %v3355, %v2132
        %v3357 = vmax.f32 %v3356, %v2138
        %v3358 = vmax.f32 %v3357, %v2142
        %v3359 = vmax.f32 %v3358, %v2148
        %v3360 = vmax.f32 %v3359, %v2152
        %v3361 = vmax.f32 %v3360, %v2158
        %v3362 = vmax.f32 %v3361, %v2162
        %v3363 = vmax.f32 %v3362, %v2168
        %v3364 = vmax.f32 %v3363, %v2172
        %v3365 = vrot.slane %v3364, 4
        %v3366 = vmax.f32 %v3364, %v3365
        %v3367 = vrot.slane %v3366, 2
        %v3368 = vmax.f32 %v3366, %v3367
        %v3369 = vrot.slane %v3368, 1
        %v3370 = vmax.f32 %v3368, %v3369
        %v3371 = vmax.f32 %v2020, %v2024
        %v3372 = vmax.f32 %v3371, %v2030
        %v3373 = vmax.f32 %v3372, %v2034
        %v3374 = vmax.f32 %v3373, %v2040
        %v3375 = vmax.f32 %v3374, %v2044
        %v3376 = vmax.f32 %v3375, %v2050
        %v3377 = vmax.f32 %v3376, %v2054
        %v3378 = vmax.f32 %v3377, %v2060
        %v3379 = vmax.f32 %v3378, %v2064
        %v3380 = vmax.f32 %v3379, %v2070
        %v3381 = vmax.f32 %v3380, %v2074
        %v3382 = vmax.f32 %v3381, %v2080
        %v3383 = vmax.f32 %v3382, %v2084
        %v3384 = vmax.f32 %v3383, %v2090
        %v3385 = vmax.f32 %v3384, %v2094
        %v3386 = vmax.f32 %v3385, %v2100
        %v3387 = vmax.f32 %v3386, %v2104
        %v3388 = vmax.f32 %v3387, %v2110
        %v3389 = vmax.f32 %v3388, %v2114
        %v3390 = vmax.f32 %v3389, %v2120
        %v3391 = vmax.f32 %v3390, %v2124
        %v3392 = vmax.f32 %v3391, %v2130
        %v3393 = vmax.f32 %v3392, %v2134
        %v3394 = vmax.f32 %v3393, %v2140
        %v3395 = vmax.f32 %v3394, %v2144
        %v3396 = vmax.f32 %v3395, %v2150
        %v3397 = vmax.f32 %v3396, %v2154
        %v3398 = vmax.f32 %v3397, %v2160
        %v3399 = vmax.f32 %v3398, %v2164
        %v3400 = vmax.f32 %v3399, %v2170
        %v3401 = vmax.f32 %v3400, %v2174
        %v3402 = vrot.slane %v3401, 4
        %v3403 = vmax.f32 %v3401, %v3402
        %v3404 = vrot.slane %v3403, 2
        %v3405 = vmax.f32 %v3403, %v3404
        %v3406 = vrot.slane %v3405, 1
        %v3407 = vmax.f32 %v3405, %v3406
        %v3408 = vmax.f32 %v2404, %v2408
        %v3409 = vmax.f32 %v3408, %v2414
        %v3410 = vmax.f32 %v3409, %v2418
        %v3411 = vmax.f32 %v3410, %v2424
        %v3412 = vmax.f32 %v3411, %v2428
        %v3413 = vmax.f32 %v3412, %v2434
        %v3414 = vmax.f32 %v3413, %v2438
        %v3415 = vmax.f32 %v3414, %v2444
        %v3416 = vmax.f32 %v3415, %v2448
        %v3417 = vmax.f32 %v3416, %v2454
        %v3418 = vmax.f32 %v3417, %v2458
        %v3419 = vmax.f32 %v3418, %v2464
        %v3420 = vmax.f32 %v3419, %v2468
        %v3421 = vmax.f32 %v3420, %v2474
        %v3422 = vmax.f32 %v3421, %v2478
        %v3423 = vmax.f32 %v3422, %v2484
        %v3424 = vmax.f32 %v3423, %v2488
        %v3425 = vmax.f32 %v3424, %v2494
        %v3426 = vmax.f32 %v3425, %v2498
        %v3427 = vmax.f32 %v3426, %v2504
        %v3428 = vmax.f32 %v3427, %v2508
        %v3429 = vmax.f32 %v3428, %v2514
        %v3430 = vmax.f32 %v3429, %v2518
        %v3431 = vmax.f32 %v3430, %v2524
        %v3432 = vmax.f32 %v3431, %v2528
        %v3433 = vmax.f32 %v3432, %v2534
        %v3434 = vmax.f32 %v3433, %v2538
        %v3435 = vmax.f32 %v3434, %v2544
        %v3436 = vmax.f32 %v3435, %v2548
        %v3437 = vmax.f32 %v3436, %v2554
        %v3438 = vmax.f32 %v3437, %v2558
        %v3439 = vrot.slane %v3438, 4
        %v3440 = vmax.f32 %v3438, %v3439
        %v3441 = vrot.slane %v3440, 2
        %v3442 = vmax.f32 %v3440, %v3441
        %v3443 = vrot.slane %v3442, 1
        %v3444 = vmax.f32 %v3442, %v3443
        %v3445 = vmax.f32 %v2406, %v2410
        %v3446 = vmax.f32 %v3445, %v2416
        %v3447 = vmax.f32 %v3446, %v2420
        %v3448 = vmax.f32 %v3447, %v2426
        %v3449 = vmax.f32 %v3448, %v2430
        %v3450 = vmax.f32 %v3449, %v2436
        %v3451 = vmax.f32 %v3450, %v2440
        %v3452 = vmax.f32 %v3451, %v2446
        %v3453 = vmax.f32 %v3452, %v2450
        %v3454 = vmax.f32 %v3453, %v2456
        %v3455 = vmax.f32 %v3454, %v2460
        %v3456 = vmax.f32 %v3455, %v2466
        %v3457 = vmax.f32 %v3456, %v2470
        %v3458 = vmax.f32 %v3457, %v2476
        %v3459 = vmax.f32 %v3458, %v2480
        %v3460 = vmax.f32 %v3459, %v2486
        %v3461 = vmax.f32 %v3460, %v2490
        %v3462 = vmax.f32 %v3461, %v2496
        %v3463 = vmax.f32 %v3462, %v2500
        %v3464 = vmax.f32 %v3463, %v2506
        %v3465 = vmax.f32 %v3464, %v2510
        %v3466 = vmax.f32 %v3465, %v2516
        %v3467 = vmax.f32 %v3466, %v2520
        %v3468 = vmax.f32 %v3467, %v2526
        %v3469 = vmax.f32 %v3468, %v2530
        %v3470 = vmax.f32 %v3469, %v2536
        %v3471 = vmax.f32 %v3470, %v2540
        %v3472 = vmax.f32 %v3471, %v2546
        %v3473 = vmax.f32 %v3472, %v2550
        %v3474 = vmax.f32 %v3473, %v2556
        %v3475 = vmax.f32 %v3474, %v2560
        %v3476 = vrot.slane %v3475, 4
        %v3477 = vmax.f32 %v3475, %v3476
        %v3478 = vrot.slane %v3477, 2
        %v3479 = vmax.f32 %v3477, %v3478
        %v3480 = vrot.slane %v3479, 1
        %v3481 = vmax.f32 %v3479, %v3480
        %v3482 = vmax.f32 %v2790, %v2794
        %v3483 = vmax.f32 %v3482, %v2800
        %v3484 = vmax.f32 %v3483, %v2804
        %v3485 = vmax.f32 %v3484, %v2810
        %v3486 = vmax.f32 %v3485, %v2814
        %v3487 = vmax.f32 %v3486, %v2820
        %v3488 = vmax.f32 %v3487, %v2824
        %v3489 = vmax.f32 %v3488, %v2830
        %v3490 = vmax.f32 %v3489, %v2834
        %v3491 = vmax.f32 %v3490, %v2840
        %v3492 = vmax.f32 %v3491, %v2844
        %v3493 = vmax.f32 %v3492, %v2850
        %v3494 = vmax.f32 %v3493, %v2854
        %v3495 = vmax.f32 %v3494, %v2860
        %v3496 = vmax.f32 %v3495, %v2864
        %v3497 = vmax.f32 %v3496, %v2870
        %v3498 = vmax.f32 %v3497, %v2874
        %v3499 = vmax.f32 %v3498, %v2880
        %v3500 = vmax.f32 %v3499, %v2884
        %v3501 = vmax.f32 %v3500, %v2890
        %v3502 = vmax.f32 %v3501, %v2894
        %v3503 = vmax.f32 %v3502, %v2900
        %v3504 = vmax.f32 %v3503, %v2904
        %v3505 = vmax.f32 %v3504, %v2910
        %v3506 = vmax.f32 %v3505, %v2914
        %v3507 = vmax.f32 %v3506, %v2920
        %v3508 = vmax.f32 %v3507, %v2924
        %v3509 = vmax.f32 %v3508, %v2930
        %v3510 = vmax.f32 %v3509, %v2934
        %v3511 = vmax.f32 %v3510, %v2940
        %v3512 = vmax.f32 %v3511, %v2944
        %v3513 = vrot.slane %v3512, 4
        %v3514 = vmax.f32 %v3512, %v3513
        %v3515 = vrot.slane %v3514, 2
        %v3516 = vmax.f32 %v3514, %v3515
        %v3517 = vrot.slane %v3516, 1
        %v3518 = vmax.f32 %v3516, %v3517
        %v3519 = vmax.f32 %v2792, %v2796
        %v3520 = vmax.f32 %v3519, %v2802
        %v3521 = vmax.f32 %v3520, %v2806
        %v3522 = vmax.f32 %v3521, %v2812
        %v3523 = vmax.f32 %v3522, %v2816
        %v3524 = vmax.f32 %v3523, %v2822
        %v3525 = vmax.f32 %v3524, %v2826
        %v3526 = vmax.f32 %v3525, %v2832
        %v3527 = vmax.f32 %v3526, %v2836
        %v3528 = vmax.f32 %v3527, %v2842
        %v3529 = vmax.f32 %v3528, %v2846
        %v3530 = vmax.f32 %v3529, %v2852
        %v3531 = vmax.f32 %v3530, %v2856
        %v3532 = vmax.f32 %v3531, %v2862
        %v3533 = vmax.f32 %v3532, %v2866
        %v3534 = vmax.f32 %v3533, %v2872
        %v3535 = vmax.f32 %v3534, %v2876
        %v3536 = vmax.f32 %v3535, %v2882
        %v3537 = vmax.f32 %v3536, %v2886
        %v3538 = vmax.f32 %v3537, %v2892
        %v3539 = vmax.f32 %v3538, %v2896
        %v3540 = vmax.f32 %v3539, %v2902
        %v3541 = vmax.f32 %v3540, %v2906
        %v3542 = vmax.f32 %v3541, %v2912
        %v3543 = vmax.f32 %v3542, %v2916
        %v3544 = vmax.f32 %v3543, %v2922
        %v3545 = vmax.f32 %v3544, %v2926
        %v3546 = vmax.f32 %v3545, %v2932
        %v3547 = vmax.f32 %v3546, %v2936
        %v3548 = vmax.f32 %v3547, %v2942
        %v3549 = vmax.f32 %v3548, %v2946
        %v3550 = vrot.slane %v3549, 4
        %v3551 = vmax.f32 %v3549, %v3550
        %v3552 = vrot.slane %v3551, 2
        %v3553 = vmax.f32 %v3551, %v3552
        %v3554 = vrot.slane %v3553, 1
        %v3555 = vmax.f32 %v3553, %v3554
        %v3556 = vmax.f32 %v3176, %v3180
        %v3557 = vmax.f32 %v3556, %v3186
        %v3558 = vmax.f32 %v3557, %v3190
        %v3559 = vmax.f32 %v3558, %v3196
        %v3560 = vmax.f32 %v3559, %v3200
        %v3561 = vmax.f32 %v3560, %v3206
        %v3562 = vmax.f32 %v3561, %v3210
        %v3563 = vmax.f32 %v3562, %v3216
        %v3564 = vmax.f32 %v3563, %v3220
        %v3565 = vmax.f32 %v3564, %v3226
        %v3566 = vmax.f32 %v3565, %v3230
        %v3567 = vmax.f32 %v3566, %v3236
        %v3568 = vmax.f32 %v3567, %v3240
        %v3569 = vmax.f32 %v3568, %v3246
        %v3570 = vmax.f32 %v3569, %v3250
        %v3571 = vmax.f32 %v3570, %v3256
        %v3572 = vmax.f32 %v3571, %v3260
        %v3573 = vmax.f32 %v3572, %v3266
        %v3574 = vmax.f32 %v3573, %v3270
        %v3575 = vmax.f32 %v3574, %v3276
        %v3576 = vmax.f32 %v3575, %v3280
        %v3577 = vmax.f32 %v3576, %v3286
        %v3578 = vmax.f32 %v3577, %v3290
        %v3579 = vmax.f32 %v3578, %v3296
        %v3580 = vmax.f32 %v3579, %v3300
        %v3581 = vmax.f32 %v3580, %v3306
        %v3582 = vmax.f32 %v3581, %v3310
        %v3583 = vmax.f32 %v3582, %v3316
        %v3584 = vmax.f32 %v3583, %v3320
        %v3585 = vmax.f32 %v3584, %v3326
        %v3586 = vmax.f32 %v3585, %v3330
        %v3587 = vrot.slane %v3586, 4
        %v3588 = vmax.f32 %v3586, %v3587
        %v3589 = vrot.slane %v3588, 2
        %v3590 = vmax.f32 %v3588, %v3589
        %v3591 = vrot.slane %v3590, 1
        %v3592 = vmax.f32 %v3590, %v3591
        %v3593 = vmax.f32 %v3178, %v3182
        %v3594 = vmax.f32 %v3593, %v3188
        %v3595 = vmax.f32 %v3594, %v3192
        %v3596 = vmax.f32 %v3595, %v3198
        %v3597 = vmax.f32 %v3596, %v3202
        %v3598 = vmax.f32 %v3597, %v3208
        %v3599 = vmax.f32 %v3598, %v3212
        %v3600 = vmax.f32 %v3599, %v3218
        %v3601 = vmax.f32 %v3600, %v3222
        %v3602 = vmax.f32 %v3601, %v3228
        %v3603 = vmax.f32 %v3602, %v3232
        %v3604 = vmax.f32 %v3603, %v3238
        %v3605 = vmax.f32 %v3604, %v3242
        %v3606 = vmax.f32 %v3605, %v3248
        %v3607 = vmax.f32 %v3606, %v3252
        %v3608 = vmax.f32 %v3607, %v3258
        %v3609 = vmax.f32 %v3608, %v3262
        %v3610 = vmax.f32 %v3609, %v3268
        %v3611 = vmax.f32 %v3610, %v3272
        %v3612 = vmax.f32 %v3611, %v3278
        %v3613 = vmax.f32 %v3612, %v3282
        %v3614 = vmax.f32 %v3613, %v3288
        %v3615 = vmax.f32 %v3614, %v3292
        %v3616 = vmax.f32 %v3615, %v3298
        %v3617 = vmax.f32 %v3616, %v3302
        %v3618 = vmax.f32 %v3617, %v3308
        %v3619 = vmax.f32 %v3618, %v3312
        %v3620 = vmax.f32 %v3619, %v3318
        %v3621 = vmax.f32 %v3620, %v3322
        %v3622 = vmax.f32 %v3621, %v3328
        %v3623 = vmax.f32 %v3622, %v3332
        %v3624 = vrot.slane %v3623, 4
        %v3625 = vmax.f32 %v3623, %v3624
        %v3626 = vrot.slane %v3625, 2
        %v3627 = vmax.f32 %v3625, %v3626
        %v3628 = vrot.slane %v3627, 1
        %v3629 = vmax.f32 %v3627, %v3628
        %v3638 = vcombine.low %v3370, %v3407
        %v3639 = vcombine.low %v3444, %v3481
        %v3640 = vcombine.low %v3518, %v3555
        %v3641 = vcombine.low %v3592, %v3629
        %v3643 = vunpack.c.l.s4 1966171168
        %v3644 = vunpack.c.0.s8 %v3643
        %v3645 = vlaneseq
        %v3646 = vshrl.u32 %v3645, 7
        %v3647 = vsub.s32 %v3644, %v3646
        %v3648 = vrot.slane %v3638, %v3647
        %v3650 = vunpack.c.l.s4 1966171168
        %v3651 = vunpack.c.0.s8 %v3650
        %v3652 = vlaneseq
        %v3653 = vshrl.u32 %v3652, 7
        %v3654 = vsub.s32 %v3651, %v3653
        %v3655 = vrot.slane %v3639, %v3654
        %v3657 = vunpack.c.l.s4 1966171168
        %v3658 = vunpack.c.0.s8 %v3657
        %v3659 = vlaneseq
        %v3660 = vshrl.u32 %v3659, 7
        %v3661 = vsub.s32 %v3658, %v3660
        %v3662 = vrot.slane %v3640, %v3661
        %v3664 = vunpack.c.l.s4 1966171168
        %v3665 = vunpack.c.0.s8 %v3664
        %v3666 = vlaneseq
        %v3667 = vshrl.u32 %v3666, 7
        %v3668 = vsub.s32 %v3665, %v3667
        %v3669 = vrot.slane %v3641, %v3668
        %v3670 = vcombine.low %v3648, %v3655
        %v3671 = vcombine.low %v3662, %v3669
        %v3673 = vunpack.c.l.s4 1966171168
        %v3674 = vunpack.c.0.s8 %v3673
        %v3675 = vlaneseq
        %v3676 = vshrl.u32 %v3675, 7
        %v3677 = vsub.s32 %v3674, %v3676
        %v3678 = vrot.slane %v3670, %v3677
        %v3680 = vunpack.c.l.s4 1966171168
        %v3681 = vunpack.c.0.s8 %v3680
        %v3682 = vlaneseq
        %v3683 = vshrl.u32 %v3682, 7
        %v3684 = vsub.s32 %v3681, %v3683
        %v3685 = vrot.slane %v3671, %v3684
        %v3686 = vcombine.low %v3678, %v3685
        %3688 = vst [vmem:[%s517] sm:$0xff] %v3686
        %s3689 = sand.u32 %s117, 1
        %s3690 = scalar_lea.sflag [#allocation4], %s3689
        %s3691 = sand.u32 %s117, 1
        %s3692 = smul.addr %s3691, 8
        %s3693 = scalar_lea.vmem [#allocation3], %s3692
        // Predicated region
        $region56: #{ms_box_head_forward.5} parent=50 // pred_check
          %p3694 = pneg %p127
        $region57: #{ms_box_head_forward.5} parent=50 // pred_check_branch
          %3696 = sbr.rel (%p3694) target = $region59
        $region58: #{ms_box_head_forward.5} parent=50 // pred_region
          %s3697 = smul.u32 8, %s22
          %s3699 = ssub.s32 128, 128
          %3700 = vsyncadd %s3690, %s3699
          %s3701 = smul.addr %s21, 16
          %s3702 = sadd.s32 %s3697, %s3701
          %s3703 = smul.addr %s3702, 16
          %s3704 = scalar_lea.hbm %s3, %s3703
          %s3706 = sshll.u32 %s3693, 4
          %s3707 = int_to_ptr.vmem [resolvable:$true] %s3706
          %3709 = dma.vmem_to_hbm [thread:$0]  %s3707, 128, %s3704, %s3690
        $region59: #{ms_box_head_forward.5} parent=50 // pred_fallthru
          _
      $region51: #{ms_box_head_forward.5} parent=5 // pred_fallthru
        _
      %p3710 = scmp.le.s32.totalorder 2, %s12
      // Predicated region
      $region60: #{ms_box_head_forward.5} parent=5 // pred_check
        %p3711 = pneg %p3710
      $region61: #{ms_box_head_forward.5} parent=5 // pred_check_branch
        %3713 = sbr.rel (%p3711) target = $region63
      $region62: #{ms_box_head_forward.5} parent=5 // pred_region
        %s3714 = ssub.s32 %s12, 2
        // Predicated region
        $region64: #{ms_box_head_forward.5} parent=62 // pred_check
          %p3715 = pneg %p133
        $region65: #{ms_box_head_forward.5} parent=62 // pred_check_branch
          %3717 = sbr.rel (%p3715) target = $region67
        $region66: #{ms_box_head_forward.5} parent=62 // pred_region
          %s3718 = sand.u32 %s118, 1
          %s3719 = scalar_lea.sflag [#allocation4], %s3718
          %s3720 = sand.u32 %s118, 1
          %s3721 = smul.addr %s3720, 8
          %s3722 = scalar_lea.vmem [#allocation3], %s3721
          %3723 = dma.done %s3719, 128
        $region67: #{ms_box_head_forward.5} parent=62 // pred_fallthru
          _
      $region63: #{ms_box_head_forward.5} parent=5 // pred_fallthru
        _
    $region6: #{ms_box_head_forward.5} parent=1 // loop_footer
      %s16 = sadd.s32 1, %s12
    $region7: #{ms_box_head_forward.5} parent=1 // loop_footer_branch
      %11 = sbr.rel target = $region3
    $region8: #{ms_box_head_forward.5} parent=1 // loop_exit
      _
    %3724 = vsyncpa [#allocation4], 1
    %s3725 = scalar_lea.sflag [#allocation4], 1
    %3726 = vsyncpa %s3725, 1

</llo_original>
